<compile_context>
chip_gen: v6e
topology: v6e:2x2x1
jax: 0.10.0
libtpu: 0.0.40
codegen_flags: <defaults>
</compile_context>

<pallas_src>
import math

import jax
import jax.numpy as jnp
from jax.experimental import pallas as pl
from jax.experimental.pallas import tpu as pltpu

SEGMENT_LENGTH = 30
C_IN = 2
C_HID = 64
OUT_PAD = 128            # lane-padded output width (>= SEGMENT_LENGTH)


def _round_up(x, m):
    return (x + m - 1) // m * m


# ---------------------------------------------------------------------------
# Pallas kernel: full forward pass for ONE batch tile of TB elements.
#   x_ref  : (TB*L, 6)      conv1 im2col rows (built in the wrapper)
#   w1_ref : (6, 64)        conv1 taps stacked along K
#   w2/w3  : (64, 192)      conv2/3 taps stacked along N: [W_{l-1}|W_l|W_{l+1}]
#   wl_ref : (L*64, 128)    linear weight, row index l*64+c, lane-padded
#   o_ref  : (TB, 128)      lane-padded output block
# ---------------------------------------------------------------------------
def nav_kernel(x_ref, w1_ref, b1_ref, w2_ref, b2_ref, w3_ref, b3_ref,
               wl_ref, bl_ref, o_ref):
    L = SEGMENT_LENGTH
    C = C_HID
    R = x_ref.shape[0]              # TB * L, rows ordered (l major, batch minor)
    TB = R // L

    # Hoisted zero slab used by both conv layers' boundary padding.
    z = jnp.zeros((TB, C), jnp.float32)

    # ---- conv1: one matmul on the pre-built 3-tap rows -------------------
    h = jnp.dot(x_ref[...], w1_ref[...], preferred_element_type=jnp.float32)
    h = jnp.maximum(h + b1_ref[...], 0.0)                        # (R, 64) f32

    # ---- conv2 / conv3: one matmul per layer ------------------------------
    # p = h @ [W0|W1|W2]  (R, 192); the +-1 position shifts (= +-TB rows in
    # this layout) are applied to p, using aligned sublane concats with the
    # zero block (this is exactly the conv's zero padding).
    def conv_relu(h, w_ref, b_ref):
        p = jnp.dot(h.astype(w_ref.dtype), w_ref[...],
                    preferred_element_type=jnp.float32)          # (R, 192)
        y = (jnp.concatenate([z, p[:R - TB, 0:C]], axis=0)        # tap at l-1
             + p[:, C:2 * C]                                      # tap at l
             + jnp.concatenate([p[TB:, 2 * C:3 * C], z], axis=0)  # tap at l+1
             + b_ref[...])
        return jnp.maximum(y, 0.0)

    h = conv_relu(h, w2_ref, b2_ref)
    h = conv_relu(h, w3_ref, b3_ref)

    # ---- linear over the flattened (64, 30) activation --------------------
    #   out[t, j] = bl[j] + sum_l  h[l*TB + t, :] @ wl[l*64:(l+1)*64, j]
    # 30 matmuls with M = TB, sliced from the VALUE (no scratch store/reload);
    # the N dim is padded to 128 so the final store is lane-dense (unmasked).
    hq = h.astype(wl_ref.dtype)
    acc = jnp.broadcast_to(bl_ref[...], (TB, o_ref.shape[1]))     # bias-init, f32
    for l in range(L):
        hl = hq[l * TB:(l + 1) * TB, :]          # (TB, 64)  batch block @ pos l
        ws = wl_ref[pl.ds(l * C, C), :]          # (64, 128) matching weight slab
        acc = acc + jnp.dot(hl, ws, preferred_element_type=jnp.float32)
    o_ref[...] = acc


# ---------------------------------------------------------------------------
# Parameter init (deterministic, PyTorch-default-style uniform).
# ---------------------------------------------------------------------------
def init_params(key):
    ks = jax.random.split(key, 8)

    def u(k, shape, fan_in):
        bound = 1.0 / math.sqrt(fan_in)
        return jax.random.uniform(k, shape, jnp.float32, -bound, bound)

    return {
        "w1": u(ks[0], (C_HID, C_IN, 3), C_IN * 3),
        "b1": u(ks[1], (C_HID,), C_IN * 3),
        "w2": u(ks[2], (C_HID, C_HID, 3), C_HID * 3),
        "b2": u(ks[3], (C_HID,), C_HID * 3),
        "w3": u(ks[4], (C_HID, C_HID, 3), C_HID * 3),
        "b3": u(ks[5], (C_HID,), C_HID * 3),
        "wl": u(ks[6], (SEGMENT_LENGTH, C_HID * SEGMENT_LENGTH),
                C_HID * SEGMENT_LENGTH),
        "bl": u(ks[7], (SEGMENT_LENGTH,), C_HID * SEGMENT_LENGTH),
    }


# ---------------------------------------------------------------------------
# Wrapper: layout plumbing (all reshapes/transposes happen here, in XLA).
# ---------------------------------------------------------------------------
def _reorder_rows(a, G, TB):
    # (G*TB, L, F) -> rows ordered (g, l, t): (G*L*TB, F)
    _, L, F = a.shape
    return a.reshape(G, TB, L, F).transpose(0, 2, 1, 3).reshape(G * L * TB, F)


def forward_pallas(x, p, *, block_b=256, param_dtype=jnp.bfloat16):
    """x: (B, 2, 30) NCL float.

    param_dtype controls the MXU operand dtype (f32 accumulation always).
    bf16 (default) halves MXU passes and VMEM on v6e/v7x; pass jnp.float32
    when bit-closeness to the PyTorch reference matters.
    """
    B = x.shape[0]
    L, Cin, Ch, J = SEGMENT_LENGTH, C_IN, C_HID, SEGMENT_LENGTH

    # --- batch tile: multiple of 8, <= block_b, and >= 2 grid steps when the
    # (8-padded) batch allows it (keeps both v7x TensorCores busy). ---------
    Bp8 = _round_up(B, 8)
    TB = min(_round_up(block_b, 8), Bp8)
    if Bp8 // TB < 2 and Bp8 > 8:
        TB = _round_up((Bp8 + 1) // 2, 8)
    TB = max(TB, 8)
    Bp = _round_up(B, TB)
    G = Bp // TB                                       # grid steps
    R = TB * L                                         # rows per tile

    xf = x.astype(jnp.float32)
    if Bp != B:
        xf = jnp.pad(xf, ((0, Bp - B), (0, 0), (0, 0)))

    # conv1 im2col (k=3, padding=1); column layout k*Cin + c.
    xpad = jnp.pad(xf, ((0, 0), (0, 0), (1, 1)))                        # (Bp,2,L+2)
    taps = jnp.stack([xpad[:, :, k:k + L] for k in range(3)], axis=1)   # (Bp,3,2,L)
    x6 = jnp.transpose(taps, (0, 3, 1, 2)).reshape(Bp, L, 3 * Cin)      # (Bp,L,6)
    x_rows = _reorder_rows(x6, G, TB).astype(param_dtype)               # (Bp*L,6)

    # conv1 weight (Cout, Cin, 3) -> taps stacked along K: (3*Cin, Cout).
    w1f = jnp.transpose(p["w1"], (2, 1, 0)).reshape(3 * Cin, Ch).astype(param_dtype)

    # conv2/3 weights (Cout, Cin, 3) -> taps stacked along N: (Cin, 3*Cout).
    def fuse_n(w):
        co, ci, k = w.shape
        return jnp.transpose(w, (1, 2, 0)).reshape(ci, k * co).astype(param_dtype)

    w2f, w3f = fuse_n(p["w2"]), fuse_n(p["w3"])
    b1 = p["b1"].reshape(1, Ch).astype(jnp.float32)
    b2 = p["b2"].reshape(1, Ch).astype(jnp.float32)
    b3 = p["b3"].reshape(1, Ch).astype(jnp.float32)

    # linear weight (J, C*L) with flat index c*L + l  ->  (L*C, J) with flat
    # index l*C + c, then lane-padded to OUT_PAD for dense stores.
    wl = jnp.transpose(p["wl"].reshape(J, Ch, L), (2, 1, 0)).reshape(L * Ch, J)
    wl = jnp.pad(wl, ((0, 0), (0, OUT_PAD - J))).astype(param_dtype)
    bl = jnp.pad(p["bl"].reshape(1, J),
                 ((0, 0), (0, OUT_PAD - J))).astype(jnp.float32)

    out = pl.pallas_call(
        nav_kernel,
        out_shape=jax.ShapeDtypeStruct((Bp, OUT_PAD), jnp.float32),
        grid_spec=pltpu.PrefetchScalarGridSpec(
            num_scalar_prefetch=0,
            grid=(G,),
            in_specs=[
                pl.BlockSpec((R, 3 * Cin), lambda g: (g, 0)),        # x im2col
                pl.BlockSpec((3 * Cin, Ch), lambda g: (0, 0)),       # w1
                pl.BlockSpec((1, Ch), lambda g: (0, 0)),             # b1
                pl.BlockSpec((Ch, 3 * Ch), lambda g: (0, 0)),        # w2
                pl.BlockSpec((1, Ch), lambda g: (0, 0)),             # b2
                pl.BlockSpec((Ch, 3 * Ch), lambda g: (0, 0)),        # w3
                pl.BlockSpec((1, Ch), lambda g: (0, 0)),             # b3
                pl.BlockSpec((L * Ch, OUT_PAD), lambda g: (0, 0)),   # wl
                pl.BlockSpec((1, OUT_PAD), lambda g: (0, 0)),        # bl
            ],
            out_specs=pl.BlockSpec((TB, OUT_PAD), lambda g: (g, 0)),
        ),
        compiler_params=pltpu.CompilerParams(
            dimension_semantics=("parallel",),
            vmem_limit_bytes=56 * 1024 * 1024),
    )(x_rows, w1f, b1, w2f, b2, w3f, b3, wl, bl)

    return out[:B, :J].reshape(B, 1, J)


# ---------------------------------------------------------------------------
# Pure-JAX reference (mirrors the PyTorch forward, NCL layout).
# ---------------------------------------------------------------------------
def forward_ref(x, p):
    L = SEGMENT_LENGTH
    h = x.astype(jnp.float32)                                   # (B, C, L)
    for wn, bn in (("w1", "b1"), ("w2", "b2"), ("w3", "b3")):
        w, b = p[wn], p[bn]                                     # (Co, Ci, 3)
        hp = jnp.pad(h, ((0, 0), (0, 0), (1, 1)))
        y = b[None, :, None]
        for k in range(3):
            y = y + jnp.einsum("bcl,oc->bol", hp[:, :, k:k + L], w[:, :, k])
        h = jnp.maximum(y, 0.0)
    flat = h.reshape(h.shape[0], -1)                            # (B, 64*L), c*L+l
    out = flat @ p["wl"].T + p["bl"]
    return out.reshape(h.shape[0], 1, L)


if __name__ == "__main__":
    key = jax.random.PRNGKey(0)
    pkey, xkey = jax.random.split(key)
    params = init_params(pkey)

    # 1) f32 operands (bit-close to PyTorch numerics), single small tile.
    x_small = jax.random.normal(xkey, (2, C_IN, SEGMENT_LENGTH), jnp.float32)
    out_small = jax.block_until_ready(
        forward_pallas(x_small, params, param_dtype=jnp.float32))
    ref_small = forward_ref(x_small, params)
    assert out_small.shape == (2, 1, SEGMENT_LENGTH)
    assert jnp.allclose(out_small, ref_small, atol=1e-3, rtol=1e-3), (
        f"max abs diff {jnp.max(jnp.abs(out_small - ref_small))}")

    # 2) Default path (bf16 MXU operands), batch padding + >=2 parallel steps.
    x_big = jax.random.normal(jax.random.PRNGKey(1),
                              (20, C_IN, SEGMENT_LENGTH), jnp.float32)
    ref_big = forward_ref(x_big, params)
    out_big = jax.block_until_ready(forward_pallas(x_big, params))
    assert out_big.shape == (20, 1, SEGMENT_LENGTH)
    assert jnp.allclose(out_big, ref_big, atol=2e-2, rtol=2e-2), (
        f"max abs diff {jnp.max(jnp.abs(out_big - ref_big))}")

    # 3) f32 operands, explicit small tile -> 3 grid steps (exercises padding
    #    + multi-tile grid with tight tolerance).
    out_b8 = jax.block_until_ready(
        forward_pallas(x_big, params, block_b=8, param_dtype=jnp.float32))
    assert jnp.allclose(out_b8, ref_big, atol=1e-3, rtol=1e-3), (
        f"max abs diff {jnp.max(jnp.abs(out_b8 - ref_big))}")

    print("KERNEL_OK")
</pallas_src>

<mosaic_0001>
module attributes {stable_mosaic.version = 11 : i64} {
  func.func @nav_kernel(%arg0: i32, %arg1: memref<240x6xf32, #tpu.memory_space<vmem>>, %arg2: memref<6x64xf32, #tpu.memory_space<vmem>>, %arg3: memref<1x64xf32, #tpu.memory_space<vmem>>, %arg4: memref<64x192xf32, #tpu.memory_space<vmem>>, %arg5: memref<1x64xf32, #tpu.memory_space<vmem>>, %arg6: memref<64x192xf32, #tpu.memory_space<vmem>>, %arg7: memref<1x64xf32, #tpu.memory_space<vmem>>, %arg8: memref<1920x128xf32, #tpu.memory_space<vmem>>, %arg9: memref<1x128xf32, #tpu.memory_space<vmem>>, %arg10: memref<8x128xf32, #tpu.memory_space<vmem>>) attributes {dimension_semantics = [#tpu.dimension_semantics<parallel>], iteration_bounds = array<i64: 1>, scalar_prefetch = 0 : i64, scratch_operands = 0 : i64, tpu.core_type = #tpu.core_type<tc>, window_params = [{transform_indices = @transform_0, window_bounds = array<i64: 240, 6>}, {pipeline_mode = #tpu.pipeline_mode<synchronous>, transform_indices = @transform_1, window_bounds = array<i64: 6, 64>}, {pipeline_mode = #tpu.pipeline_mode<synchronous>, transform_indices = @transform_2, window_bounds = array<i64: 1, 64>}, {pipeline_mode = #tpu.pipeline_mode<synchronous>, transform_indices = @transform_3, window_bounds = array<i64: 64, 192>}, {pipeline_mode = #tpu.pipeline_mode<synchronous>, transform_indices = @transform_4, window_bounds = array<i64: 1, 64>}, {pipeline_mode = #tpu.pipeline_mode<synchronous>, transform_indices = @transform_5, window_bounds = array<i64: 64, 192>}, {pipeline_mode = #tpu.pipeline_mode<synchronous>, transform_indices = @transform_6, window_bounds = array<i64: 1, 64>}, {pipeline_mode = #tpu.pipeline_mode<synchronous>, transform_indices = @transform_7, window_bounds = array<i64: 1920, 128>}, {pipeline_mode = #tpu.pipeline_mode<synchronous>, transform_indices = @transform_8, window_bounds = array<i64: 1, 128>}, {transform_indices = @transform_9, window_bounds = array<i64: 8, 128>}]} {
    %cst = arith.constant 0.000000e+00 : f32
    %0 = vector.broadcast %cst : f32 to vector<8x64xf32>
    %c0 = arith.constant 0 : index
    %c0_0 = arith.constant 0 : index
    %1 = vector.load %arg1[%c0, %c0_0] : memref<240x6xf32, #tpu.memory_space<vmem>>, vector<240x6xf32>
    %c0_1 = arith.constant 0 : index
    %c0_2 = arith.constant 0 : index
    %2 = vector.load %arg2[%c0_1, %c0_2] : memref<6x64xf32, #tpu.memory_space<vmem>>, vector<6x64xf32>
    %cst_3 = arith.constant dense<0.000000e+00> : vector<240x64xf32>
    %3 = tpu.matmul %1, %2, %cst_3 {dimension_numbers = #tpu.dot_dimension_numbers<[1], [0], [0], [1], [0, 0, 1, 1], [], []>} : vector<240x6xf32>, vector<6x64xf32>, vector<240x64xf32> -> vector<240x64xf32>
    %c0_4 = arith.constant 0 : index
    %c0_5 = arith.constant 0 : index
    %4 = vector.load %arg3[%c0_4, %c0_5] : memref<1x64xf32, #tpu.memory_space<vmem>>, vector<1x64xf32>
    %5 = vector.broadcast %4 : vector<1x64xf32> to vector<240x64xf32>
    %6 = arith.addf %3, %5 : vector<240x64xf32>
    %cst_6 = arith.constant 0.000000e+00 : f32
    %7 = vector.broadcast %cst_6 : f32 to vector<240x64xf32>
    %8 = arith.maximumf %6, %7 : vector<240x64xf32>
    %c0_7 = arith.constant 0 : index
    %c0_8 = arith.constant 0 : index
    %9 = vector.load %arg4[%c0_7, %c0_8] : memref<64x192xf32, #tpu.memory_space<vmem>>, vector<64x192xf32>
    %cst_9 = arith.constant dense<0.000000e+00> : vector<240x192xf32>
    %10 = tpu.matmul %8, %9, %cst_9 {dimension_numbers = #tpu.dot_dimension_numbers<[1], [0], [0], [1], [0, 0, 1, 1], [], []>} : vector<240x64xf32>, vector<64x192xf32>, vector<240x192xf32> -> vector<240x192xf32>
    %11 = vector.extract_strided_slice %10 {offsets = [0, 0], sizes = [232, 64], strides = [1, 1]} : vector<240x192xf32> to vector<232x64xf32>
    %12 = tpu.concatenate %0, %11 in 0 : vector<8x64xf32>, vector<232x64xf32> -> vector<240x64xf32>
    %13 = vector.extract_strided_slice %10 {offsets = [0, 64], sizes = [240, 64], strides = [1, 1]} : vector<240x192xf32> to vector<240x64xf32>
    %14 = arith.addf %12, %13 : vector<240x64xf32>
    %15 = vector.extract_strided_slice %10 {offsets = [8, 128], sizes = [232, 64], strides = [1, 1]} : vector<240x192xf32> to vector<232x64xf32>
    %16 = tpu.concatenate %15, %0 in 0 : vector<232x64xf32>, vector<8x64xf32> -> vector<240x64xf32>
    %17 = arith.addf %14, %16 : vector<240x64xf32>
    %c0_10 = arith.constant 0 : index
    %c0_11 = arith.constant 0 : index
    %18 = vector.load %arg5[%c0_10, %c0_11] : memref<1x64xf32, #tpu.memory_space<vmem>>, vector<1x64xf32>
    %19 = vector.broadcast %18 : vector<1x64xf32> to vector<240x64xf32>
    %20 = arith.addf %17, %19 : vector<240x64xf32>
    %cst_12 = arith.constant 0.000000e+00 : f32
    %21 = vector.broadcast %cst_12 : f32 to vector<240x64xf32>
    %22 = arith.maximumf %20, %21 : vector<240x64xf32>
    %c0_13 = arith.constant 0 : index
    %c0_14 = arith.constant 0 : index
    %23 = vector.load %arg6[%c0_13, %c0_14] : memref<64x192xf32, #tpu.memory_space<vmem>>, vector<64x192xf32>
    %cst_15 = arith.constant dense<0.000000e+00> : vector<240x192xf32>
    %24 = tpu.matmul %22, %23, %cst_15 {dimension_numbers = #tpu.dot_dimension_numbers<[1], [0], [0], [1], [0, 0, 1, 1], [], []>} : vector<240x64xf32>, vector<64x192xf32>, vector<240x192xf32> -> vector<240x192xf32>
    %25 = vector.extract_strided_slice %24 {offsets = [0, 0], sizes = [232, 64], strides = [1, 1]} : vector<240x192xf32> to vector<232x64xf32>
    %26 = tpu.concatenate %0, %25 in 0 : vector<8x64xf32>, vector<232x64xf32> -> vector<240x64xf32>
    %27 = vector.extract_strided_slice %24 {offsets = [0, 64], sizes = [240, 64], strides = [1, 1]} : vector<240x192xf32> to vector<240x64xf32>
    %28 = arith.addf %26, %27 : vector<240x64xf32>
    %29 = vector.extract_strided_slice %24 {offsets = [8, 128], sizes = [232, 64], strides = [1, 1]} : vector<240x192xf32> to vector<232x64xf32>
    %30 = tpu.concatenate %29, %0 in 0 : vector<232x64xf32>, vector<8x64xf32> -> vector<240x64xf32>
    %31 = arith.addf %28, %30 : vector<240x64xf32>
    %c0_16 = arith.constant 0 : index
    %c0_17 = arith.constant 0 : index
    %32 = vector.load %arg7[%c0_16, %c0_17] : memref<1x64xf32, #tpu.memory_space<vmem>>, vector<1x64xf32>
    %33 = vector.broadcast %32 : vector<1x64xf32> to vector<240x64xf32>
    %34 = arith.addf %31, %33 : vector<240x64xf32>
    %cst_18 = arith.constant 0.000000e+00 : f32
    %35 = vector.broadcast %cst_18 : f32 to vector<240x64xf32>
    %36 = arith.maximumf %34, %35 : vector<240x64xf32>
    %c0_19 = arith.constant 0 : index
    %c0_20 = arith.constant 0 : index
    %37 = vector.load %arg9[%c0_19, %c0_20] : memref<1x128xf32, #tpu.memory_space<vmem>>, vector<1x128xf32>
    %38 = vector.shape_cast %37 : vector<1x128xf32> to vector<1x128xf32>
    %39 = vector.broadcast %38 : vector<1x128xf32> to vector<8x128xf32>
    %40 = vector.extract_strided_slice %36 {offsets = [0, 0], sizes = [8, 64], strides = [1, 1]} : vector<240x64xf32> to vector<8x64xf32>
    %c0_21 = arith.constant 0 : index
    %c0_22 = arith.constant 0 : index
    %41 = vector.load %arg8[%c0_21, %c0_22] : memref<1920x128xf32, #tpu.memory_space<vmem>>, vector<64x128xf32>
    %cst_23 = arith.constant dense<0.000000e+00> : vector<8x128xf32>
    %42 = tpu.matmul %40, %41, %cst_23 {dimension_numbers = #tpu.dot_dimension_numbers<[1], [0], [0], [1], [0, 0, 1, 1], [], []>} : vector<8x64xf32>, vector<64x128xf32>, vector<8x128xf32> -> vector<8x128xf32>
    %43 = arith.addf %39, %42 : vector<8x128xf32>
    %44 = vector.extract_strided_slice %36 {offsets = [8, 0], sizes = [8, 64], strides = [1, 1]} : vector<240x64xf32> to vector<8x64xf32>
    %c64 = arith.constant 64 : index
    %c0_24 = arith.constant 0 : index
    %45 = vector.load %arg8[%c64, %c0_24] : memref<1920x128xf32, #tpu.memory_space<vmem>>, vector<64x128xf32>
    %cst_25 = arith.constant dense<0.000000e+00> : vector<8x128xf32>
    %46 = tpu.matmul %44, %45, %cst_25 {dimension_numbers = #tpu.dot_dimension_numbers<[1], [0], [0], [1], [0, 0, 1, 1], [], []>} : vector<8x64xf32>, vector<64x128xf32>, vector<8x128xf32> -> vector<8x128xf32>
    %47 = arith.addf %43, %46 : vector<8x128xf32>
    %48 = vector.extract_strided_slice %36 {offsets = [16, 0], sizes = [8, 64], strides = [1, 1]} : vector<240x64xf32> to vector<8x64xf32>
    %c128 = arith.constant 128 : index
    %c0_26 = arith.constant 0 : index
    %49 = vector.load %arg8[%c128, %c0_26] : memref<1920x128xf32, #tpu.memory_space<vmem>>, vector<64x128xf32>
    %cst_27 = arith.constant dense<0.000000e+00> : vector<8x128xf32>
    %50 = tpu.matmul %48, %49, %cst_27 {dimension_numbers = #tpu.dot_dimension_numbers<[1], [0], [0], [1], [0, 0, 1, 1], [], []>} : vector<8x64xf32>, vector<64x128xf32>, vector<8x128xf32> -> vector<8x128xf32>
    %51 = arith.addf %47, %50 : vector<8x128xf32>
    %52 = vector.extract_strided_slice %36 {offsets = [24, 0], sizes = [8, 64], strides = [1, 1]} : vector<240x64xf32> to vector<8x64xf32>
    %c192 = arith.constant 192 : index
    %c0_28 = arith.constant 0 : index
    %53 = vector.load %arg8[%c192, %c0_28] : memref<1920x128xf32, #tpu.memory_space<vmem>>, vector<64x128xf32>
    %cst_29 = arith.constant dense<0.000000e+00> : vector<8x128xf32>
    %54 = tpu.matmul %52, %53, %cst_29 {dimension_numbers = #tpu.dot_dimension_numbers<[1], [0], [0], [1], [0, 0, 1, 1], [], []>} : vector<8x64xf32>, vector<64x128xf32>, vector<8x128xf32> -> vector<8x128xf32>
    %55 = arith.addf %51, %54 : vector<8x128xf32>
    %56 = vector.extract_strided_slice %36 {offsets = [32, 0], sizes = [8, 64], strides = [1, 1]} : vector<240x64xf32> to vector<8x64xf32>
    %c256 = arith.constant 256 : index
    %c0_30 = arith.constant 0 : index
    %57 = vector.load %arg8[%c256, %c0_30] : memref<1920x128xf32, #tpu.memory_space<vmem>>, vector<64x128xf32>
    %cst_31 = arith.constant dense<0.000000e+00> : vector<8x128xf32>
    %58 = tpu.matmul %56, %57, %cst_31 {dimension_numbers = #tpu.dot_dimension_numbers<[1], [0], [0], [1], [0, 0, 1, 1], [], []>} : vector<8x64xf32>, vector<64x128xf32>, vector<8x128xf32> -> vector<8x128xf32>
    %59 = arith.addf %55, %58 : vector<8x128xf32>
    %60 = vector.extract_strided_slice %36 {offsets = [40, 0], sizes = [8, 64], strides = [1, 1]} : vector<240x64xf32> to vector<8x64xf32>
    %c320 = arith.constant 320 : index
    %c0_32 = arith.constant 0 : index
    %61 = vector.load %arg8[%c320, %c0_32] : memref<1920x128xf32, #tpu.memory_space<vmem>>, vector<64x128xf32>
    %cst_33 = arith.constant dense<0.000000e+00> : vector<8x128xf32>
    %62 = tpu.matmul %60, %61, %cst_33 {dimension_numbers = #tpu.dot_dimension_numbers<[1], [0], [0], [1], [0, 0, 1, 1], [], []>} : vector<8x64xf32>, vector<64x128xf32>, vector<8x128xf32> -> vector<8x128xf32>
    %63 = arith.addf %59, %62 : vector<8x128xf32>
    %64 = vector.extract_strided_slice %36 {offsets = [48, 0], sizes = [8, 64], strides = [1, 1]} : vector<240x64xf32> to vector<8x64xf32>
    %c384 = arith.constant 384 : index
    %c0_34 = arith.constant 0 : index
    %65 = vector.load %arg8[%c384, %c0_34] : memref<1920x128xf32, #tpu.memory_space<vmem>>, vector<64x128xf32>
    %cst_35 = arith.constant dense<0.000000e+00> : vector<8x128xf32>
    %66 = tpu.matmul %64, %65, %cst_35 {dimension_numbers = #tpu.dot_dimension_numbers<[1], [0], [0], [1], [0, 0, 1, 1], [], []>} : vector<8x64xf32>, vector<64x128xf32>, vector<8x128xf32> -> vector<8x128xf32>
    %67 = arith.addf %63, %66 : vector<8x128xf32>
    %68 = vector.extract_strided_slice %36 {offsets = [56, 0], sizes = [8, 64], strides = [1, 1]} : vector<240x64xf32> to vector<8x64xf32>
    %c448 = arith.constant 448 : index
    %c0_36 = arith.constant 0 : index
    %69 = vector.load %arg8[%c448, %c0_36] : memref<1920x128xf32, #tpu.memory_space<vmem>>, vector<64x128xf32>
    %cst_37 = arith.constant dense<0.000000e+00> : vector<8x128xf32>
    %70 = tpu.matmul %68, %69, %cst_37 {dimension_numbers = #tpu.dot_dimension_numbers<[1], [0], [0], [1], [0, 0, 1, 1], [], []>} : vector<8x64xf32>, vector<64x128xf32>, vector<8x128xf32> -> vector<8x128xf32>
    %71 = arith.addf %67, %70 : vector<8x128xf32>
    %72 = vector.extract_strided_slice %36 {offsets = [64, 0], sizes = [8, 64], strides = [1, 1]} : vector<240x64xf32> to vector<8x64xf32>
    %c512 = arith.constant 512 : index
    %c0_38 = arith.constant 0 : index
    %73 = vector.load %arg8[%c512, %c0_38] : memref<1920x128xf32, #tpu.memory_space<vmem>>, vector<64x128xf32>
    %cst_39 = arith.constant dense<0.000000e+00> : vector<8x128xf32>
    %74 = tpu.matmul %72, %73, %cst_39 {dimension_numbers = #tpu.dot_dimension_numbers<[1], [0], [0], [1], [0, 0, 1, 1], [], []>} : vector<8x64xf32>, vector<64x128xf32>, vector<8x128xf32> -> vector<8x128xf32>
    %75 = arith.addf %71, %74 : vector<8x128xf32>
    %76 = vector.extract_strided_slice %36 {offsets = [72, 0], sizes = [8, 64], strides = [1, 1]} : vector<240x64xf32> to vector<8x64xf32>
    %c576 = arith.constant 576 : index
    %c0_40 = arith.constant 0 : index
    %77 = vector.load %arg8[%c576, %c0_40] : memref<1920x128xf32, #tpu.memory_space<vmem>>, vector<64x128xf32>
    %cst_41 = arith.constant dense<0.000000e+00> : vector<8x128xf32>
    %78 = tpu.matmul %76, %77, %cst_41 {dimension_numbers = #tpu.dot_dimension_numbers<[1], [0], [0], [1], [0, 0, 1, 1], [], []>} : vector<8x64xf32>, vector<64x128xf32>, vector<8x128xf32> -> vector<8x128xf32>
    %79 = arith.addf %75, %78 : vector<8x128xf32>
    %80 = vector.extract_strided_slice %36 {offsets = [80, 0], sizes = [8, 64], strides = [1, 1]} : vector<240x64xf32> to vector<8x64xf32>
    %c640 = arith.constant 640 : index
    %c0_42 = arith.constant 0 : index
    %81 = vector.load %arg8[%c640, %c0_42] : memref<1920x128xf32, #tpu.memory_space<vmem>>, vector<64x128xf32>
    %cst_43 = arith.constant dense<0.000000e+00> : vector<8x128xf32>
    %82 = tpu.matmul %80, %81, %cst_43 {dimension_numbers = #tpu.dot_dimension_numbers<[1], [0], [0], [1], [0, 0, 1, 1], [], []>} : vector<8x64xf32>, vector<64x128xf32>, vector<8x128xf32> -> vector<8x128xf32>
    %83 = arith.addf %79, %82 : vector<8x128xf32>
    %84 = vector.extract_strided_slice %36 {offsets = [88, 0], sizes = [8, 64], strides = [1, 1]} : vector<240x64xf32> to vector<8x64xf32>
    %c704 = arith.constant 704 : index
    %c0_44 = arith.constant 0 : index
    %85 = vector.load %arg8[%c704, %c0_44] : memref<1920x128xf32, #tpu.memory_space<vmem>>, vector<64x128xf32>
    %cst_45 = arith.constant dense<0.000000e+00> : vector<8x128xf32>
    %86 = tpu.matmul %84, %85, %cst_45 {dimension_numbers = #tpu.dot_dimension_numbers<[1], [0], [0], [1], [0, 0, 1, 1], [], []>} : vector<8x64xf32>, vector<64x128xf32>, vector<8x128xf32> -> vector<8x128xf32>
    %87 = arith.addf %83, %86 : vector<8x128xf32>
    %88 = vector.extract_strided_slice %36 {offsets = [96, 0], sizes = [8, 64], strides = [1, 1]} : vector<240x64xf32> to vector<8x64xf32>
    %c768 = arith.constant 768 : index
    %c0_46 = arith.constant 0 : index
    %89 = vector.load %arg8[%c768, %c0_46] : memref<1920x128xf32, #tpu.memory_space<vmem>>, vector<64x128xf32>
    %cst_47 = arith.constant dense<0.000000e+00> : vector<8x128xf32>
    %90 = tpu.matmul %88, %89, %cst_47 {dimension_numbers = #tpu.dot_dimension_numbers<[1], [0], [0], [1], [0, 0, 1, 1], [], []>} : vector<8x64xf32>, vector<64x128xf32>, vector<8x128xf32> -> vector<8x128xf32>
    %91 = arith.addf %87, %90 : vector<8x128xf32>
    %92 = vector.extract_strided_slice %36 {offsets = [104, 0], sizes = [8, 64], strides = [1, 1]} : vector<240x64xf32> to vector<8x64xf32>
    %c832 = arith.constant 832 : index
    %c0_48 = arith.constant 0 : index
    %93 = vector.load %arg8[%c832, %c0_48] : memref<1920x128xf32, #tpu.memory_space<vmem>>, vector<64x128xf32>
    %cst_49 = arith.constant dense<0.000000e+00> : vector<8x128xf32>
    %94 = tpu.matmul %92, %93, %cst_49 {dimension_numbers = #tpu.dot_dimension_numbers<[1], [0], [0], [1], [0, 0, 1, 1], [], []>} : vector<8x64xf32>, vector<64x128xf32>, vector<8x128xf32> -> vector<8x128xf32>
    %95 = arith.addf %91, %94 : vector<8x128xf32>
    %96 = vector.extract_strided_slice %36 {offsets = [112, 0], sizes = [8, 64], strides = [1, 1]} : vector<240x64xf32> to vector<8x64xf32>
    %c896 = arith.constant 896 : index
    %c0_50 = arith.constant 0 : index
    %97 = vector.load %arg8[%c896, %c0_50] : memref<1920x128xf32, #tpu.memory_space<vmem>>, vector<64x128xf32>
    %cst_51 = arith.constant dense<0.000000e+00> : vector<8x128xf32>
    %98 = tpu.matmul %96, %97, %cst_51 {dimension_numbers = #tpu.dot_dimension_numbers<[1], [0], [0], [1], [0, 0, 1, 1], [], []>} : vector<8x64xf32>, vector<64x128xf32>, vector<8x128xf32> -> vector<8x128xf32>
    %99 = arith.addf %95, %98 : vector<8x128xf32>
    %100 = vector.extract_strided_slice %36 {offsets = [120, 0], sizes = [8, 64], strides = [1, 1]} : vector<240x64xf32> to vector<8x64xf32>
    %c960 = arith.constant 960 : index
    %c0_52 = arith.constant 0 : index
    %101 = vector.load %arg8[%c960, %c0_52] : memref<1920x128xf32, #tpu.memory_space<vmem>>, vector<64x128xf32>
    %cst_53 = arith.constant dense<0.000000e+00> : vector<8x128xf32>
    %102 = tpu.matmul %100, %101, %cst_53 {dimension_numbers = #tpu.dot_dimension_numbers<[1], [0], [0], [1], [0, 0, 1, 1], [], []>} : vector<8x64xf32>, vector<64x128xf32>, vector<8x128xf32> -> vector<8x128xf32>
    %103 = arith.addf %99, %102 : vector<8x128xf32>
    %104 = vector.extract_strided_slice %36 {offsets = [128, 0], sizes = [8, 64], strides = [1, 1]} : vector<240x64xf32> to vector<8x64xf32>
    %c1024 = arith.constant 1024 : index
    %c0_54 = arith.constant 0 : index
    %105 = vector.load %arg8[%c1024, %c0_54] : memref<1920x128xf32, #tpu.memory_space<vmem>>, vector<64x128xf32>
    %cst_55 = arith.constant dense<0.000000e+00> : vector<8x128xf32>
    %106 = tpu.matmul %104, %105, %cst_55 {dimension_numbers = #tpu.dot_dimension_numbers<[1], [0], [0], [1], [0, 0, 1, 1], [], []>} : vector<8x64xf32>, vector<64x128xf32>, vector<8x128xf32> -> vector<8x128xf32>
    %107 = arith.addf %103, %106 : vector<8x128xf32>
    %108 = vector.extract_strided_slice %36 {offsets = [136, 0], sizes = [8, 64], strides = [1, 1]} : vector<240x64xf32> to vector<8x64xf32>
    %c1088 = arith.constant 1088 : index
    %c0_56 = arith.constant 0 : index
    %109 = vector.load %arg8[%c1088, %c0_56] : memref<1920x128xf32, #tpu.memory_space<vmem>>, vector<64x128xf32>
    %cst_57 = arith.constant dense<0.000000e+00> : vector<8x128xf32>
    %110 = tpu.matmul %108, %109, %cst_57 {dimension_numbers = #tpu.dot_dimension_numbers<[1], [0], [0], [1], [0, 0, 1, 1], [], []>} : vector<8x64xf32>, vector<64x128xf32>, vector<8x128xf32> -> vector<8x128xf32>
    %111 = arith.addf %107, %110 : vector<8x128xf32>
    %112 = vector.extract_strided_slice %36 {offsets = [144, 0], sizes = [8, 64], strides = [1, 1]} : vector<240x64xf32> to vector<8x64xf32>
    %c1152 = arith.constant 1152 : index
    %c0_58 = arith.constant 0 : index
    %113 = vector.load %arg8[%c1152, %c0_58] : memref<1920x128xf32, #tpu.memory_space<vmem>>, vector<64x128xf32>
    %cst_59 = arith.constant dense<0.000000e+00> : vector<8x128xf32>
    %114 = tpu.matmul %112, %113, %cst_59 {dimension_numbers = #tpu.dot_dimension_numbers<[1], [0], [0], [1], [0, 0, 1, 1], [], []>} : vector<8x64xf32>, vector<64x128xf32>, vector<8x128xf32> -> vector<8x128xf32>
    %115 = arith.addf %111, %114 : vector<8x128xf32>
    %116 = vector.extract_strided_slice %36 {offsets = [152, 0], sizes = [8, 64], strides = [1, 1]} : vector<240x64xf32> to vector<8x64xf32>
    %c1216 = arith.constant 1216 : index
    %c0_60 = arith.constant 0 : index
    %117 = vector.load %arg8[%c1216, %c0_60] : memref<1920x128xf32, #tpu.memory_space<vmem>>, vector<64x128xf32>
    %cst_61 = arith.constant dense<0.000000e+00> : vector<8x128xf32>
    %118 = tpu.matmul %116, %117, %cst_61 {dimension_numbers = #tpu.dot_dimension_numbers<[1], [0], [0], [1], [0, 0, 1, 1], [], []>} : vector<8x64xf32>, vector<64x128xf32>, vector<8x128xf32> -> vector<8x128xf32>
    %119 = arith.addf %115, %118 : vector<8x128xf32>
    %120 = vector.extract_strided_slice %36 {offsets = [160, 0], sizes = [8, 64], strides = [1, 1]} : vector<240x64xf32> to vector<8x64xf32>
    %c1280 = arith.constant 1280 : index
    %c0_62 = arith.constant 0 : index
    %121 = vector.load %arg8[%c1280, %c0_62] : memref<1920x128xf32, #tpu.memory_space<vmem>>, vector<64x128xf32>
    %cst_63 = arith.constant dense<0.000000e+00> : vector<8x128xf32>
    %122 = tpu.matmul %120, %121, %cst_63 {dimension_numbers = #tpu.dot_dimension_numbers<[1], [0], [0], [1], [0, 0, 1, 1], [], []>} : vector<8x64xf32>, vector<64x128xf32>, vector<8x128xf32> -> vector<8x128xf32>
    %123 = arith.addf %119, %122 : vector<8x128xf32>
    %124 = vector.extract_strided_slice %36 {offsets = [168, 0], sizes = [8, 64], strides = [1, 1]} : vector<240x64xf32> to vector<8x64xf32>
    %c1344 = arith.constant 1344 : index
    %c0_64 = arith.constant 0 : index
    %125 = vector.load %arg8[%c1344, %c0_64] : memref<1920x128xf32, #tpu.memory_space<vmem>>, vector<64x128xf32>
    %cst_65 = arith.constant dense<0.000000e+00> : vector<8x128xf32>
    %126 = tpu.matmul %124, %125, %cst_65 {dimension_numbers = #tpu.dot_dimension_numbers<[1], [0], [0], [1], [0, 0, 1, 1], [], []>} : vector<8x64xf32>, vector<64x128xf32>, vector<8x128xf32> -> vector<8x128xf32>
    %127 = arith.addf %123, %126 : vector<8x128xf32>
    %128 = vector.extract_strided_slice %36 {offsets = [176, 0], sizes = [8, 64], strides = [1, 1]} : vector<240x64xf32> to vector<8x64xf32>
    %c1408 = arith.constant 1408 : index
    %c0_66 = arith.constant 0 : index
    %129 = vector.load %arg8[%c1408, %c0_66] : memref<1920x128xf32, #tpu.memory_space<vmem>>, vector<64x128xf32>
    %cst_67 = arith.constant dense<0.000000e+00> : vector<8x128xf32>
    %130 = tpu.matmul %128, %129, %cst_67 {dimension_numbers = #tpu.dot_dimension_numbers<[1], [0], [0], [1], [0, 0, 1, 1], [], []>} : vector<8x64xf32>, vector<64x128xf32>, vector<8x128xf32> -> vector<8x128xf32>
    %131 = arith.addf %127, %130 : vector<8x128xf32>
    %132 = vector.extract_strided_slice %36 {offsets = [184, 0], sizes = [8, 64], strides = [1, 1]} : vector<240x64xf32> to vector<8x64xf32>
    %c1472 = arith.constant 1472 : index
    %c0_68 = arith.constant 0 : index
    %133 = vector.load %arg8[%c1472, %c0_68] : memref<1920x128xf32, #tpu.memory_space<vmem>>, vector<64x128xf32>
    %cst_69 = arith.constant dense<0.000000e+00> : vector<8x128xf32>
    %134 = tpu.matmul %132, %133, %cst_69 {dimension_numbers = #tpu.dot_dimension_numbers<[1], [0], [0], [1], [0, 0, 1, 1], [], []>} : vector<8x64xf32>, vector<64x128xf32>, vector<8x128xf32> -> vector<8x128xf32>
    %135 = arith.addf %131, %134 : vector<8x128xf32>
    %136 = vector.extract_strided_slice %36 {offsets = [192, 0], sizes = [8, 64], strides = [1, 1]} : vector<240x64xf32> to vector<8x64xf32>
    %c1536 = arith.constant 1536 : index
    %c0_70 = arith.constant 0 : index
    %137 = vector.load %arg8[%c1536, %c0_70] : memref<1920x128xf32, #tpu.memory_space<vmem>>, vector<64x128xf32>
    %cst_71 = arith.constant dense<0.000000e+00> : vector<8x128xf32>
    %138 = tpu.matmul %136, %137, %cst_71 {dimension_numbers = #tpu.dot_dimension_numbers<[1], [0], [0], [1], [0, 0, 1, 1], [], []>} : vector<8x64xf32>, vector<64x128xf32>, vector<8x128xf32> -> vector<8x128xf32>
    %139 = arith.addf %135, %138 : vector<8x128xf32>
    %140 = vector.extract_strided_slice %36 {offsets = [200, 0], sizes = [8, 64], strides = [1, 1]} : vector<240x64xf32> to vector<8x64xf32>
    %c1600 = arith.constant 1600 : index
    %c0_72 = arith.constant 0 : index
    %141 = vector.load %arg8[%c1600, %c0_72] : memref<1920x128xf32, #tpu.memory_space<vmem>>, vector<64x128xf32>
    %cst_73 = arith.constant dense<0.000000e+00> : vector<8x128xf32>
    %142 = tpu.matmul %140, %141, %cst_73 {dimension_numbers = #tpu.dot_dimension_numbers<[1], [0], [0], [1], [0, 0, 1, 1], [], []>} : vector<8x64xf32>, vector<64x128xf32>, vector<8x128xf32> -> vector<8x128xf32>
    %143 = arith.addf %139, %142 : vector<8x128xf32>
    %144 = vector.extract_strided_slice %36 {offsets = [208, 0], sizes = [8, 64], strides = [1, 1]} : vector<240x64xf32> to vector<8x64xf32>
    %c1664 = arith.constant 1664 : index
    %c0_74 = arith.constant 0 : index
    %145 = vector.load %arg8[%c1664, %c0_74] : memref<1920x128xf32, #tpu.memory_space<vmem>>, vector<64x128xf32>
    %cst_75 = arith.constant dense<0.000000e+00> : vector<8x128xf32>
    %146 = tpu.matmul %144, %145, %cst_75 {dimension_numbers = #tpu.dot_dimension_numbers<[1], [0], [0], [1], [0, 0, 1, 1], [], []>} : vector<8x64xf32>, vector<64x128xf32>, vector<8x128xf32> -> vector<8x128xf32>
    %147 = arith.addf %143, %146 : vector<8x128xf32>
    %148 = vector.extract_strided_slice %36 {offsets = [216, 0], sizes = [8, 64], strides = [1, 1]} : vector<240x64xf32> to vector<8x64xf32>
    %c1728 = arith.constant 1728 : index
    %c0_76 = arith.constant 0 : index
    %149 = vector.load %arg8[%c1728, %c0_76] : memref<1920x128xf32, #tpu.memory_space<vmem>>, vector<64x128xf32>
    %cst_77 = arith.constant dense<0.000000e+00> : vector<8x128xf32>
    %150 = tpu.matmul %148, %149, %cst_77 {dimension_numbers = #tpu.dot_dimension_numbers<[1], [0], [0], [1], [0, 0, 1, 1], [], []>} : vector<8x64xf32>, vector<64x128xf32>, vector<8x128xf32> -> vector<8x128xf32>
    %151 = arith.addf %147, %150 : vector<8x128xf32>
    %152 = vector.extract_strided_slice %36 {offsets = [224, 0], sizes = [8, 64], strides = [1, 1]} : vector<240x64xf32> to vector<8x64xf32>
    %c1792 = arith.constant 1792 : index
    %c0_78 = arith.constant 0 : index
    %153 = vector.load %arg8[%c1792, %c0_78] : memref<1920x128xf32, #tpu.memory_space<vmem>>, vector<64x128xf32>
    %cst_79 = arith.constant dense<0.000000e+00> : vector<8x128xf32>
    %154 = tpu.matmul %152, %153, %cst_79 {dimension_numbers = #tpu.dot_dimension_numbers<[1], [0], [0], [1], [0, 0, 1, 1], [], []>} : vector<8x64xf32>, vector<64x128xf32>, vector<8x128xf32> -> vector<8x128xf32>
    %155 = arith.addf %151, %154 : vector<8x128xf32>
    %156 = vector.extract_strided_slice %36 {offsets = [232, 0], sizes = [8, 64], strides = [1, 1]} : vector<240x64xf32> to vector<8x64xf32>
    %c1856 = arith.constant 1856 : index
    %c0_80 = arith.constant 0 : index
    %157 = vector.load %arg8[%c1856, %c0_80] : memref<1920x128xf32, #tpu.memory_space<vmem>>, vector<64x128xf32>
    %cst_81 = arith.constant dense<0.000000e+00> : vector<8x128xf32>
    %158 = tpu.matmul %156, %157, %cst_81 {dimension_numbers = #tpu.dot_dimension_numbers<[1], [0], [0], [1], [0, 0, 1, 1], [], []>} : vector<8x64xf32>, vector<64x128xf32>, vector<8x128xf32> -> vector<8x128xf32>
    %159 = arith.addf %155, %158 : vector<8x128xf32>
    %c0_82 = arith.constant 0 : index
    %c0_83 = arith.constant 0 : index
    %160 = vector.load %arg10[%c0_82, %c0_83] : memref<8x128xf32, #tpu.memory_space<vmem>>, vector<8x128xf32>
    tpu.vector_store %arg10[%c0_82, %c0_83], %159 {strides = array<i32>} : memref<8x128xf32, #tpu.memory_space<vmem>>, vector<8x128xf32>,
    return
  }
  func.func @transform_0(%arg0: i32) -> (i32, i32) {
    %c0_i32 = arith.constant 0 : i32
    %c0_i32_0 = arith.constant 0 : i32
    return %arg0, %c0_i32 : i32, i32
  }
  func.func @transform_1(%arg0: i32) -> (i32, i32) {
    %c0_i32 = arith.constant 0 : i32
    %c0_i32_0 = arith.constant 0 : i32
    %c0_i32_1 = arith.constant 0 : i32
    return %c0_i32, %c0_i32_0 : i32, i32
  }
  func.func @transform_2(%arg0: i32) -> (i32, i32) {
    %c0_i32 = arith.constant 0 : i32
    %c0_i32_0 = arith.constant 0 : i32
    %c0_i32_1 = arith.constant 0 : i32
    return %c0_i32, %c0_i32_0 : i32, i32
  }
  func.func @transform_3(%arg0: i32) -> (i32, i32) {
    %c0_i32 = arith.constant 0 : i32
    %c0_i32_0 = arith.constant 0 : i32
    %c0_i32_1 = arith.constant 0 : i32
    return %c0_i32, %c0_i32_0 : i32, i32
  }
  func.func @transform_4(%arg0: i32) -> (i32, i32) {
    %c0_i32 = arith.constant 0 : i32
    %c0_i32_0 = arith.constant 0 : i32
    %c0_i32_1 = arith.constant 0 : i32
    return %c0_i32, %c0_i32_0 : i32, i32
  }
  func.func @transform_5(%arg0: i32) -> (i32, i32) {
    %c0_i32 = arith.constant 0 : i32
    %c0_i32_0 = arith.constant 0 : i32
    %c0_i32_1 = arith.constant 0 : i32
    return %c0_i32, %c0_i32_0 : i32, i32
  }
  func.func @transform_6(%arg0: i32) -> (i32, i32) {
    %c0_i32 = arith.constant 0 : i32
    %c0_i32_0 = arith.constant 0 : i32
    %c0_i32_1 = arith.constant 0 : i32
    return %c0_i32, %c0_i32_0 : i32, i32
  }
  func.func @transform_7(%arg0: i32) -> (i32, i32) {
    %c0_i32 = arith.constant 0 : i32
    %c0_i32_0 = arith.constant 0 : i32
    %c0_i32_1 = arith.constant 0 : i32
    return %c0_i32, %c0_i32_0 : i32, i32
  }
  func.func @transform_8(%arg0: i32) -> (i32, i32) {
    %c0_i32 = arith.constant 0 : i32
    %c0_i32_0 = arith.constant 0 : i32
    %c0_i32_1 = arith.constant 0 : i32
    return %c0_i32, %c0_i32_0 : i32, i32
  }
  func.func @transform_9(%arg0: i32) -> (i32, i32) {
    %c0_i32 = arith.constant 0 : i32
    %c0_i32_0 = arith.constant 0 : i32
    return %arg0, %c0_i32 : i32, i32
  }
}

</mosaic_0001>

<llo_original>
// kernel: tpu_custom_call.1
$region0: #{tpu_custom_call.1}
  #allocation0 [shape = 'u32[]', space=smem, size = 0x4, offset = 0x4, fixed_abs, tag = 'smem constant byte address 0x4 - core index']
  #allocation1 [shape = 'u32[144,128]{1,0:T(1,128)}', space=vmem, size = 0x12000, scoped, tag = 'internal scratch']
  %s0 = inlined_call_operand.vmem [shape: f32[240,6], index: 0, kind: input, shape index: {}]
  %s1 = inlined_call_operand.hbm [shape: f32[6,64], index: 1, kind: input, shape index: {}]
  %s2 = inlined_call_operand.vmem [shape: f32[1,64], index: 2, kind: input, shape index: {}]
  %s3 = inlined_call_operand.vmem [shape: f32[64,192], index: 3, kind: input, shape index: {}]
  %s4 = inlined_call_operand.vmem [shape: f32[1,64], index: 4, kind: input, shape index: {}]
  %s5 = inlined_call_operand.vmem [shape: f32[64,192], index: 5, kind: input, shape index: {}]
  %s6 = inlined_call_operand.vmem [shape: f32[1,64], index: 6, kind: input, shape index: {}]
  %s7 = inlined_call_operand.hbm [shape: f32[1920,128], index: 7, kind: input, shape index: {}]
  %s8 = inlined_call_operand.vmem [shape: f32[1,128], index: 8, kind: input, shape index: {}]
  %s9 = inlined_call_operand.hbm [shape: f32[8,128], index: 9, kind: output, shape index: {}]
  %s10 = sld [smem:[#allocation0]]
  $region54: #{tpu_custom_call.1} parent=0
    _
  %s12 = ssub.s32 1, %s10
  %s13 = scalar_select 0, %s12, %s10
  $region1: #{tpu_custom_call.1} parent=0
    #allocation2 [shape = 'u8[4096]{0}', space=vmem, size = 0x1000, scoped, tag = 'input window, operand 1, single buffered']
    #allocation3 [shape = 's32[1]{0}', space=sflag, size = 0x4, scoped, tag = 'scoped memory for tpu_custom_call.1']
    #allocation4 [shape = 's32[1]{0}', space=sflag, size = 0x4, scoped, tag = 'scoped memory for tpu_custom_call.1']
    #allocation5 [shape = 'u8[983040]{0}', space=vmem, size = 0xf0000, scoped, tag = 'input window, operand 7, single buffered']
    #allocation6 [shape = 's32[1]{0}', space=sflag, size = 0x4, scoped, tag = 'scoped memory for tpu_custom_call.1']
    #allocation7 [shape = 'u8[4096]{0}', space=vmem, size = 0x1000, scoped, tag = 'output window, operand 0, single buffered']
    %14 = vsyncpa [#allocation3], 0
    %15 = vsyncpa [#allocation6], 0
    %16 = vsyncpa [#allocation4], 0
    // Predicated region
    $region2: #{tpu_custom_call.1} parent=1 // pred_check
      _
    $region3: #{tpu_custom_call.1} parent=1 // pred_check_branch
      %18 = sbr.rel (0) target = $region5
    $region4: #{tpu_custom_call.1} parent=1 // pred_region
      _
    $region5: #{tpu_custom_call.1} parent=1 // pred_fallthru
      _
    // Predicated region
    $region6: #{tpu_custom_call.1} parent=1 // pred_check
      _
    $region7: #{tpu_custom_call.1} parent=1 // pred_check_branch
      %20 = sbr.rel (0) target = $region9
    $region8: #{tpu_custom_call.1} parent=1 // pred_region
      %s22 = ssub.s32 128, 128
      %23 = vsyncadd [#allocation3], %s22
      %s25 = sshll.u32 [#allocation2], 4
      %s26 = int_to_ptr.vmem [resolvable:$true] %s25
      %28 = dma.hbm_to_vmem [thread:$0]  %s1, 128, %s26, [#allocation3]
    $region9: #{tpu_custom_call.1} parent=1 // pred_fallthru
      _
    // Predicated region
    $region10: #{tpu_custom_call.1} parent=1 // pred_check
      _
    $region11: #{tpu_custom_call.1} parent=1 // pred_check_branch
      %30 = sbr.rel (0) target = $region13
    $region12: #{tpu_custom_call.1} parent=1 // pred_region
      _
    $region13: #{tpu_custom_call.1} parent=1 // pred_fallthru
      _
    // Predicated region
    $region14: #{tpu_custom_call.1} parent=1 // pred_check
      _
    $region15: #{tpu_custom_call.1} parent=1 // pred_check_branch
      %32 = sbr.rel (0) target = $region17
    $region16: #{tpu_custom_call.1} parent=1 // pred_region
      _
    $region17: #{tpu_custom_call.1} parent=1 // pred_fallthru
      _
    // Predicated region
    $region18: #{tpu_custom_call.1} parent=1 // pred_check
      _
    $region19: #{tpu_custom_call.1} parent=1 // pred_check_branch
      %34 = sbr.rel (0) target = $region21
    $region20: #{tpu_custom_call.1} parent=1 // pred_region
      _
    $region21: #{tpu_custom_call.1} parent=1 // pred_fallthru
      _
    // Predicated region
    $region22: #{tpu_custom_call.1} parent=1 // pred_check
      _
    $region23: #{tpu_custom_call.1} parent=1 // pred_check_branch
      %36 = sbr.rel (0) target = $region25
    $region24: #{tpu_custom_call.1} parent=1 // pred_region
      _
    $region25: #{tpu_custom_call.1} parent=1 // pred_fallthru
      _
    // Predicated region
    $region26: #{tpu_custom_call.1} parent=1 // pred_check
      _
    $region27: #{tpu_custom_call.1} parent=1 // pred_check_branch
      %38 = sbr.rel (0) target = $region29
    $region28: #{tpu_custom_call.1} parent=1 // pred_region
      _
    $region29: #{tpu_custom_call.1} parent=1 // pred_fallthru
      _
    // Predicated region
    $region30: #{tpu_custom_call.1} parent=1 // pred_check
      _
    $region31: #{tpu_custom_call.1} parent=1 // pred_check_branch
      %40 = sbr.rel (0) target = $region33
    $region32: #{tpu_custom_call.1} parent=1 // pred_region
      %s42 = ssub.s32 30720, 30720
      %43 = vsyncadd [#allocation6], %s42
      %s44 = sshll.u32 [#allocation5], 4
      %s45 = int_to_ptr.vmem [resolvable:$true] %s44
      %50 = dma.hbm_to_vmem [thread:$0]  %s7, 30720, %s45, [#allocation6], 128, 128, 8
    $region33: #{tpu_custom_call.1} parent=1 // pred_fallthru
      _
    // Predicated region
    $region34: #{tpu_custom_call.1} parent=1 // pred_check
      _
    $region35: #{tpu_custom_call.1} parent=1 // pred_check_branch
      %52 = sbr.rel (0) target = $region37
    $region36: #{tpu_custom_call.1} parent=1 // pred_region
      _
    $region37: #{tpu_custom_call.1} parent=1 // pred_fallthru
      _
    // Predicated region
    $region38: #{tpu_custom_call.1} parent=1 // pred_check
      _
    $region39: #{tpu_custom_call.1} parent=1 // pred_check_branch
      %54 = sbr.rel (0) target = $region41
    $region40: #{tpu_custom_call.1} parent=1 // pred_region
      %55 = dma.done [#allocation3], 128
    $region41: #{tpu_custom_call.1} parent=1 // pred_fallthru
      _
    // Predicated region
    $region42: #{tpu_custom_call.1} parent=1 // pred_check
      _
    $region43: #{tpu_custom_call.1} parent=1 // pred_check_branch
      %57 = sbr.rel (0) target = $region45
    $region44: #{tpu_custom_call.1} parent=1 // pred_region
      %58 = dma.done [#allocation6], 30720
    $region45: #{tpu_custom_call.1} parent=1 // pred_fallthru
      _
    %v59 = vld [vmem:[%s0] sm:$0xff]
    %v60 = vld [vmem:[%s0 + $0x8] sm:$0xff]
    %v61 = vld [vmem:[%s0 + $0x10] sm:$0xff]
    %v62 = vld [vmem:[%s0 + $0x18] sm:$0xff]
    %v63 = vld [vmem:[%s0 + $0x20] sm:$0xff]
    %v64 = vld [vmem:[%s0 + $0x28] sm:$0xff]
    %v65 = vld [vmem:[%s0 + $0x30] sm:$0xff]
    %v66 = vld [vmem:[%s0 + $0x38] sm:$0xff]
    %v67 = vld [vmem:[%s0 + $0x40] sm:$0xff]
    %v68 = vld [vmem:[%s0 + $0x48] sm:$0xff]
    %v69 = vld [vmem:[%s0 + $0x50] sm:$0xff]
    %v70 = vld [vmem:[%s0 + $0x58] sm:$0xff]
    %v71 = vld [vmem:[%s0 + $0x60] sm:$0xff]
    %v72 = vld [vmem:[%s0 + $0x68] sm:$0xff]
    %v73 = vld [vmem:[%s0 + $0x70] sm:$0xff]
    %v74 = vld [vmem:[%s0 + $0x78] sm:$0xff]
    %v75 = vld [vmem:[%s0 + $0x80] sm:$0xff]
    %v76 = vld [vmem:[%s0 + $0x88] sm:$0xff]
    %v77 = vld [vmem:[%s0 + $0x90] sm:$0xff]
    %v78 = vld [vmem:[%s0 + $0x98] sm:$0xff]
    %v79 = vld [vmem:[%s0 + $0xa0] sm:$0xff]
    %v80 = vld [vmem:[%s0 + $0xa8] sm:$0xff]
    %v81 = vld [vmem:[%s0 + $0xb0] sm:$0xff]
    %v82 = vld [vmem:[%s0 + $0xb8] sm:$0xff]
    %v83 = vld [vmem:[%s0 + $0xc0] sm:$0xff]
    %v84 = vld [vmem:[%s0 + $0xc8] sm:$0xff]
    %v85 = vld [vmem:[%s0 + $0xd0] sm:$0xff]
    %v86 = vld [vmem:[%s0 + $0xd8] sm:$0xff]
    %v87 = vld [vmem:[%s0 + $0xe0] sm:$0xff]
    %v88 = vld [vmem:[%s0 + $0xe8] sm:$0xff]
    %v89 = vld [vmem:[#allocation2] sm:$0x3f]
    %v90 = vld [vmem:[%s2] sm:$0x1]
    %v92 = vlaneseq
    %v93 = vshrl.u32 %v92, 7
    %v94 = vsub.s32 0, %v93
    %v95 = vrot.slane %v90, %v94
    %vm97 = vcmask 48128
    %v99 = vsel %vm97, %v59, 0
    %v102 = vsel %vm97, %v60, 0
    %v105 = vsel %vm97, %v61, 0
    %v108 = vsel %vm97, %v62, 0
    %v111 = vsel %vm97, %v63, 0
    %v114 = vsel %vm97, %v64, 0
    %v117 = vsel %vm97, %v65, 0
    %v120 = vsel %vm97, %v66, 0
    %v123 = vsel %vm97, %v67, 0
    %v126 = vsel %vm97, %v68, 0
    %v129 = vsel %vm97, %v69, 0
    %v132 = vsel %vm97, %v70, 0
    %v135 = vsel %vm97, %v71, 0
    %v138 = vsel %vm97, %v72, 0
    %v141 = vsel %vm97, %v73, 0
    %v144 = vsel %vm97, %v74, 0
    %v147 = vsel %vm97, %v75, 0
    %v150 = vsel %vm97, %v76, 0
    %v153 = vsel %vm97, %v77, 0
    %v156 = vsel %vm97, %v78, 0
    %v159 = vsel %vm97, %v79, 0
    %v162 = vsel %vm97, %v80, 0
    %v165 = vsel %vm97, %v81, 0
    %v168 = vsel %vm97, %v82, 0
    %v171 = vsel %vm97, %v83, 0
    %v174 = vsel %vm97, %v84, 0
    %v177 = vsel %vm97, %v85, 0
    %v180 = vsel %vm97, %v86, 0
    %v183 = vsel %vm97, %v87, 0
    %v186 = vsel %vm97, %v88, 0
    %vm188 = vcmask 1045504
    %v190 = vsel %vm188, %v89, 0
    %192 = vmatprep.subr.mxu0 0.0
    %193 = vmatpush1.msra.mxu0 0.0
    %194 = vmatprep.subr.mxu0 0.0
    %195 = vmatpush1.msra.mxu0 0.0
    %196 = vmatprep.subr.mxu0 0.0
    %197 = vmatpush1.msra.mxu0 0.0
    %198 = vmatprep.subr.mxu0 0.0
    %199 = vmatpush1.msra.mxu0 0.0
    %200 = vmatprep.subr.mxu0 0.0
    %201 = vmatpush1.msra.mxu0 0.0
    %202 = vmatprep.subr.mxu0 0.0
    %203 = vmatpush1.msra.mxu0 0.0
    %204 = vmatprep.subr.mxu0 0.0
    %205 = vmatpush1.msra.mxu0 0.0
    %206 = vmatprep.subr.mxu0 0.0
    %207 = vmatpush1.msra.mxu0 0.0
    %208 = vmatprep.subr.mxu0 0.0
    %209 = vmatpush1.msra.mxu0 0.0
    %210 = vmatprep.subr.mxu0 0.0
    %211 = vmatpush1.msra.mxu0 0.0
    %212 = vmatprep.subr.mxu0 0.0
    %213 = vmatpush1.msra.mxu0 0.0
    %214 = vmatprep.subr.mxu0 0.0
    %215 = vmatpush1.msra.mxu0 0.0
    %216 = vmatprep.subr.mxu0 0.0
    %217 = vmatpush1.msra.mxu0 0.0
    %218 = vmatprep.subr.mxu0 0.0
    %219 = vmatpush1.msra.mxu0 0.0
    %220 = vmatprep.subr.mxu0 0.0
    %221 = vmatpush1.msra.mxu0 0.0
    %222 = vmatprep.subr.mxu0 0.0
    %223 = vmatpush1.msra.mxu0 %v190
    %224 = vmatprep.subr.mxu0 0.0
    %225 = vmatpush2.msra.mxu0 0.0
    %226 = vmatprep.subr.mxu0 0.0
    %227 = vmatpush2.msra.mxu0 0.0
    %228 = vmatprep.subr.mxu0 0.0
    %229 = vmatpush2.msra.mxu0 0.0
    %230 = vmatprep.subr.mxu0 0.0
    %231 = vmatpush2.msra.mxu0 0.0
    %232 = vmatprep.subr.mxu0 0.0
    %233 = vmatpush2.msra.mxu0 0.0
    %234 = vmatprep.subr.mxu0 0.0
    %235 = vmatpush2.msra.mxu0 0.0
    %236 = vmatprep.subr.mxu0 0.0
    %237 = vmatpush2.msra.mxu0 0.0
    %238 = vmatprep.subr.mxu0 0.0
    %239 = vmatpush2.msra.mxu0 0.0
    %240 = vmatprep.subr.mxu0 0.0
    %241 = vmatpush2.msra.mxu0 0.0
    %242 = vmatprep.subr.mxu0 0.0
    %243 = vmatpush2.msra.mxu0 0.0
    %244 = vmatprep.subr.mxu0 0.0
    %245 = vmatpush2.msra.mxu0 0.0
    %246 = vmatprep.subr.mxu0 0.0
    %247 = vmatpush2.msra.mxu0 0.0
    %248 = vmatprep.subr.mxu0 0.0
    %249 = vmatpush2.msra.mxu0 0.0
    %250 = vmatprep.subr.mxu0 0.0
    %251 = vmatpush2.msra.mxu0 0.0
    %252 = vmatprep.subr.mxu0 0.0
    %253 = vmatpush2.msra.mxu0 0.0
    %254 = vmatprep.subr.mxu0 0.0
    %255 = vmatpush2.msra.mxu0 0.0
    %256 = vmatprep.mubr.f32.mxu0 0.0
    %257 = vmatmul.mubr.f32.gmra.mxu0 %v99
    %v258 = vpop.f32.mrf.mxu0
    %v259 = vadd.f32 %v95, %v258
    %v260 = vpop.f32.mrf.mxu0
    %261 = vmatprep.mubr.f32.mxu0 0.0
    %262 = vmatmul.mubr.f32.gmra.mxu0 %v102
    %v263 = vpop.f32.mrf.mxu0
    %v264 = vadd.f32 %v95, %v263
    %v265 = vpop.f32.mrf.mxu0
    %266 = vmatprep.mubr.f32.mxu0 0.0
    %267 = vmatmul.mubr.f32.gmra.mxu0 %v105
    %v268 = vpop.f32.mrf.mxu0
    %v269 = vadd.f32 %v95, %v268
    %v270 = vpop.f32.mrf.mxu0
    %271 = vmatprep.mubr.f32.mxu0 0.0
    %272 = vmatmul.mubr.f32.gmra.mxu0 %v108
    %v273 = vpop.f32.mrf.mxu0
    %v274 = vadd.f32 %v95, %v273
    %v275 = vpop.f32.mrf.mxu0
    %276 = vmatprep.mubr.f32.mxu0 0.0
    %277 = vmatmul.mubr.f32.gmra.mxu0 %v111
    %v278 = vpop.f32.mrf.mxu0
    %v279 = vadd.f32 %v95, %v278
    %v280 = vpop.f32.mrf.mxu0
    %281 = vmatprep.mubr.f32.mxu0 0.0
    %282 = vmatmul.mubr.f32.gmra.mxu0 %v114
    %v283 = vpop.f32.mrf.mxu0
    %v284 = vadd.f32 %v95, %v283
    %v285 = vpop.f32.mrf.mxu0
    %286 = vmatprep.mubr.f32.mxu0 0.0
    %287 = vmatmul.mubr.f32.gmra.mxu0 %v117
    %v288 = vpop.f32.mrf.mxu0
    %v289 = vadd.f32 %v95, %v288
    %v290 = vpop.f32.mrf.mxu0
    %291 = vmatprep.mubr.f32.mxu0 0.0
    %292 = vmatmul.mubr.f32.gmra.mxu0 %v120
    %v293 = vpop.f32.mrf.mxu0
    %v294 = vadd.f32 %v95, %v293
    %v295 = vpop.f32.mrf.mxu0
    %296 = vmatprep.mubr.f32.mxu0 0.0
    %297 = vmatmul.mubr.f32.gmra.mxu0 %v123
    %v298 = vpop.f32.mrf.mxu0
    %v299 = vadd.f32 %v95, %v298
    %v300 = vpop.f32.mrf.mxu0
    %301 = vmatprep.mubr.f32.mxu0 0.0
    %302 = vmatmul.mubr.f32.gmra.mxu0 %v126
    %v303 = vpop.f32.mrf.mxu0
    %v304 = vadd.f32 %v95, %v303
    %v305 = vpop.f32.mrf.mxu0
    %306 = vmatprep.mubr.f32.mxu0 0.0
    %307 = vmatmul.mubr.f32.gmra.mxu0 %v129
    %v308 = vpop.f32.mrf.mxu0
    %v309 = vadd.f32 %v95, %v308
    %v310 = vpop.f32.mrf.mxu0
    %311 = vmatprep.mubr.f32.mxu0 0.0
    %312 = vmatmul.mubr.f32.gmra.mxu0 %v132
    %v313 = vpop.f32.mrf.mxu0
    %v314 = vadd.f32 %v95, %v313
    %v315 = vpop.f32.mrf.mxu0
    %316 = vmatprep.mubr.f32.mxu0 0.0
    %317 = vmatmul.mubr.f32.gmra.mxu0 %v135
    %v318 = vpop.f32.mrf.mxu0
    %v319 = vadd.f32 %v95, %v318
    %v320 = vpop.f32.mrf.mxu0
    %321 = vmatprep.mubr.f32.mxu0 0.0
    %322 = vmatmul.mubr.f32.gmra.mxu0 %v138
    %v323 = vpop.f32.mrf.mxu0
    %v324 = vadd.f32 %v95, %v323
    %v325 = vpop.f32.mrf.mxu0
    %326 = vmatprep.mubr.f32.mxu0 0.0
    %327 = vmatmul.mubr.f32.gmra.mxu0 %v141
    %v328 = vpop.f32.mrf.mxu0
    %v329 = vadd.f32 %v95, %v328
    %v330 = vpop.f32.mrf.mxu0
    %331 = vmatprep.mubr.f32.mxu0 0.0
    %332 = vmatmul.mubr.f32.gmra.mxu0 %v144
    %v333 = vpop.f32.mrf.mxu0
    %v334 = vadd.f32 %v95, %v333
    %v335 = vpop.f32.mrf.mxu0
    %336 = vmatprep.mubr.f32.mxu0 0.0
    %337 = vmatmul.mubr.f32.gmra.mxu0 %v147
    %v338 = vpop.f32.mrf.mxu0
    %v339 = vadd.f32 %v95, %v338
    %v340 = vpop.f32.mrf.mxu0
    %341 = vmatprep.mubr.f32.mxu0 0.0
    %342 = vmatmul.mubr.f32.gmra.mxu0 %v150
    %v343 = vpop.f32.mrf.mxu0
    %v344 = vadd.f32 %v95, %v343
    %v345 = vpop.f32.mrf.mxu0
    %346 = vmatprep.mubr.f32.mxu0 0.0
    %347 = vmatmul.mubr.f32.gmra.mxu0 %v153
    %v348 = vpop.f32.mrf.mxu0
    %v349 = vadd.f32 %v95, %v348
    %v350 = vpop.f32.mrf.mxu0
    %351 = vmatprep.mubr.f32.mxu0 0.0
    %352 = vmatmul.mubr.f32.gmra.mxu0 %v156
    %v353 = vpop.f32.mrf.mxu0
    %v354 = vadd.f32 %v95, %v353
    %v355 = vpop.f32.mrf.mxu0
    %356 = vmatprep.mubr.f32.mxu0 0.0
    %357 = vmatmul.mubr.f32.gmra.mxu0 %v159
    %v358 = vpop.f32.mrf.mxu0
    %v359 = vadd.f32 %v95, %v358
    %v360 = vpop.f32.mrf.mxu0
    %361 = vmatprep.mubr.f32.mxu0 0.0
    %362 = vmatmul.mubr.f32.gmra.mxu0 %v162
    %v363 = vpop.f32.mrf.mxu0
    %v364 = vadd.f32 %v95, %v363
    %v365 = vpop.f32.mrf.mxu0
    %366 = vmatprep.mubr.f32.mxu0 0.0
    %367 = vmatmul.mubr.f32.gmra.mxu0 %v165
    %v368 = vpop.f32.mrf.mxu0
    %v369 = vadd.f32 %v95, %v368
    %v370 = vpop.f32.mrf.mxu0
    %371 = vmatprep.mubr.f32.mxu0 0.0
    %372 = vmatmul.mubr.f32.gmra.mxu0 %v168
    %v373 = vpop.f32.mrf.mxu0
    %v374 = vadd.f32 %v95, %v373
    %v375 = vpop.f32.mrf.mxu0
    %376 = vmatprep.mubr.f32.mxu0 0.0
    %377 = vmatmul.mubr.f32.gmra.mxu0 %v171
    %v378 = vpop.f32.mrf.mxu0
    %v379 = vadd.f32 %v95, %v378
    %v380 = vpop.f32.mrf.mxu0
    %381 = vmatprep.mubr.f32.mxu0 0.0
    %382 = vmatmul.mubr.f32.gmra.mxu0 %v174
    %v383 = vpop.f32.mrf.mxu0
    %v384 = vadd.f32 %v95, %v383
    %v385 = vpop.f32.mrf.mxu0
    %386 = vmatprep.mubr.f32.mxu0 0.0
    %387 = vmatmul.mubr.f32.gmra.mxu0 %v177
    %v388 = vpop.f32.mrf.mxu0
    %v389 = vadd.f32 %v95, %v388
    %v390 = vpop.f32.mrf.mxu0
    %391 = vmatprep.mubr.f32.mxu0 0.0
    %392 = vmatmul.mubr.f32.gmra.mxu0 %v180
    %v393 = vpop.f32.mrf.mxu0
    %v394 = vadd.f32 %v95, %v393
    %v395 = vpop.f32.mrf.mxu0
    %396 = vmatprep.mubr.f32.mxu0 0.0
    %397 = vmatmul.mubr.f32.gmra.mxu0 %v183
    %v398 = vpop.f32.mrf.mxu0
    %v399 = vadd.f32 %v95, %v398
    %v400 = vpop.f32.mrf.mxu0
    %401 = vmatprep.mubr.f32.mxu0 0.0
    %402 = vmatmul.mubr.f32.gmra.mxu0 %v186
    %v403 = vpop.f32.mrf.mxu0
    %v404 = vadd.f32 %v95, %v403
    %v405 = vpop.f32.mrf.mxu0
    %406 = vdwg.mxu0
    %v407 = vmax.f32 %v259, 0.0
    %v408 = vmax.f32 %v264, 0.0
    %v409 = vmax.f32 %v269, 0.0
    %v410 = vmax.f32 %v274, 0.0
    %v411 = vmax.f32 %v279, 0.0
    %v412 = vmax.f32 %v284, 0.0
    %v413 = vmax.f32 %v289, 0.0
    %v414 = vmax.f32 %v294, 0.0
    %v415 = vmax.f32 %v299, 0.0
    %v416 = vmax.f32 %v304, 0.0
    %v417 = vmax.f32 %v309, 0.0
    %v418 = vmax.f32 %v314, 0.0
    %v419 = vmax.f32 %v319, 0.0
    %v420 = vmax.f32 %v324, 0.0
    %v421 = vmax.f32 %v329, 0.0
    %v422 = vmax.f32 %v334, 0.0
    %v423 = vmax.f32 %v339, 0.0
    %v424 = vmax.f32 %v344, 0.0
    %v425 = vmax.f32 %v349, 0.0
    %v426 = vmax.f32 %v354, 0.0
    %v427 = vmax.f32 %v359, 0.0
    %v428 = vmax.f32 %v364, 0.0
    %v429 = vmax.f32 %v369, 0.0
    %v430 = vmax.f32 %v374, 0.0
    %v431 = vmax.f32 %v379, 0.0
    %v432 = vmax.f32 %v384, 0.0
    %v433 = vmax.f32 %v389, 0.0
    %v434 = vmax.f32 %v394, 0.0
    %v435 = vmax.f32 %v399, 0.0
    %v436 = vmax.f32 %v404, 0.0
    %v437 = vld [vmem:[%s3] sm:$0xff]
    %v438 = vld [vmem:[%s3 + $0x8] sm:$0xff]
    %v439 = vld [vmem:[%s3 + $0x10] sm:$0xff]
    %v440 = vld [vmem:[%s3 + $0x18] sm:$0xff]
    %v441 = vld [vmem:[%s3 + $0x20] sm:$0xff]
    %v442 = vld [vmem:[%s3 + $0x28] sm:$0xff]
    %v443 = vld [vmem:[%s3 + $0x30] sm:$0xff]
    %v444 = vld [vmem:[%s3 + $0x38] sm:$0xff]
    %v445 = vld [vmem:[%s3 + $0x40] sm:$0xff]
    %v446 = vld [vmem:[%s3 + $0x48] sm:$0xff]
    %v447 = vld [vmem:[%s3 + $0x50] sm:$0xff]
    %v448 = vld [vmem:[%s3 + $0x58] sm:$0xff]
    %v449 = vld [vmem:[%s3 + $0x60] sm:$0xff]
    %v450 = vld [vmem:[%s3 + $0x68] sm:$0xff]
    %v451 = vld [vmem:[%s3 + $0x70] sm:$0xff]
    %v452 = vld [vmem:[%s3 + $0x78] sm:$0xff]
    %vm453 = vcmask 523264
    %v455 = vsel %vm453, %v407, 0
    %v458 = vsel %vm453, %v408, 0
    %v461 = vsel %vm453, %v409, 0
    %v464 = vsel %vm453, %v410, 0
    %v467 = vsel %vm453, %v411, 0
    %v470 = vsel %vm453, %v412, 0
    %v473 = vsel %vm453, %v413, 0
    %v476 = vsel %vm453, %v414, 0
    %v479 = vsel %vm453, %v415, 0
    %v482 = vsel %vm453, %v416, 0
    %v485 = vsel %vm453, %v417, 0
    %v488 = vsel %vm453, %v418, 0
    %v491 = vsel %vm453, %v419, 0
    %v494 = vsel %vm453, %v420, 0
    %v497 = vsel %vm453, %v421, 0
    %v500 = vsel %vm453, %v422, 0
    %v503 = vsel %vm453, %v423, 0
    %v506 = vsel %vm453, %v424, 0
    %v509 = vsel %vm453, %v425, 0
    %v512 = vsel %vm453, %v426, 0
    %v515 = vsel %vm453, %v427, 0
    %v518 = vsel %vm453, %v428, 0
    %v521 = vsel %vm453, %v429, 0
    %v524 = vsel %vm453, %v430, 0
    %v527 = vsel %vm453, %v431, 0
    %v530 = vsel %vm453, %v432, 0
    %v533 = vsel %vm453, %v433, 0
    %v536 = vsel %vm453, %v434, 0
    %v539 = vsel %vm453, %v435, 0
    %v542 = vsel %vm453, %v436, 0
    %544 = vmatprep.subr.mxu0 0.0
    %545 = vmatpush1.msra.mxu0 0.0
    %546 = vmatprep.subr.mxu0 0.0
    %547 = vmatpush1.msra.mxu0 0.0
    %548 = vmatprep.subr.mxu0 0.0
    %549 = vmatpush1.msra.mxu0 0.0
    %550 = vmatprep.subr.mxu0 0.0
    %551 = vmatpush1.msra.mxu0 0.0
    %552 = vmatprep.subr.mxu0 0.0
    %553 = vmatpush1.msra.mxu0 0.0
    %554 = vmatprep.subr.mxu0 0.0
    %555 = vmatpush1.msra.mxu0 0.0
    %556 = vmatprep.subr.mxu0 0.0
    %557 = vmatpush1.msra.mxu0 0.0
    %558 = vmatprep.subr.mxu0 0.0
    %559 = vmatpush1.msra.mxu0 0.0
    %560 = vmatprep.subr.mxu0 %v452
    %561 = vmatpush1.msra.mxu0 %v451
    %562 = vmatprep.subr.mxu0 %v450
    %563 = vmatpush1.msra.mxu0 %v449
    %564 = vmatprep.subr.mxu0 %v448
    %565 = vmatpush1.msra.mxu0 %v447
    %566 = vmatprep.subr.mxu0 %v446
    %567 = vmatpush1.msra.mxu0 %v445
    %568 = vmatprep.subr.mxu0 %v444
    %569 = vmatpush1.msra.mxu0 %v443
    %570 = vmatprep.subr.mxu0 %v442
    %571 = vmatpush1.msra.mxu0 %v441
    %572 = vmatprep.subr.mxu0 %v440
    %573 = vmatpush1.msra.mxu0 %v439
    %574 = vmatprep.subr.mxu0 %v438
    %575 = vmatpush1.msra.mxu0 %v437
    %576 = vmatprep.subr.mxu0 0.0
    %577 = vmatpush2.msra.mxu0 0.0
    %578 = vmatprep.subr.mxu0 0.0
    %579 = vmatpush2.msra.mxu0 0.0
    %580 = vmatprep.subr.mxu0 0.0
    %581 = vmatpush2.msra.mxu0 0.0
    %582 = vmatprep.subr.mxu0 0.0
    %583 = vmatpush2.msra.mxu0 0.0
    %584 = vmatprep.subr.mxu0 0.0
    %585 = vmatpush2.msra.mxu0 0.0
    %586 = vmatprep.subr.mxu0 0.0
    %587 = vmatpush2.msra.mxu0 0.0
    %588 = vmatprep.subr.mxu0 0.0
    %589 = vmatpush2.msra.mxu0 0.0
    %590 = vmatprep.subr.mxu0 0.0
    %591 = vmatpush2.msra.mxu0 0.0
    %592 = vmatprep.subr.mxu0 0.0
    %593 = vmatpush2.msra.mxu0 0.0
    %594 = vmatprep.subr.mxu0 0.0
    %595 = vmatpush2.msra.mxu0 0.0
    %596 = vmatprep.subr.mxu0 0.0
    %597 = vmatpush2.msra.mxu0 0.0
    %598 = vmatprep.subr.mxu0 0.0
    %599 = vmatpush2.msra.mxu0 0.0
    %600 = vmatprep.subr.mxu0 0.0
    %601 = vmatpush2.msra.mxu0 0.0
    %602 = vmatprep.subr.mxu0 0.0
    %603 = vmatpush2.msra.mxu0 0.0
    %604 = vmatprep.subr.mxu0 0.0
    %605 = vmatpush2.msra.mxu0 0.0
    %606 = vmatprep.subr.mxu0 0.0
    %607 = vmatpush2.msra.mxu0 0.0
    %608 = vmatprep.mubr.f32.mxu0 0.0
    %609 = vmatmul.mubr.f32.gmra.mxu0 %v455
    %v610 = vpop.f32.mrf.mxu0
    %v611 = vadd.f32 0.0, %v610
    %v612 = vpop.f32.mrf.mxu0
    %613 = vmatprep.mubr.f32.mxu0 0.0
    %614 = vmatmul.mubr.f32.gmra.mxu0 %v458
    %v615 = vpop.f32.mrf.mxu0
    %v616 = vadd.f32 0.0, %v615
    %v617 = vpop.f32.mrf.mxu0
    %v618 = vadd.f32 0.0, %v617
    %619 = vmatprep.mubr.f32.mxu0 0.0
    %620 = vmatmul.mubr.f32.gmra.mxu0 %v461
    %v621 = vpop.f32.mrf.mxu0
    %v622 = vadd.f32 0.0, %v621
    %v623 = vpop.f32.mrf.mxu0
    %v624 = vadd.f32 0.0, %v623
    %625 = vmatprep.mubr.f32.mxu0 0.0
    %626 = vmatmul.mubr.f32.gmra.mxu0 %v464
    %v627 = vpop.f32.mrf.mxu0
    %v628 = vadd.f32 0.0, %v627
    %v629 = vpop.f32.mrf.mxu0
    %v630 = vadd.f32 0.0, %v629
    %631 = vmatprep.mubr.f32.mxu0 0.0
    %632 = vmatmul.mubr.f32.gmra.mxu0 %v467
    %v633 = vpop.f32.mrf.mxu0
    %v634 = vadd.f32 0.0, %v633
    %v635 = vpop.f32.mrf.mxu0
    %v636 = vadd.f32 0.0, %v635
    %637 = vmatprep.mubr.f32.mxu0 0.0
    %638 = vmatmul.mubr.f32.gmra.mxu0 %v470
    %v639 = vpop.f32.mrf.mxu0
    %v640 = vadd.f32 0.0, %v639
    %v641 = vpop.f32.mrf.mxu0
    %v642 = vadd.f32 0.0, %v641
    %643 = vmatprep.mubr.f32.mxu0 0.0
    %644 = vmatmul.mubr.f32.gmra.mxu0 %v473
    %v645 = vpop.f32.mrf.mxu0
    %v646 = vadd.f32 0.0, %v645
    %v647 = vpop.f32.mrf.mxu0
    %v648 = vadd.f32 0.0, %v647
    %649 = vmatprep.mubr.f32.mxu0 0.0
    %650 = vmatmul.mubr.f32.gmra.mxu0 %v476
    %v651 = vpop.f32.mrf.mxu0
    %v652 = vadd.f32 0.0, %v651
    %v653 = vpop.f32.mrf.mxu0
    %v654 = vadd.f32 0.0, %v653
    %655 = vmatprep.mubr.f32.mxu0 0.0
    %656 = vmatmul.mubr.f32.gmra.mxu0 %v479
    %v657 = vpop.f32.mrf.mxu0
    %v658 = vadd.f32 0.0, %v657
    %v659 = vpop.f32.mrf.mxu0
    %v660 = vadd.f32 0.0, %v659
    %661 = vmatprep.mubr.f32.mxu0 0.0
    %662 = vmatmul.mubr.f32.gmra.mxu0 %v482
    %v663 = vpop.f32.mrf.mxu0
    %v664 = vadd.f32 0.0, %v663
    %v665 = vpop.f32.mrf.mxu0
    %v666 = vadd.f32 0.0, %v665
    %667 = vmatprep.mubr.f32.mxu0 0.0
    %668 = vmatmul.mubr.f32.gmra.mxu0 %v485
    %v669 = vpop.f32.mrf.mxu0
    %v670 = vadd.f32 0.0, %v669
    %v671 = vpop.f32.mrf.mxu0
    %v672 = vadd.f32 0.0, %v671
    %673 = vmatprep.mubr.f32.mxu0 0.0
    %674 = vmatmul.mubr.f32.gmra.mxu0 %v488
    %v675 = vpop.f32.mrf.mxu0
    %v676 = vadd.f32 0.0, %v675
    %v677 = vpop.f32.mrf.mxu0
    %v678 = vadd.f32 0.0, %v677
    %679 = vmatprep.mubr.f32.mxu0 0.0
    %680 = vmatmul.mubr.f32.gmra.mxu0 %v491
    %v681 = vpop.f32.mrf.mxu0
    %v682 = vadd.f32 0.0, %v681
    %v683 = vpop.f32.mrf.mxu0
    %v684 = vadd.f32 0.0, %v683
    %685 = vmatprep.mubr.f32.mxu0 0.0
    %686 = vmatmul.mubr.f32.gmra.mxu0 %v494
    %v687 = vpop.f32.mrf.mxu0
    %v688 = vadd.f32 0.0, %v687
    %v689 = vpop.f32.mrf.mxu0
    %v690 = vadd.f32 0.0, %v689
    %691 = vmatprep.mubr.f32.mxu0 0.0
    %692 = vmatmul.mubr.f32.gmra.mxu0 %v497
    %v693 = vpop.f32.mrf.mxu0
    %v694 = vadd.f32 0.0, %v693
    %v695 = vpop.f32.mrf.mxu0
    %v696 = vadd.f32 0.0, %v695
    %697 = vmatprep.mubr.f32.mxu0 0.0
    %698 = vmatmul.mubr.f32.gmra.mxu0 %v500
    %v699 = vpop.f32.mrf.mxu0
    %v700 = vadd.f32 0.0, %v699
    %v701 = vpop.f32.mrf.mxu0
    %v702 = vadd.f32 0.0, %v701
    %703 = vmatprep.mubr.f32.mxu0 0.0
    %704 = vmatmul.mubr.f32.gmra.mxu0 %v503
    %v705 = vpop.f32.mrf.mxu0
    %v706 = vadd.f32 0.0, %v705
    %v707 = vpop.f32.mrf.mxu0
    %v708 = vadd.f32 0.0, %v707
    %709 = vmatprep.mubr.f32.mxu0 0.0
    %710 = vmatmul.mubr.f32.gmra.mxu0 %v506
    %v711 = vpop.f32.mrf.mxu0
    %v712 = vadd.f32 0.0, %v711
    %v713 = vpop.f32.mrf.mxu0
    %v714 = vadd.f32 0.0, %v713
    %715 = vmatprep.mubr.f32.mxu0 0.0
    %716 = vmatmul.mubr.f32.gmra.mxu0 %v509
    %v717 = vpop.f32.mrf.mxu0
    %v718 = vadd.f32 0.0, %v717
    %v719 = vpop.f32.mrf.mxu0
    %v720 = vadd.f32 0.0, %v719
    %721 = vmatprep.mubr.f32.mxu0 0.0
    %722 = vmatmul.mubr.f32.gmra.mxu0 %v512
    %v723 = vpop.f32.mrf.mxu0
    %v724 = vadd.f32 0.0, %v723
    %v725 = vpop.f32.mrf.mxu0
    %v726 = vadd.f32 0.0, %v725
    %727 = vmatprep.mubr.f32.mxu0 0.0
    %728 = vmatmul.mubr.f32.gmra.mxu0 %v515
    %v729 = vpop.f32.mrf.mxu0
    %v730 = vadd.f32 0.0, %v729
    %v731 = vpop.f32.mrf.mxu0
    %v732 = vadd.f32 0.0, %v731
    %733 = vmatprep.mubr.f32.mxu0 0.0
    %734 = vmatmul.mubr.f32.gmra.mxu0 %v518
    %v735 = vpop.f32.mrf.mxu0
    %v736 = vadd.f32 0.0, %v735
    %v737 = vpop.f32.mrf.mxu0
    %v738 = vadd.f32 0.0, %v737
    %739 = vmatprep.mubr.f32.mxu0 0.0
    %740 = vmatmul.mubr.f32.gmra.mxu0 %v521
    %v741 = vpop.f32.mrf.mxu0
    %v742 = vadd.f32 0.0, %v741
    %v743 = vpop.f32.mrf.mxu0
    %v744 = vadd.f32 0.0, %v743
    %745 = vmatprep.mubr.f32.mxu0 0.0
    %746 = vmatmul.mubr.f32.gmra.mxu0 %v524
    %v747 = vpop.f32.mrf.mxu0
    %v748 = vadd.f32 0.0, %v747
    %v749 = vpop.f32.mrf.mxu0
    %v750 = vadd.f32 0.0, %v749
    %751 = vmatprep.mubr.f32.mxu0 0.0
    %752 = vmatmul.mubr.f32.gmra.mxu0 %v527
    %v753 = vpop.f32.mrf.mxu0
    %v754 = vadd.f32 0.0, %v753
    %v755 = vpop.f32.mrf.mxu0
    %v756 = vadd.f32 0.0, %v755
    %757 = vmatprep.mubr.f32.mxu0 0.0
    %758 = vmatmul.mubr.f32.gmra.mxu0 %v530
    %v759 = vpop.f32.mrf.mxu0
    %v760 = vadd.f32 0.0, %v759
    %v761 = vpop.f32.mrf.mxu0
    %v762 = vadd.f32 0.0, %v761
    %763 = vmatprep.mubr.f32.mxu0 0.0
    %764 = vmatmul.mubr.f32.gmra.mxu0 %v533
    %v765 = vpop.f32.mrf.mxu0
    %v766 = vadd.f32 0.0, %v765
    %v767 = vpop.f32.mrf.mxu0
    %v768 = vadd.f32 0.0, %v767
    %769 = vmatprep.mubr.f32.mxu0 0.0
    %770 = vmatmul.mubr.f32.gmra.mxu0 %v536
    %v771 = vpop.f32.mrf.mxu0
    %v772 = vadd.f32 0.0, %v771
    %v773 = vpop.f32.mrf.mxu0
    %v774 = vadd.f32 0.0, %v773
    %775 = vmatprep.mubr.f32.mxu0 0.0
    %776 = vmatmul.mubr.f32.gmra.mxu0 %v539
    %v777 = vpop.f32.mrf.mxu0
    %v778 = vadd.f32 0.0, %v777
    %v779 = vpop.f32.mrf.mxu0
    %v780 = vadd.f32 0.0, %v779
    %781 = vmatprep.mubr.f32.mxu0 0.0
    %782 = vmatmul.mubr.f32.gmra.mxu0 %v542
    %v783 = vpop.f32.mrf.mxu0
    %v784 = vadd.f32 0.0, %v783
    %v785 = vpop.f32.mrf.mxu0
    %v786 = vadd.f32 0.0, %v785
    %787 = vdwg.mxu0
    %818 = vrot.lane.b32.xlu0 %v611, 64
    %v819 = vpop.permute.xlu0 %818
    %820 = vrot.lane.b32.xlu0 %v616, 64
    %v821 = vpop.permute.xlu0 %820
    %822 = vrot.lane.b32.xlu0 %v622, 64
    %v823 = vpop.permute.xlu0 %822
    %824 = vrot.lane.b32.xlu0 %v628, 64
    %v825 = vpop.permute.xlu0 %824
    %826 = vrot.lane.b32.xlu0 %v634, 64
    %v827 = vpop.permute.xlu0 %826
    %828 = vrot.lane.b32.xlu0 %v640, 64
    %v829 = vpop.permute.xlu0 %828
    %830 = vrot.lane.b32.xlu0 %v646, 64
    %v831 = vpop.permute.xlu0 %830
    %832 = vrot.lane.b32.xlu0 %v652, 64
    %v833 = vpop.permute.xlu0 %832
    %834 = vrot.lane.b32.xlu0 %v658, 64
    %v835 = vpop.permute.xlu0 %834
    %836 = vrot.lane.b32.xlu0 %v664, 64
    %v837 = vpop.permute.xlu0 %836
    %838 = vrot.lane.b32.xlu0 %v670, 64
    %v839 = vpop.permute.xlu0 %838
    %840 = vrot.lane.b32.xlu0 %v676, 64
    %v841 = vpop.permute.xlu0 %840
    %842 = vrot.lane.b32.xlu0 %v682, 64
    %v843 = vpop.permute.xlu0 %842
    %844 = vrot.lane.b32.xlu0 %v688, 64
    %v845 = vpop.permute.xlu0 %844
    %846 = vrot.lane.b32.xlu0 %v694, 64
    %v847 = vpop.permute.xlu0 %846
    %848 = vrot.lane.b32.xlu0 %v700, 64
    %v849 = vpop.permute.xlu0 %848
    %850 = vrot.lane.b32.xlu0 %v706, 64
    %v851 = vpop.permute.xlu0 %850
    %852 = vrot.lane.b32.xlu0 %v712, 64
    %v853 = vpop.permute.xlu0 %852
    %854 = vrot.lane.b32.xlu0 %v718, 64
    %v855 = vpop.permute.xlu0 %854
    %856 = vrot.lane.b32.xlu0 %v724, 64
    %v857 = vpop.permute.xlu0 %856
    %858 = vrot.lane.b32.xlu0 %v730, 64
    %v859 = vpop.permute.xlu0 %858
    %860 = vrot.lane.b32.xlu0 %v736, 64
    %v861 = vpop.permute.xlu0 %860
    %862 = vrot.lane.b32.xlu0 %v742, 64
    %v863 = vpop.permute.xlu0 %862
    %864 = vrot.lane.b32.xlu0 %v748, 64
    %v865 = vpop.permute.xlu0 %864
    %866 = vrot.lane.b32.xlu0 %v754, 64
    %v867 = vpop.permute.xlu0 %866
    %868 = vrot.lane.b32.xlu0 %v760, 64
    %v869 = vpop.permute.xlu0 %868
    %870 = vrot.lane.b32.xlu0 %v766, 64
    %v871 = vpop.permute.xlu0 %870
    %872 = vrot.lane.b32.xlu0 %v772, 64
    %v873 = vpop.permute.xlu0 %872
    %874 = vrot.lane.b32.xlu0 %v778, 64
    %v875 = vpop.permute.xlu0 %874
    %876 = vrot.lane.b32.xlu0 %v784, 64
    %v877 = vpop.permute.xlu0 %876
    %v908 = vadd.f32 %v819, 0.0
    %v909 = vadd.f32 %v611, %v821
    %v910 = vadd.f32 %v616, %v823
    %v911 = vadd.f32 %v622, %v825
    %v912 = vadd.f32 %v628, %v827
    %v913 = vadd.f32 %v634, %v829
    %v914 = vadd.f32 %v640, %v831
    %v915 = vadd.f32 %v646, %v833
    %v916 = vadd.f32 %v652, %v835
    %v917 = vadd.f32 %v658, %v837
    %v918 = vadd.f32 %v664, %v839
    %v919 = vadd.f32 %v670, %v841
    %v920 = vadd.f32 %v676, %v843
    %v921 = vadd.f32 %v682, %v845
    %v922 = vadd.f32 %v688, %v847
    %v923 = vadd.f32 %v694, %v849
    %v924 = vadd.f32 %v700, %v851
    %v925 = vadd.f32 %v706, %v853
    %v926 = vadd.f32 %v712, %v855
    %v927 = vadd.f32 %v718, %v857
    %v928 = vadd.f32 %v724, %v859
    %v929 = vadd.f32 %v730, %v861
    %v930 = vadd.f32 %v736, %v863
    %v931 = vadd.f32 %v742, %v865
    %v932 = vadd.f32 %v748, %v867
    %v933 = vadd.f32 %v754, %v869
    %v934 = vadd.f32 %v760, %v871
    %v935 = vadd.f32 %v766, %v873
    %v936 = vadd.f32 %v772, %v875
    %v937 = vadd.f32 %v778, %v877
    %v938 = vadd.f32 %v908, %v618
    %v939 = vadd.f32 %v909, %v624
    %v940 = vadd.f32 %v910, %v630
    %v941 = vadd.f32 %v911, %v636
    %v942 = vadd.f32 %v912, %v642
    %v943 = vadd.f32 %v913, %v648
    %v944 = vadd.f32 %v914, %v654
    %v945 = vadd.f32 %v915, %v660
    %v946 = vadd.f32 %v916, %v666
    %v947 = vadd.f32 %v917, %v672
    %v948 = vadd.f32 %v918, %v678
    %v949 = vadd.f32 %v919, %v684
    %v950 = vadd.f32 %v920, %v690
    %v951 = vadd.f32 %v921, %v696
    %v952 = vadd.f32 %v922, %v702
    %v953 = vadd.f32 %v923, %v708
    %v954 = vadd.f32 %v924, %v714
    %v955 = vadd.f32 %v925, %v720
    %v956 = vadd.f32 %v926, %v726
    %v957 = vadd.f32 %v927, %v732
    %v958 = vadd.f32 %v928, %v738
    %v959 = vadd.f32 %v929, %v744
    %v960 = vadd.f32 %v930, %v750
    %v961 = vadd.f32 %v931, %v756
    %v962 = vadd.f32 %v932, %v762
    %v963 = vadd.f32 %v933, %v768
    %v964 = vadd.f32 %v934, %v774
    %v965 = vadd.f32 %v935, %v780
    %v966 = vadd.f32 %v936, %v786
    %v967 = vadd.f32 %v937, 0.0
    %v968 = vld [vmem:[%s4] sm:$0x1]
    %v970 = vlaneseq
    %v971 = vshrl.u32 %v970, 7
    %v972 = vsub.s32 0, %v971
    %v973 = vrot.slane %v968, %v972
    %v975 = vadd.f32 %v938, %v973
    %v976 = vadd.f32 %v939, %v973
    %v977 = vadd.f32 %v940, %v973
    %v978 = vadd.f32 %v941, %v973
    %v979 = vadd.f32 %v942, %v973
    %v980 = vadd.f32 %v943, %v973
    %v981 = vadd.f32 %v944, %v973
    %v982 = vadd.f32 %v945, %v973
    %v983 = vadd.f32 %v946, %v973
    %v984 = vadd.f32 %v947, %v973
    %v985 = vadd.f32 %v948, %v973
    %v986 = vadd.f32 %v949, %v973
    %v987 = vadd.f32 %v950, %v973
    %v988 = vadd.f32 %v951, %v973
    %v989 = vadd.f32 %v952, %v973
    %v990 = vadd.f32 %v953, %v973
    %v991 = vadd.f32 %v954, %v973
    %v992 = vadd.f32 %v955, %v973
    %v993 = vadd.f32 %v956, %v973
    %v994 = vadd.f32 %v957, %v973
    %v995 = vadd.f32 %v958, %v973
    %v996 = vadd.f32 %v959, %v973
    %v997 = vadd.f32 %v960, %v973
    %v998 = vadd.f32 %v961, %v973
    %v999 = vadd.f32 %v962, %v973
    %v1000 = vadd.f32 %v963, %v973
    %v1001 = vadd.f32 %v964, %v973
    %v1002 = vadd.f32 %v965, %v973
    %v1003 = vadd.f32 %v966, %v973
    %v1004 = vadd.f32 %v967, %v973
    %v1005 = vmax.f32 %v975, 0.0
    %v1006 = vmax.f32 %v976, 0.0
    %v1007 = vmax.f32 %v977, 0.0
    %v1008 = vmax.f32 %v978, 0.0
    %v1009 = vmax.f32 %v979, 0.0
    %v1010 = vmax.f32 %v980, 0.0
    %v1011 = vmax.f32 %v981, 0.0
    %v1012 = vmax.f32 %v982, 0.0
    %v1013 = vmax.f32 %v983, 0.0
    %v1014 = vmax.f32 %v984, 0.0
    %v1015 = vmax.f32 %v985, 0.0
    %v1016 = vmax.f32 %v986, 0.0
    %v1017 = vmax.f32 %v987, 0.0
    %v1018 = vmax.f32 %v988, 0.0
    %v1019 = vmax.f32 %v989, 0.0
    %v1020 = vmax.f32 %v990, 0.0
    %v1021 = vmax.f32 %v991, 0.0
    %v1022 = vmax.f32 %v992, 0.0
    %v1023 = vmax.f32 %v993, 0.0
    %v1024 = vmax.f32 %v994, 0.0
    %v1025 = vmax.f32 %v995, 0.0
    %v1026 = vmax.f32 %v996, 0.0
    %v1027 = vmax.f32 %v997, 0.0
    %v1028 = vmax.f32 %v998, 0.0
    %v1029 = vmax.f32 %v999, 0.0
    %v1030 = vmax.f32 %v1000, 0.0
    %v1031 = vmax.f32 %v1001, 0.0
    %v1032 = vmax.f32 %v1002, 0.0
    %v1033 = vmax.f32 %v1003, 0.0
    %v1034 = vmax.f32 %v1004, 0.0
    %v1035 = vld [vmem:[%s5] sm:$0xff]
    %v1036 = vld [vmem:[%s5 + $0x8] sm:$0xff]
    %v1037 = vld [vmem:[%s5 + $0x10] sm:$0xff]
    %v1038 = vld [vmem:[%s5 + $0x18] sm:$0xff]
    %v1039 = vld [vmem:[%s5 + $0x20] sm:$0xff]
    %v1040 = vld [vmem:[%s5 + $0x28] sm:$0xff]
    %v1041 = vld [vmem:[%s5 + $0x30] sm:$0xff]
    %v1042 = vld [vmem:[%s5 + $0x38] sm:$0xff]
    %v1043 = vld [vmem:[%s5 + $0x40] sm:$0xff]
    %v1044 = vld [vmem:[%s5 + $0x48] sm:$0xff]
    %v1045 = vld [vmem:[%s5 + $0x50] sm:$0xff]
    %v1046 = vld [vmem:[%s5 + $0x58] sm:$0xff]
    %v1047 = vld [vmem:[%s5 + $0x60] sm:$0xff]
    %v1048 = vld [vmem:[%s5 + $0x68] sm:$0xff]
    %v1049 = vld [vmem:[%s5 + $0x70] sm:$0xff]
    %v1050 = vld [vmem:[%s5 + $0x78] sm:$0xff]
    %v1052 = vsel %vm453, %v1005, 0
    %v1055 = vsel %vm453, %v1006, 0
    %v1058 = vsel %vm453, %v1007, 0
    %v1061 = vsel %vm453, %v1008, 0
    %v1064 = vsel %vm453, %v1009, 0
    %v1067 = vsel %vm453, %v1010, 0
    %v1070 = vsel %vm453, %v1011, 0
    %v1073 = vsel %vm453, %v1012, 0
    %v1076 = vsel %vm453, %v1013, 0
    %v1079 = vsel %vm453, %v1014, 0
    %v1082 = vsel %vm453, %v1015, 0
    %v1085 = vsel %vm453, %v1016, 0
    %v1088 = vsel %vm453, %v1017, 0
    %v1091 = vsel %vm453, %v1018, 0
    %v1094 = vsel %vm453, %v1019, 0
    %v1097 = vsel %vm453, %v1020, 0
    %v1100 = vsel %vm453, %v1021, 0
    %v1103 = vsel %vm453, %v1022, 0
    %v1106 = vsel %vm453, %v1023, 0
    %v1109 = vsel %vm453, %v1024, 0
    %v1112 = vsel %vm453, %v1025, 0
    %v1115 = vsel %vm453, %v1026, 0
    %v1118 = vsel %vm453, %v1027, 0
    %v1121 = vsel %vm453, %v1028, 0
    %v1124 = vsel %vm453, %v1029, 0
    %v1127 = vsel %vm453, %v1030, 0
    %v1130 = vsel %vm453, %v1031, 0
    %v1133 = vsel %vm453, %v1032, 0
    %v1136 = vsel %vm453, %v1033, 0
    %v1139 = vsel %vm453, %v1034, 0
    %1141 = vmatprep.subr.mxu0 0.0
    %1142 = vmatpush1.msra.mxu0 0.0
    %1143 = vmatprep.subr.mxu0 0.0
    %1144 = vmatpush1.msra.mxu0 0.0
    %1145 = vmatprep.subr.mxu0 0.0
    %1146 = vmatpush1.msra.mxu0 0.0
    %1147 = vmatprep.subr.mxu0 0.0
    %1148 = vmatpush1.msra.mxu0 0.0
    %1149 = vmatprep.subr.mxu0 0.0
    %1150 = vmatpush1.msra.mxu0 0.0
    %1151 = vmatprep.subr.mxu0 0.0
    %1152 = vmatpush1.msra.mxu0 0.0
    %1153 = vmatprep.subr.mxu0 0.0
    %1154 = vmatpush1.msra.mxu0 0.0
    %1155 = vmatprep.subr.mxu0 0.0
    %1156 = vmatpush1.msra.mxu0 0.0
    %1157 = vmatprep.subr.mxu0 %v1050
    %1158 = vmatpush1.msra.mxu0 %v1049
    %1159 = vmatprep.subr.mxu0 %v1048
    %1160 = vmatpush1.msra.mxu0 %v1047
    %1161 = vmatprep.subr.mxu0 %v1046
    %1162 = vmatpush1.msra.mxu0 %v1045
    %1163 = vmatprep.subr.mxu0 %v1044
    %1164 = vmatpush1.msra.mxu0 %v1043
    %1165 = vmatprep.subr.mxu0 %v1042
    %1166 = vmatpush1.msra.mxu0 %v1041
    %1167 = vmatprep.subr.mxu0 %v1040
    %1168 = vmatpush1.msra.mxu0 %v1039
    %1169 = vmatprep.subr.mxu0 %v1038
    %1170 = vmatpush1.msra.mxu0 %v1037
    %1171 = vmatprep.subr.mxu0 %v1036
    %1172 = vmatpush1.msra.mxu0 %v1035
    %1173 = vmatprep.subr.mxu0 0.0
    %1174 = vmatpush2.msra.mxu0 0.0
    %1175 = vmatprep.subr.mxu0 0.0
    %1176 = vmatpush2.msra.mxu0 0.0
    %1177 = vmatprep.subr.mxu0 0.0
    %1178 = vmatpush2.msra.mxu0 0.0
    %1179 = vmatprep.subr.mxu0 0.0
    %1180 = vmatpush2.msra.mxu0 0.0
    %1181 = vmatprep.subr.mxu0 0.0
    %1182 = vmatpush2.msra.mxu0 0.0
    %1183 = vmatprep.subr.mxu0 0.0
    %1184 = vmatpush2.msra.mxu0 0.0
    %1185 = vmatprep.subr.mxu0 0.0
    %1186 = vmatpush2.msra.mxu0 0.0
    %1187 = vmatprep.subr.mxu0 0.0
    %1188 = vmatpush2.msra.mxu0 0.0
    %1189 = vmatprep.subr.mxu0 0.0
    %1190 = vmatpush2.msra.mxu0 0.0
    %1191 = vmatprep.subr.mxu0 0.0
    %1192 = vmatpush2.msra.mxu0 0.0
    %1193 = vmatprep.subr.mxu0 0.0
    %1194 = vmatpush2.msra.mxu0 0.0
    %1195 = vmatprep.subr.mxu0 0.0
    %1196 = vmatpush2.msra.mxu0 0.0
    %1197 = vmatprep.subr.mxu0 0.0
    %1198 = vmatpush2.msra.mxu0 0.0
    %1199 = vmatprep.subr.mxu0 0.0
    %1200 = vmatpush2.msra.mxu0 0.0
    %1201 = vmatprep.subr.mxu0 0.0
    %1202 = vmatpush2.msra.mxu0 0.0
    %1203 = vmatprep.subr.mxu0 0.0
    %1204 = vmatpush2.msra.mxu0 0.0
    %1205 = vmatprep.mubr.f32.mxu0 0.0
    %1206 = vmatmul.mubr.f32.gmra.mxu0 %v1052
    %v1207 = vpop.f32.mrf.mxu0
    %v1208 = vadd.f32 0.0, %v1207
    %v1209 = vpop.f32.mrf.mxu0
    %1210 = vmatprep.mubr.f32.mxu0 0.0
    %1211 = vmatmul.mubr.f32.gmra.mxu0 %v1055
    %v1212 = vpop.f32.mrf.mxu0
    %v1213 = vadd.f32 0.0, %v1212
    %v1214 = vpop.f32.mrf.mxu0
    %v1215 = vadd.f32 0.0, %v1214
    %1216 = vmatprep.mubr.f32.mxu0 0.0
    %1217 = vmatmul.mubr.f32.gmra.mxu0 %v1058
    %v1218 = vpop.f32.mrf.mxu0
    %v1219 = vadd.f32 0.0, %v1218
    %v1220 = vpop.f32.mrf.mxu0
    %v1221 = vadd.f32 0.0, %v1220
    %1222 = vmatprep.mubr.f32.mxu0 0.0
    %1223 = vmatmul.mubr.f32.gmra.mxu0 %v1061
    %v1224 = vpop.f32.mrf.mxu0
    %v1225 = vadd.f32 0.0, %v1224
    %v1226 = vpop.f32.mrf.mxu0
    %v1227 = vadd.f32 0.0, %v1226
    %1228 = vmatprep.mubr.f32.mxu0 0.0
    %1229 = vmatmul.mubr.f32.gmra.mxu0 %v1064
    %v1230 = vpop.f32.mrf.mxu0
    %v1231 = vadd.f32 0.0, %v1230
    %v1232 = vpop.f32.mrf.mxu0
    %v1233 = vadd.f32 0.0, %v1232
    %1234 = vmatprep.mubr.f32.mxu0 0.0
    %1235 = vmatmul.mubr.f32.gmra.mxu0 %v1067
    %v1236 = vpop.f32.mrf.mxu0
    %v1237 = vadd.f32 0.0, %v1236
    %v1238 = vpop.f32.mrf.mxu0
    %v1239 = vadd.f32 0.0, %v1238
    %1240 = vmatprep.mubr.f32.mxu0 0.0
    %1241 = vmatmul.mubr.f32.gmra.mxu0 %v1070
    %v1242 = vpop.f32.mrf.mxu0
    %v1243 = vadd.f32 0.0, %v1242
    %v1244 = vpop.f32.mrf.mxu0
    %v1245 = vadd.f32 0.0, %v1244
    %1246 = vmatprep.mubr.f32.mxu0 0.0
    %1247 = vmatmul.mubr.f32.gmra.mxu0 %v1073
    %v1248 = vpop.f32.mrf.mxu0
    %v1249 = vadd.f32 0.0, %v1248
    %v1250 = vpop.f32.mrf.mxu0
    %v1251 = vadd.f32 0.0, %v1250
    %1252 = vmatprep.mubr.f32.mxu0 0.0
    %1253 = vmatmul.mubr.f32.gmra.mxu0 %v1076
    %v1254 = vpop.f32.mrf.mxu0
    %v1255 = vadd.f32 0.0, %v1254
    %v1256 = vpop.f32.mrf.mxu0
    %v1257 = vadd.f32 0.0, %v1256
    %1258 = vmatprep.mubr.f32.mxu0 0.0
    %1259 = vmatmul.mubr.f32.gmra.mxu0 %v1079
    %v1260 = vpop.f32.mrf.mxu0
    %v1261 = vadd.f32 0.0, %v1260
    %v1262 = vpop.f32.mrf.mxu0
    %v1263 = vadd.f32 0.0, %v1262
    %1264 = vmatprep.mubr.f32.mxu0 0.0
    %1265 = vmatmul.mubr.f32.gmra.mxu0 %v1082
    %v1266 = vpop.f32.mrf.mxu0
    %v1267 = vadd.f32 0.0, %v1266
    %v1268 = vpop.f32.mrf.mxu0
    %v1269 = vadd.f32 0.0, %v1268
    %1270 = vmatprep.mubr.f32.mxu0 0.0
    %1271 = vmatmul.mubr.f32.gmra.mxu0 %v1085
    %v1272 = vpop.f32.mrf.mxu0
    %v1273 = vadd.f32 0.0, %v1272
    %v1274 = vpop.f32.mrf.mxu0
    %v1275 = vadd.f32 0.0, %v1274
    %1276 = vmatprep.mubr.f32.mxu0 0.0
    %1277 = vmatmul.mubr.f32.gmra.mxu0 %v1088
    %v1278 = vpop.f32.mrf.mxu0
    %v1279 = vadd.f32 0.0, %v1278
    %v1280 = vpop.f32.mrf.mxu0
    %v1281 = vadd.f32 0.0, %v1280
    %1282 = vmatprep.mubr.f32.mxu0 0.0
    %1283 = vmatmul.mubr.f32.gmra.mxu0 %v1091
    %v1284 = vpop.f32.mrf.mxu0
    %v1285 = vadd.f32 0.0, %v1284
    %v1286 = vpop.f32.mrf.mxu0
    %v1287 = vadd.f32 0.0, %v1286
    %1288 = vmatprep.mubr.f32.mxu0 0.0
    %1289 = vmatmul.mubr.f32.gmra.mxu0 %v1094
    %v1290 = vpop.f32.mrf.mxu0
    %v1291 = vadd.f32 0.0, %v1290
    %v1292 = vpop.f32.mrf.mxu0
    %v1293 = vadd.f32 0.0, %v1292
    %1294 = vmatprep.mubr.f32.mxu0 0.0
    %1295 = vmatmul.mubr.f32.gmra.mxu0 %v1097
    %v1296 = vpop.f32.mrf.mxu0
    %v1297 = vadd.f32 0.0, %v1296
    %v1298 = vpop.f32.mrf.mxu0
    %v1299 = vadd.f32 0.0, %v1298
    %1300 = vmatprep.mubr.f32.mxu0 0.0
    %1301 = vmatmul.mubr.f32.gmra.mxu0 %v1100
    %v1302 = vpop.f32.mrf.mxu0
    %v1303 = vadd.f32 0.0, %v1302
    %v1304 = vpop.f32.mrf.mxu0
    %v1305 = vadd.f32 0.0, %v1304
    %1306 = vmatprep.mubr.f32.mxu0 0.0
    %1307 = vmatmul.mubr.f32.gmra.mxu0 %v1103
    %v1308 = vpop.f32.mrf.mxu0
    %v1309 = vadd.f32 0.0, %v1308
    %v1310 = vpop.f32.mrf.mxu0
    %v1311 = vadd.f32 0.0, %v1310
    %1312 = vmatprep.mubr.f32.mxu0 0.0
    %1313 = vmatmul.mubr.f32.gmra.mxu0 %v1106
    %v1314 = vpop.f32.mrf.mxu0
    %v1315 = vadd.f32 0.0, %v1314
    %v1316 = vpop.f32.mrf.mxu0
    %v1317 = vadd.f32 0.0, %v1316
    %1318 = vmatprep.mubr.f32.mxu0 0.0
    %1319 = vmatmul.mubr.f32.gmra.mxu0 %v1109
    %v1320 = vpop.f32.mrf.mxu0
    %v1321 = vadd.f32 0.0, %v1320
    %v1322 = vpop.f32.mrf.mxu0
    %v1323 = vadd.f32 0.0, %v1322
    %1324 = vmatprep.mubr.f32.mxu0 0.0
    %1325 = vmatmul.mubr.f32.gmra.mxu0 %v1112
    %v1326 = vpop.f32.mrf.mxu0
    %v1327 = vadd.f32 0.0, %v1326
    %v1328 = vpop.f32.mrf.mxu0
    %v1329 = vadd.f32 0.0, %v1328
    %1330 = vmatprep.mubr.f32.mxu0 0.0
    %1331 = vmatmul.mubr.f32.gmra.mxu0 %v1115
    %v1332 = vpop.f32.mrf.mxu0
    %v1333 = vadd.f32 0.0, %v1332
    %v1334 = vpop.f32.mrf.mxu0
    %v1335 = vadd.f32 0.0, %v1334
    %1336 = vmatprep.mubr.f32.mxu0 0.0
    %1337 = vmatmul.mubr.f32.gmra.mxu0 %v1118
    %v1338 = vpop.f32.mrf.mxu0
    %v1339 = vadd.f32 0.0, %v1338
    %v1340 = vpop.f32.mrf.mxu0
    %v1341 = vadd.f32 0.0, %v1340
    %1342 = vmatprep.mubr.f32.mxu0 0.0
    %1343 = vmatmul.mubr.f32.gmra.mxu0 %v1121
    %v1344 = vpop.f32.mrf.mxu0
    %v1345 = vadd.f32 0.0, %v1344
    %v1346 = vpop.f32.mrf.mxu0
    %v1347 = vadd.f32 0.0, %v1346
    %1348 = vmatprep.mubr.f32.mxu0 0.0
    %1349 = vmatmul.mubr.f32.gmra.mxu0 %v1124
    %v1350 = vpop.f32.mrf.mxu0
    %v1351 = vadd.f32 0.0, %v1350
    %v1352 = vpop.f32.mrf.mxu0
    %v1353 = vadd.f32 0.0, %v1352
    %1354 = vmatprep.mubr.f32.mxu0 0.0
    %1355 = vmatmul.mubr.f32.gmra.mxu0 %v1127
    %v1356 = vpop.f32.mrf.mxu0
    %v1357 = vadd.f32 0.0, %v1356
    %v1358 = vpop.f32.mrf.mxu0
    %v1359 = vadd.f32 0.0, %v1358
    %1360 = vmatprep.mubr.f32.mxu0 0.0
    %1361 = vmatmul.mubr.f32.gmra.mxu0 %v1130
    %v1362 = vpop.f32.mrf.mxu0
    %v1363 = vadd.f32 0.0, %v1362
    %v1364 = vpop.f32.mrf.mxu0
    %v1365 = vadd.f32 0.0, %v1364
    %1366 = vmatprep.mubr.f32.mxu0 0.0
    %1367 = vmatmul.mubr.f32.gmra.mxu0 %v1133
    %v1368 = vpop.f32.mrf.mxu0
    %v1369 = vadd.f32 0.0, %v1368
    %v1370 = vpop.f32.mrf.mxu0
    %v1371 = vadd.f32 0.0, %v1370
    %1372 = vmatprep.mubr.f32.mxu0 0.0
    %1373 = vmatmul.mubr.f32.gmra.mxu0 %v1136
    %v1374 = vpop.f32.mrf.mxu0
    %v1375 = vadd.f32 0.0, %v1374
    %v1376 = vpop.f32.mrf.mxu0
    %v1377 = vadd.f32 0.0, %v1376
    %1378 = vmatprep.mubr.f32.mxu0 0.0
    %1379 = vmatmul.mubr.f32.gmra.mxu0 %v1139
    %v1380 = vpop.f32.mrf.mxu0
    %v1381 = vadd.f32 0.0, %v1380
    %v1382 = vpop.f32.mrf.mxu0
    %v1383 = vadd.f32 0.0, %v1382
    %1384 = vdwg.mxu0
    %1415 = vrot.lane.b32.xlu0 %v1208, 64
    %v1416 = vpop.permute.xlu0 %1415
    %1417 = vrot.lane.b32.xlu0 %v1213, 64
    %v1418 = vpop.permute.xlu0 %1417
    %1419 = vrot.lane.b32.xlu0 %v1219, 64
    %v1420 = vpop.permute.xlu0 %1419
    %1421 = vrot.lane.b32.xlu0 %v1225, 64
    %v1422 = vpop.permute.xlu0 %1421
    %1423 = vrot.lane.b32.xlu0 %v1231, 64
    %v1424 = vpop.permute.xlu0 %1423
    %1425 = vrot.lane.b32.xlu0 %v1237, 64
    %v1426 = vpop.permute.xlu0 %1425
    %1427 = vrot.lane.b32.xlu0 %v1243, 64
    %v1428 = vpop.permute.xlu0 %1427
    %1429 = vrot.lane.b32.xlu0 %v1249, 64
    %v1430 = vpop.permute.xlu0 %1429
    %1431 = vrot.lane.b32.xlu0 %v1255, 64
    %v1432 = vpop.permute.xlu0 %1431
    %1433 = vrot.lane.b32.xlu0 %v1261, 64
    %v1434 = vpop.permute.xlu0 %1433
    %1435 = vrot.lane.b32.xlu0 %v1267, 64
    %v1436 = vpop.permute.xlu0 %1435
    %1437 = vrot.lane.b32.xlu0 %v1273, 64
    %v1438 = vpop.permute.xlu0 %1437
    %1439 = vrot.lane.b32.xlu0 %v1279, 64
    %v1440 = vpop.permute.xlu0 %1439
    %1441 = vrot.lane.b32.xlu0 %v1285, 64
    %v1442 = vpop.permute.xlu0 %1441
    %1443 = vrot.lane.b32.xlu0 %v1291, 64
    %v1444 = vpop.permute.xlu0 %1443
    %1445 = vrot.lane.b32.xlu0 %v1297, 64
    %v1446 = vpop.permute.xlu0 %1445
    %1447 = vrot.lane.b32.xlu0 %v1303, 64
    %v1448 = vpop.permute.xlu0 %1447
    %1449 = vrot.lane.b32.xlu0 %v1309, 64
    %v1450 = vpop.permute.xlu0 %1449
    %1451 = vrot.lane.b32.xlu0 %v1315, 64
    %v1452 = vpop.permute.xlu0 %1451
    %1453 = vrot.lane.b32.xlu0 %v1321, 64
    %v1454 = vpop.permute.xlu0 %1453
    %1455 = vrot.lane.b32.xlu0 %v1327, 64
    %v1456 = vpop.permute.xlu0 %1455
    %1457 = vrot.lane.b32.xlu0 %v1333, 64
    %v1458 = vpop.permute.xlu0 %1457
    %1459 = vrot.lane.b32.xlu0 %v1339, 64
    %v1460 = vpop.permute.xlu0 %1459
    %1461 = vrot.lane.b32.xlu0 %v1345, 64
    %v1462 = vpop.permute.xlu0 %1461
    %1463 = vrot.lane.b32.xlu0 %v1351, 64
    %v1464 = vpop.permute.xlu0 %1463
    %1465 = vrot.lane.b32.xlu0 %v1357, 64
    %v1466 = vpop.permute.xlu0 %1465
    %1467 = vrot.lane.b32.xlu0 %v1363, 64
    %v1468 = vpop.permute.xlu0 %1467
    %1469 = vrot.lane.b32.xlu0 %v1369, 64
    %v1470 = vpop.permute.xlu0 %1469
    %1471 = vrot.lane.b32.xlu0 %v1375, 64
    %v1472 = vpop.permute.xlu0 %1471
    %1473 = vrot.lane.b32.xlu0 %v1381, 64
    %v1474 = vpop.permute.xlu0 %1473
    %v1505 = vadd.f32 %v1416, 0.0
    %v1506 = vadd.f32 %v1208, %v1418
    %v1507 = vadd.f32 %v1213, %v1420
    %v1508 = vadd.f32 %v1219, %v1422
    %v1509 = vadd.f32 %v1225, %v1424
    %v1510 = vadd.f32 %v1231, %v1426
    %v1511 = vadd.f32 %v1237, %v1428
    %v1512 = vadd.f32 %v1243, %v1430
    %v1513 = vadd.f32 %v1249, %v1432
    %v1514 = vadd.f32 %v1255, %v1434
    %v1515 = vadd.f32 %v1261, %v1436
    %v1516 = vadd.f32 %v1267, %v1438
    %v1517 = vadd.f32 %v1273, %v1440
    %v1518 = vadd.f32 %v1279, %v1442
    %v1519 = vadd.f32 %v1285, %v1444
    %v1520 = vadd.f32 %v1291, %v1446
    %v1521 = vadd.f32 %v1297, %v1448
    %v1522 = vadd.f32 %v1303, %v1450
    %v1523 = vadd.f32 %v1309, %v1452
    %v1524 = vadd.f32 %v1315, %v1454
    %v1525 = vadd.f32 %v1321, %v1456
    %v1526 = vadd.f32 %v1327, %v1458
    %v1527 = vadd.f32 %v1333, %v1460
    %v1528 = vadd.f32 %v1339, %v1462
    %v1529 = vadd.f32 %v1345, %v1464
    %v1530 = vadd.f32 %v1351, %v1466
    %v1531 = vadd.f32 %v1357, %v1468
    %v1532 = vadd.f32 %v1363, %v1470
    %v1533 = vadd.f32 %v1369, %v1472
    %v1534 = vadd.f32 %v1375, %v1474
    %v1535 = vadd.f32 %v1505, %v1215
    %v1536 = vadd.f32 %v1506, %v1221
    %v1537 = vadd.f32 %v1507, %v1227
    %v1538 = vadd.f32 %v1508, %v1233
    %v1539 = vadd.f32 %v1509, %v1239
    %v1540 = vadd.f32 %v1510, %v1245
    %v1541 = vadd.f32 %v1511, %v1251
    %v1542 = vadd.f32 %v1512, %v1257
    %v1543 = vadd.f32 %v1513, %v1263
    %v1544 = vadd.f32 %v1514, %v1269
    %v1545 = vadd.f32 %v1515, %v1275
    %v1546 = vadd.f32 %v1516, %v1281
    %v1547 = vadd.f32 %v1517, %v1287
    %v1548 = vadd.f32 %v1518, %v1293
    %v1549 = vadd.f32 %v1519, %v1299
    %v1550 = vadd.f32 %v1520, %v1305
    %v1551 = vadd.f32 %v1521, %v1311
    %v1552 = vadd.f32 %v1522, %v1317
    %v1553 = vadd.f32 %v1523, %v1323
    %v1554 = vadd.f32 %v1524, %v1329
    %v1555 = vadd.f32 %v1525, %v1335
    %v1556 = vadd.f32 %v1526, %v1341
    %v1557 = vadd.f32 %v1527, %v1347
    %v1558 = vadd.f32 %v1528, %v1353
    %v1559 = vadd.f32 %v1529, %v1359
    %v1560 = vadd.f32 %v1530, %v1365
    %v1561 = vadd.f32 %v1531, %v1371
    %v1562 = vadd.f32 %v1532, %v1377
    %v1563 = vadd.f32 %v1533, %v1383
    %v1564 = vadd.f32 %v1534, 0.0
    %v1565 = vld [vmem:[%s6] sm:$0x1]
    %v1567 = vlaneseq
    %v1568 = vshrl.u32 %v1567, 7
    %v1569 = vsub.s32 0, %v1568
    %v1570 = vrot.slane %v1565, %v1569
    %v1572 = vadd.f32 %v1535, %v1570
    %v1573 = vadd.f32 %v1536, %v1570
    %v1574 = vadd.f32 %v1537, %v1570
    %v1575 = vadd.f32 %v1538, %v1570
    %v1576 = vadd.f32 %v1539, %v1570
    %v1577 = vadd.f32 %v1540, %v1570
    %v1578 = vadd.f32 %v1541, %v1570
    %v1579 = vadd.f32 %v1542, %v1570
    %v1580 = vadd.f32 %v1543, %v1570
    %v1581 = vadd.f32 %v1544, %v1570
    %v1582 = vadd.f32 %v1545, %v1570
    %v1583 = vadd.f32 %v1546, %v1570
    %v1584 = vadd.f32 %v1547, %v1570
    %v1585 = vadd.f32 %v1548, %v1570
    %v1586 = vadd.f32 %v1549, %v1570
    %v1587 = vadd.f32 %v1550, %v1570
    %v1588 = vadd.f32 %v1551, %v1570
    %v1589 = vadd.f32 %v1552, %v1570
    %v1590 = vadd.f32 %v1553, %v1570
    %v1591 = vadd.f32 %v1554, %v1570
    %v1592 = vadd.f32 %v1555, %v1570
    %v1593 = vadd.f32 %v1556, %v1570
    %v1594 = vadd.f32 %v1557, %v1570
    %v1595 = vadd.f32 %v1558, %v1570
    %v1596 = vadd.f32 %v1559, %v1570
    %v1597 = vadd.f32 %v1560, %v1570
    %v1598 = vadd.f32 %v1561, %v1570
    %v1599 = vadd.f32 %v1562, %v1570
    %v1600 = vadd.f32 %v1563, %v1570
    %v1601 = vadd.f32 %v1564, %v1570
    %v1602 = vmax.f32 %v1572, 0.0
    %v1603 = vmax.f32 %v1573, 0.0
    %v1604 = vmax.f32 %v1574, 0.0
    %v1605 = vmax.f32 %v1575, 0.0
    %v1606 = vmax.f32 %v1576, 0.0
    %v1607 = vmax.f32 %v1577, 0.0
    %v1608 = vmax.f32 %v1578, 0.0
    %v1609 = vmax.f32 %v1579, 0.0
    %v1610 = vmax.f32 %v1580, 0.0
    %v1611 = vmax.f32 %v1581, 0.0
    %v1612 = vmax.f32 %v1582, 0.0
    %v1613 = vmax.f32 %v1583, 0.0
    %v1614 = vmax.f32 %v1584, 0.0
    %v1615 = vmax.f32 %v1585, 0.0
    %v1616 = vmax.f32 %v1586, 0.0
    %v1617 = vmax.f32 %v1587, 0.0
    %v1618 = vmax.f32 %v1588, 0.0
    %v1619 = vmax.f32 %v1589, 0.0
    %v1620 = vmax.f32 %v1590, 0.0
    %v1621 = vmax.f32 %v1591, 0.0
    %v1622 = vmax.f32 %v1592, 0.0
    %v1623 = vmax.f32 %v1593, 0.0
    %v1624 = vmax.f32 %v1594, 0.0
    %v1625 = vmax.f32 %v1595, 0.0
    %v1626 = vmax.f32 %v1596, 0.0
    %v1627 = vmax.f32 %v1597, 0.0
    %v1628 = vmax.f32 %v1598, 0.0
    %v1629 = vmax.f32 %v1599, 0.0
    %v1630 = vmax.f32 %v1600, 0.0
    %v1631 = vmax.f32 %v1601, 0.0
    %v1632 = vld [vmem:[%s8] sm:$0x1]
    %v1634 = vlaneseq
    %v1635 = vshrl.u32 %v1634, 7
    %v1636 = vsub.s32 0, %v1635
    %v1637 = vrot.slane %v1632, %v1636
    %v1639 = vld [vmem:[#allocation5] sm:$0xff]
    %v1640 = vld [vmem:[#allocation5 + $0x8] sm:$0xff]
    %v1641 = vld [vmem:[#allocation5 + $0x10] sm:$0xff]
    %v1642 = vld [vmem:[#allocation5 + $0x18] sm:$0xff]
    %v1643 = vld [vmem:[#allocation5 + $0x20] sm:$0xff]
    %v1644 = vld [vmem:[#allocation5 + $0x28] sm:$0xff]
    %v1645 = vld [vmem:[#allocation5 + $0x30] sm:$0xff]
    %v1646 = vld [vmem:[#allocation5 + $0x38] sm:$0xff]
    %v1648 = vsel %vm453, %v1602, 0
    %1650 = vmatprep.subr.mxu0 0.0
    %1651 = vmatpush1.msra.mxu0 0.0
    %1652 = vmatprep.subr.mxu0 0.0
    %1653 = vmatpush1.msra.mxu0 0.0
    %1654 = vmatprep.subr.mxu0 0.0
    %1655 = vmatpush1.msra.mxu0 0.0
    %1656 = vmatprep.subr.mxu0 0.0
    %1657 = vmatpush1.msra.mxu0 0.0
    %1658 = vmatprep.subr.mxu0 0.0
    %1659 = vmatpush1.msra.mxu0 0.0
    %1660 = vmatprep.subr.mxu0 0.0
    %1661 = vmatpush1.msra.mxu0 0.0
    %1662 = vmatprep.subr.mxu0 0.0
    %1663 = vmatpush1.msra.mxu0 0.0
    %1664 = vmatprep.subr.mxu0 0.0
    %1665 = vmatpush1.msra.mxu0 0.0
    %1666 = vmatprep.subr.mxu0 0.0
    %1667 = vmatpush1.msra.mxu0 %v1646
    %1668 = vmatprep.subr.mxu0 0.0
    %1669 = vmatpush1.msra.mxu0 %v1645
    %1670 = vmatprep.subr.mxu0 0.0
    %1671 = vmatpush1.msra.mxu0 %v1644
    %1672 = vmatprep.subr.mxu0 0.0
    %1673 = vmatpush1.msra.mxu0 %v1643
    %1674 = vmatprep.subr.mxu0 0.0
    %1675 = vmatpush1.msra.mxu0 %v1642
    %1676 = vmatprep.subr.mxu0 0.0
    %1677 = vmatpush1.msra.mxu0 %v1641
    %1678 = vmatprep.subr.mxu0 0.0
    %1679 = vmatpush1.msra.mxu0 %v1640
    %1680 = vmatprep.subr.mxu0 0.0
    %1681 = vmatpush1.msra.mxu0 %v1639
    %1682 = vmatprep.subr.mxu0 0.0
    %1683 = vmatpush2.msra.mxu0 0.0
    %1684 = vmatprep.subr.mxu0 0.0
    %1685 = vmatpush2.msra.mxu0 0.0
    %1686 = vmatprep.subr.mxu0 0.0
    %1687 = vmatpush2.msra.mxu0 0.0
    %1688 = vmatprep.subr.mxu0 0.0
    %1689 = vmatpush2.msra.mxu0 0.0
    %1690 = vmatprep.subr.mxu0 0.0
    %1691 = vmatpush2.msra.mxu0 0.0
    %1692 = vmatprep.subr.mxu0 0.0
    %1693 = vmatpush2.msra.mxu0 0.0
    %1694 = vmatprep.subr.mxu0 0.0
    %1695 = vmatpush2.msra.mxu0 0.0
    %1696 = vmatprep.subr.mxu0 0.0
    %1697 = vmatpush2.msra.mxu0 0.0
    %1698 = vmatprep.subr.mxu0 0.0
    %1699 = vmatpush2.msra.mxu0 0.0
    %1700 = vmatprep.subr.mxu0 0.0
    %1701 = vmatpush2.msra.mxu0 0.0
    %1702 = vmatprep.subr.mxu0 0.0
    %1703 = vmatpush2.msra.mxu0 0.0
    %1704 = vmatprep.subr.mxu0 0.0
    %1705 = vmatpush2.msra.mxu0 0.0
    %1706 = vmatprep.subr.mxu0 0.0
    %1707 = vmatpush2.msra.mxu0 0.0
    %1708 = vmatprep.subr.mxu0 0.0
    %1709 = vmatpush2.msra.mxu0 0.0
    %1710 = vmatprep.subr.mxu0 0.0
    %1711 = vmatpush2.msra.mxu0 0.0
    %1712 = vmatprep.subr.mxu0 0.0
    %1713 = vmatpush2.msra.mxu0 0.0
    %1714 = vmatprep.mubr.f32.mxu0 0.0
    %1715 = vmatmul.mubr.f32.gmra.mxu0 %v1648
    %v1716 = vpop.f32.mrf.mxu0
    %v1717 = vadd.f32 0.0, %v1716
    %v1718 = vpop.f32.mrf.mxu0
    %1719 = vdwg.mxu0
    %v1720 = vadd.f32 %v1637, %v1717
    %v1721 = vld [vmem:[#allocation5 + $0x40] sm:$0xff]
    %v1722 = vld [vmem:[#allocation5 + $0x48] sm:$0xff]
    %v1723 = vld [vmem:[#allocation5 + $0x50] sm:$0xff]
    %v1724 = vld [vmem:[#allocation5 + $0x58] sm:$0xff]
    %v1725 = vld [vmem:[#allocation5 + $0x60] sm:$0xff]
    %v1726 = vld [vmem:[#allocation5 + $0x68] sm:$0xff]
    %v1727 = vld [vmem:[#allocation5 + $0x70] sm:$0xff]
    %v1728 = vld [vmem:[#allocation5 + $0x78] sm:$0xff]
    %v1730 = vsel %vm453, %v1603, 0
    %1732 = vmatprep.subr.mxu0 0.0
    %1733 = vmatpush1.msra.mxu0 0.0
    %1734 = vmatprep.subr.mxu0 0.0
    %1735 = vmatpush1.msra.mxu0 0.0
    %1736 = vmatprep.subr.mxu0 0.0
    %1737 = vmatpush1.msra.mxu0 0.0
    %1738 = vmatprep.subr.mxu0 0.0
    %1739 = vmatpush1.msra.mxu0 0.0
    %1740 = vmatprep.subr.mxu0 0.0
    %1741 = vmatpush1.msra.mxu0 0.0
    %1742 = vmatprep.subr.mxu0 0.0
    %1743 = vmatpush1.msra.mxu0 0.0
    %1744 = vmatprep.subr.mxu0 0.0
    %1745 = vmatpush1.msra.mxu0 0.0
    %1746 = vmatprep.subr.mxu0 0.0
    %1747 = vmatpush1.msra.mxu0 0.0
    %1748 = vmatprep.subr.mxu0 0.0
    %1749 = vmatpush1.msra.mxu0 %v1728
    %1750 = vmatprep.subr.mxu0 0.0
    %1751 = vmatpush1.msra.mxu0 %v1727
    %1752 = vmatprep.subr.mxu0 0.0
    %1753 = vmatpush1.msra.mxu0 %v1726
    %1754 = vmatprep.subr.mxu0 0.0
    %1755 = vmatpush1.msra.mxu0 %v1725
    %1756 = vmatprep.subr.mxu0 0.0
    %1757 = vmatpush1.msra.mxu0 %v1724
    %1758 = vmatprep.subr.mxu0 0.0
    %1759 = vmatpush1.msra.mxu0 %v1723
    %1760 = vmatprep.subr.mxu0 0.0
    %1761 = vmatpush1.msra.mxu0 %v1722
    %1762 = vmatprep.subr.mxu0 0.0
    %1763 = vmatpush1.msra.mxu0 %v1721
    %1764 = vmatprep.subr.mxu0 0.0
    %1765 = vmatpush2.msra.mxu0 0.0
    %1766 = vmatprep.subr.mxu0 0.0
    %1767 = vmatpush2.msra.mxu0 0.0
    %1768 = vmatprep.subr.mxu0 0.0
    %1769 = vmatpush2.msra.mxu0 0.0
    %1770 = vmatprep.subr.mxu0 0.0
    %1771 = vmatpush2.msra.mxu0 0.0
    %1772 = vmatprep.subr.mxu0 0.0
    %1773 = vmatpush2.msra.mxu0 0.0
    %1774 = vmatprep.subr.mxu0 0.0
    %1775 = vmatpush2.msra.mxu0 0.0
    %1776 = vmatprep.subr.mxu0 0.0
    %1777 = vmatpush2.msra.mxu0 0.0
    %1778 = vmatprep.subr.mxu0 0.0
    %1779 = vmatpush2.msra.mxu0 0.0
    %1780 = vmatprep.subr.mxu0 0.0
    %1781 = vmatpush2.msra.mxu0 0.0
    %1782 = vmatprep.subr.mxu0 0.0
    %1783 = vmatpush2.msra.mxu0 0.0
    %1784 = vmatprep.subr.mxu0 0.0
    %1785 = vmatpush2.msra.mxu0 0.0
    %1786 = vmatprep.subr.mxu0 0.0
    %1787 = vmatpush2.msra.mxu0 0.0
    %1788 = vmatprep.subr.mxu0 0.0
    %1789 = vmatpush2.msra.mxu0 0.0
    %1790 = vmatprep.subr.mxu0 0.0
    %1791 = vmatpush2.msra.mxu0 0.0
    %1792 = vmatprep.subr.mxu0 0.0
    %1793 = vmatpush2.msra.mxu0 0.0
    %1794 = vmatprep.subr.mxu0 0.0
    %1795 = vmatpush2.msra.mxu0 0.0
    %1796 = vmatprep.mubr.f32.mxu0 0.0
    %1797 = vmatmul.mubr.f32.gmra.mxu0 %v1730
    %v1798 = vpop.f32.mrf.mxu0
    %v1799 = vadd.f32 0.0, %v1798
    %v1800 = vpop.f32.mrf.mxu0
    %1801 = vdwg.mxu0
    %v1802 = vadd.f32 %v1720, %v1799
    %v1803 = vld [vmem:[#allocation5 + $0x80] sm:$0xff]
    %v1804 = vld [vmem:[#allocation5 + $0x88] sm:$0xff]
    %v1805 = vld [vmem:[#allocation5 + $0x90] sm:$0xff]
    %v1806 = vld [vmem:[#allocation5 + $0x98] sm:$0xff]
    %v1807 = vld [vmem:[#allocation5 + $0xa0] sm:$0xff]
    %v1808 = vld [vmem:[#allocation5 + $0xa8] sm:$0xff]
    %v1809 = vld [vmem:[#allocation5 + $0xb0] sm:$0xff]
    %v1810 = vld [vmem:[#allocation5 + $0xb8] sm:$0xff]
    %v1812 = vsel %vm453, %v1604, 0
    %1814 = vmatprep.subr.mxu0 0.0
    %1815 = vmatpush1.msra.mxu0 0.0
    %1816 = vmatprep.subr.mxu0 0.0
    %1817 = vmatpush1.msra.mxu0 0.0
    %1818 = vmatprep.subr.mxu0 0.0
    %1819 = vmatpush1.msra.mxu0 0.0
    %1820 = vmatprep.subr.mxu0 0.0
    %1821 = vmatpush1.msra.mxu0 0.0
    %1822 = vmatprep.subr.mxu0 0.0
    %1823 = vmatpush1.msra.mxu0 0.0
    %1824 = vmatprep.subr.mxu0 0.0
    %1825 = vmatpush1.msra.mxu0 0.0
    %1826 = vmatprep.subr.mxu0 0.0
    %1827 = vmatpush1.msra.mxu0 0.0
    %1828 = vmatprep.subr.mxu0 0.0
    %1829 = vmatpush1.msra.mxu0 0.0
    %1830 = vmatprep.subr.mxu0 0.0
    %1831 = vmatpush1.msra.mxu0 %v1810
    %1832 = vmatprep.subr.mxu0 0.0
    %1833 = vmatpush1.msra.mxu0 %v1809
    %1834 = vmatprep.subr.mxu0 0.0
    %1835 = vmatpush1.msra.mxu0 %v1808
    %1836 = vmatprep.subr.mxu0 0.0
    %1837 = vmatpush1.msra.mxu0 %v1807
    %1838 = vmatprep.subr.mxu0 0.0
    %1839 = vmatpush1.msra.mxu0 %v1806
    %1840 = vmatprep.subr.mxu0 0.0
    %1841 = vmatpush1.msra.mxu0 %v1805
    %1842 = vmatprep.subr.mxu0 0.0
    %1843 = vmatpush1.msra.mxu0 %v1804
    %1844 = vmatprep.subr.mxu0 0.0
    %1845 = vmatpush1.msra.mxu0 %v1803
    %1846 = vmatprep.subr.mxu0 0.0
    %1847 = vmatpush2.msra.mxu0 0.0
    %1848 = vmatprep.subr.mxu0 0.0
    %1849 = vmatpush2.msra.mxu0 0.0
    %1850 = vmatprep.subr.mxu0 0.0
    %1851 = vmatpush2.msra.mxu0 0.0
    %1852 = vmatprep.subr.mxu0 0.0
    %1853 = vmatpush2.msra.mxu0 0.0
    %1854 = vmatprep.subr.mxu0 0.0
    %1855 = vmatpush2.msra.mxu0 0.0
    %1856 = vmatprep.subr.mxu0 0.0
    %1857 = vmatpush2.msra.mxu0 0.0
    %1858 = vmatprep.subr.mxu0 0.0
    %1859 = vmatpush2.msra.mxu0 0.0
    %1860 = vmatprep.subr.mxu0 0.0
    %1861 = vmatpush2.msra.mxu0 0.0
    %1862 = vmatprep.subr.mxu0 0.0
    %1863 = vmatpush2.msra.mxu0 0.0
    %1864 = vmatprep.subr.mxu0 0.0
    %1865 = vmatpush2.msra.mxu0 0.0
    %1866 = vmatprep.subr.mxu0 0.0
    %1867 = vmatpush2.msra.mxu0 0.0
    %1868 = vmatprep.subr.mxu0 0.0
    %1869 = vmatpush2.msra.mxu0 0.0
    %1870 = vmatprep.subr.mxu0 0.0
    %1871 = vmatpush2.msra.mxu0 0.0
    %1872 = vmatprep.subr.mxu0 0.0
    %1873 = vmatpush2.msra.mxu0 0.0
    %1874 = vmatprep.subr.mxu0 0.0
    %1875 = vmatpush2.msra.mxu0 0.0
    %1876 = vmatprep.subr.mxu0 0.0
    %1877 = vmatpush2.msra.mxu0 0.0
    %1878 = vmatprep.mubr.f32.mxu0 0.0
    %1879 = vmatmul.mubr.f32.gmra.mxu0 %v1812
    %v1880 = vpop.f32.mrf.mxu0
    %v1881 = vadd.f32 0.0, %v1880
    %v1882 = vpop.f32.mrf.mxu0
    %1883 = vdwg.mxu0
    %v1884 = vadd.f32 %v1802, %v1881
    %v1885 = vld [vmem:[#allocation5 + $0xc0] sm:$0xff]
    %v1886 = vld [vmem:[#allocation5 + $0xc8] sm:$0xff]
    %v1887 = vld [vmem:[#allocation5 + $0xd0] sm:$0xff]
    %v1888 = vld [vmem:[#allocation5 + $0xd8] sm:$0xff]
    %v1889 = vld [vmem:[#allocation5 + $0xe0] sm:$0xff]
    %v1890 = vld [vmem:[#allocation5 + $0xe8] sm:$0xff]
    %v1891 = vld [vmem:[#allocation5 + $0xf0] sm:$0xff]
    %v1892 = vld [vmem:[#allocation5 + $0xf8] sm:$0xff]
    %v1894 = vsel %vm453, %v1605, 0
    %1896 = vmatprep.subr.mxu0 0.0
    %1897 = vmatpush1.msra.mxu0 0.0
    %1898 = vmatprep.subr.mxu0 0.0
    %1899 = vmatpush1.msra.mxu0 0.0
    %1900 = vmatprep.subr.mxu0 0.0
    %1901 = vmatpush1.msra.mxu0 0.0
    %1902 = vmatprep.subr.mxu0 0.0
    %1903 = vmatpush1.msra.mxu0 0.0
    %1904 = vmatprep.subr.mxu0 0.0
    %1905 = vmatpush1.msra.mxu0 0.0
    %1906 = vmatprep.subr.mxu0 0.0
    %1907 = vmatpush1.msra.mxu0 0.0
    %1908 = vmatprep.subr.mxu0 0.0
    %1909 = vmatpush1.msra.mxu0 0.0
    %1910 = vmatprep.subr.mxu0 0.0
    %1911 = vmatpush1.msra.mxu0 0.0
    %1912 = vmatprep.subr.mxu0 0.0
    %1913 = vmatpush1.msra.mxu0 %v1892
    %1914 = vmatprep.subr.mxu0 0.0
    %1915 = vmatpush1.msra.mxu0 %v1891
    %1916 = vmatprep.subr.mxu0 0.0
    %1917 = vmatpush1.msra.mxu0 %v1890
    %1918 = vmatprep.subr.mxu0 0.0
    %1919 = vmatpush1.msra.mxu0 %v1889
    %1920 = vmatprep.subr.mxu0 0.0
    %1921 = vmatpush1.msra.mxu0 %v1888
    %1922 = vmatprep.subr.mxu0 0.0
    %1923 = vmatpush1.msra.mxu0 %v1887
    %1924 = vmatprep.subr.mxu0 0.0
    %1925 = vmatpush1.msra.mxu0 %v1886
    %1926 = vmatprep.subr.mxu0 0.0
    %1927 = vmatpush1.msra.mxu0 %v1885
    %1928 = vmatprep.subr.mxu0 0.0
    %1929 = vmatpush2.msra.mxu0 0.0
    %1930 = vmatprep.subr.mxu0 0.0
    %1931 = vmatpush2.msra.mxu0 0.0
    %1932 = vmatprep.subr.mxu0 0.0
    %1933 = vmatpush2.msra.mxu0 0.0
    %1934 = vmatprep.subr.mxu0 0.0
    %1935 = vmatpush2.msra.mxu0 0.0
    %1936 = vmatprep.subr.mxu0 0.0
    %1937 = vmatpush2.msra.mxu0 0.0
    %1938 = vmatprep.subr.mxu0 0.0
    %1939 = vmatpush2.msra.mxu0 0.0
    %1940 = vmatprep.subr.mxu0 0.0
    %1941 = vmatpush2.msra.mxu0 0.0
    %1942 = vmatprep.subr.mxu0 0.0
    %1943 = vmatpush2.msra.mxu0 0.0
    %1944 = vmatprep.subr.mxu0 0.0
    %1945 = vmatpush2.msra.mxu0 0.0
    %1946 = vmatprep.subr.mxu0 0.0
    %1947 = vmatpush2.msra.mxu0 0.0
    %1948 = vmatprep.subr.mxu0 0.0
    %1949 = vmatpush2.msra.mxu0 0.0
    %1950 = vmatprep.subr.mxu0 0.0
    %1951 = vmatpush2.msra.mxu0 0.0
    %1952 = vmatprep.subr.mxu0 0.0
    %1953 = vmatpush2.msra.mxu0 0.0
    %1954 = vmatprep.subr.mxu0 0.0
    %1955 = vmatpush2.msra.mxu0 0.0
    %1956 = vmatprep.subr.mxu0 0.0
    %1957 = vmatpush2.msra.mxu0 0.0
    %1958 = vmatprep.subr.mxu0 0.0
    %1959 = vmatpush2.msra.mxu0 0.0
    %1960 = vmatprep.mubr.f32.mxu0 0.0
    %1961 = vmatmul.mubr.f32.gmra.mxu0 %v1894
    %v1962 = vpop.f32.mrf.mxu0
    %v1963 = vadd.f32 0.0, %v1962
    %v1964 = vpop.f32.mrf.mxu0
    %1965 = vdwg.mxu0
    %v1966 = vadd.f32 %v1884, %v1963
    %v1967 = vld [vmem:[#allocation5 + $0x100] sm:$0xff]
    %v1968 = vld [vmem:[#allocation5 + $0x108] sm:$0xff]
    %v1969 = vld [vmem:[#allocation5 + $0x110] sm:$0xff]
    %v1970 = vld [vmem:[#allocation5 + $0x118] sm:$0xff]
    %v1971 = vld [vmem:[#allocation5 + $0x120] sm:$0xff]
    %v1972 = vld [vmem:[#allocation5 + $0x128] sm:$0xff]
    %v1973 = vld [vmem:[#allocation5 + $0x130] sm:$0xff]
    %v1974 = vld [vmem:[#allocation5 + $0x138] sm:$0xff]
    %v1976 = vsel %vm453, %v1606, 0
    %1978 = vmatprep.subr.mxu0 0.0
    %1979 = vmatpush1.msra.mxu0 0.0
    %1980 = vmatprep.subr.mxu0 0.0
    %1981 = vmatpush1.msra.mxu0 0.0
    %1982 = vmatprep.subr.mxu0 0.0
    %1983 = vmatpush1.msra.mxu0 0.0
    %1984 = vmatprep.subr.mxu0 0.0
    %1985 = vmatpush1.msra.mxu0 0.0
    %1986 = vmatprep.subr.mxu0 0.0
    %1987 = vmatpush1.msra.mxu0 0.0
    %1988 = vmatprep.subr.mxu0 0.0
    %1989 = vmatpush1.msra.mxu0 0.0
    %1990 = vmatprep.subr.mxu0 0.0
    %1991 = vmatpush1.msra.mxu0 0.0
    %1992 = vmatprep.subr.mxu0 0.0
    %1993 = vmatpush1.msra.mxu0 0.0
    %1994 = vmatprep.subr.mxu0 0.0
    %1995 = vmatpush1.msra.mxu0 %v1974
    %1996 = vmatprep.subr.mxu0 0.0
    %1997 = vmatpush1.msra.mxu0 %v1973
    %1998 = vmatprep.subr.mxu0 0.0
    %1999 = vmatpush1.msra.mxu0 %v1972
    %2000 = vmatprep.subr.mxu0 0.0
    %2001 = vmatpush1.msra.mxu0 %v1971
    %2002 = vmatprep.subr.mxu0 0.0
    %2003 = vmatpush1.msra.mxu0 %v1970
    %2004 = vmatprep.subr.mxu0 0.0
    %2005 = vmatpush1.msra.mxu0 %v1969
    %2006 = vmatprep.subr.mxu0 0.0
    %2007 = vmatpush1.msra.mxu0 %v1968
    %2008 = vmatprep.subr.mxu0 0.0
    %2009 = vmatpush1.msra.mxu0 %v1967
    %2010 = vmatprep.subr.mxu0 0.0
    %2011 = vmatpush2.msra.mxu0 0.0
    %2012 = vmatprep.subr.mxu0 0.0
    %2013 = vmatpush2.msra.mxu0 0.0
    %2014 = vmatprep.subr.mxu0 0.0
    %2015 = vmatpush2.msra.mxu0 0.0
    %2016 = vmatprep.subr.mxu0 0.0
    %2017 = vmatpush2.msra.mxu0 0.0
    %2018 = vmatprep.subr.mxu0 0.0
    %2019 = vmatpush2.msra.mxu0 0.0
    %2020 = vmatprep.subr.mxu0 0.0
    %2021 = vmatpush2.msra.mxu0 0.0
    %2022 = vmatprep.subr.mxu0 0.0
    %2023 = vmatpush2.msra.mxu0 0.0
    %2024 = vmatprep.subr.mxu0 0.0
    %2025 = vmatpush2.msra.mxu0 0.0
    %2026 = vmatprep.subr.mxu0 0.0
    %2027 = vmatpush2.msra.mxu0 0.0
    %2028 = vmatprep.subr.mxu0 0.0
    %2029 = vmatpush2.msra.mxu0 0.0
    %2030 = vmatprep.subr.mxu0 0.0
    %2031 = vmatpush2.msra.mxu0 0.0
    %2032 = vmatprep.subr.mxu0 0.0
    %2033 = vmatpush2.msra.mxu0 0.0
    %2034 = vmatprep.subr.mxu0 0.0
    %2035 = vmatpush2.msra.mxu0 0.0
    %2036 = vmatprep.subr.mxu0 0.0
    %2037 = vmatpush2.msra.mxu0 0.0
    %2038 = vmatprep.subr.mxu0 0.0
    %2039 = vmatpush2.msra.mxu0 0.0
    %2040 = vmatprep.subr.mxu0 0.0
    %2041 = vmatpush2.msra.mxu0 0.0
    %2042 = vmatprep.mubr.f32.mxu0 0.0
    %2043 = vmatmul.mubr.f32.gmra.mxu0 %v1976
    %v2044 = vpop.f32.mrf.mxu0
    %v2045 = vadd.f32 0.0, %v2044
    %v2046 = vpop.f32.mrf.mxu0
    %2047 = vdwg.mxu0
    %v2048 = vadd.f32 %v1966, %v2045
    %v2049 = vld [vmem:[#allocation5 + $0x140] sm:$0xff]
    %v2050 = vld [vmem:[#allocation5 + $0x148] sm:$0xff]
    %v2051 = vld [vmem:[#allocation5 + $0x150] sm:$0xff]
    %v2052 = vld [vmem:[#allocation5 + $0x158] sm:$0xff]
    %v2053 = vld [vmem:[#allocation5 + $0x160] sm:$0xff]
    %v2054 = vld [vmem:[#allocation5 + $0x168] sm:$0xff]
    %v2055 = vld [vmem:[#allocation5 + $0x170] sm:$0xff]
    %v2056 = vld [vmem:[#allocation5 + $0x178] sm:$0xff]
    %v2058 = vsel %vm453, %v1607, 0
    %2060 = vmatprep.subr.mxu0 0.0
    %2061 = vmatpush1.msra.mxu0 0.0
    %2062 = vmatprep.subr.mxu0 0.0
    %2063 = vmatpush1.msra.mxu0 0.0
    %2064 = vmatprep.subr.mxu0 0.0
    %2065 = vmatpush1.msra.mxu0 0.0
    %2066 = vmatprep.subr.mxu0 0.0
    %2067 = vmatpush1.msra.mxu0 0.0
    %2068 = vmatprep.subr.mxu0 0.0
    %2069 = vmatpush1.msra.mxu0 0.0
    %2070 = vmatprep.subr.mxu0 0.0
    %2071 = vmatpush1.msra.mxu0 0.0
    %2072 = vmatprep.subr.mxu0 0.0
    %2073 = vmatpush1.msra.mxu0 0.0
    %2074 = vmatprep.subr.mxu0 0.0
    %2075 = vmatpush1.msra.mxu0 0.0
    %2076 = vmatprep.subr.mxu0 0.0
    %2077 = vmatpush1.msra.mxu0 %v2056
    %2078 = vmatprep.subr.mxu0 0.0
    %2079 = vmatpush1.msra.mxu0 %v2055
    %2080 = vmatprep.subr.mxu0 0.0
    %2081 = vmatpush1.msra.mxu0 %v2054
    %2082 = vmatprep.subr.mxu0 0.0
    %2083 = vmatpush1.msra.mxu0 %v2053
    %2084 = vmatprep.subr.mxu0 0.0
    %2085 = vmatpush1.msra.mxu0 %v2052
    %2086 = vmatprep.subr.mxu0 0.0
    %2087 = vmatpush1.msra.mxu0 %v2051
    %2088 = vmatprep.subr.mxu0 0.0
    %2089 = vmatpush1.msra.mxu0 %v2050
    %2090 = vmatprep.subr.mxu0 0.0
    %2091 = vmatpush1.msra.mxu0 %v2049
    %2092 = vmatprep.subr.mxu0 0.0
    %2093 = vmatpush2.msra.mxu0 0.0
    %2094 = vmatprep.subr.mxu0 0.0
    %2095 = vmatpush2.msra.mxu0 0.0
    %2096 = vmatprep.subr.mxu0 0.0
    %2097 = vmatpush2.msra.mxu0 0.0
    %2098 = vmatprep.subr.mxu0 0.0
    %2099 = vmatpush2.msra.mxu0 0.0
    %2100 = vmatprep.subr.mxu0 0.0
    %2101 = vmatpush2.msra.mxu0 0.0
    %2102 = vmatprep.subr.mxu0 0.0
    %2103 = vmatpush2.msra.mxu0 0.0
    %2104 = vmatprep.subr.mxu0 0.0
    %2105 = vmatpush2.msra.mxu0 0.0
    %2106 = vmatprep.subr.mxu0 0.0
    %2107 = vmatpush2.msra.mxu0 0.0
    %2108 = vmatprep.subr.mxu0 0.0
    %2109 = vmatpush2.msra.mxu0 0.0
    %2110 = vmatprep.subr.mxu0 0.0
    %2111 = vmatpush2.msra.mxu0 0.0
    %2112 = vmatprep.subr.mxu0 0.0
    %2113 = vmatpush2.msra.mxu0 0.0
    %2114 = vmatprep.subr.mxu0 0.0
    %2115 = vmatpush2.msra.mxu0 0.0
    %2116 = vmatprep.subr.mxu0 0.0
    %2117 = vmatpush2.msra.mxu0 0.0
    %2118 = vmatprep.subr.mxu0 0.0
    %2119 = vmatpush2.msra.mxu0 0.0
    %2120 = vmatprep.subr.mxu0 0.0
    %2121 = vmatpush2.msra.mxu0 0.0
    %2122 = vmatprep.subr.mxu0 0.0
    %2123 = vmatpush2.msra.mxu0 0.0
    %2124 = vmatprep.mubr.f32.mxu0 0.0
    %2125 = vmatmul.mubr.f32.gmra.mxu0 %v2058
    %v2126 = vpop.f32.mrf.mxu0
    %v2127 = vadd.f32 0.0, %v2126
    %v2128 = vpop.f32.mrf.mxu0
    %2129 = vdwg.mxu0
    %v2130 = vadd.f32 %v2048, %v2127
    %v2131 = vld [vmem:[#allocation5 + $0x180] sm:$0xff]
    %v2132 = vld [vmem:[#allocation5 + $0x188] sm:$0xff]
    %v2133 = vld [vmem:[#allocation5 + $0x190] sm:$0xff]
    %v2134 = vld [vmem:[#allocation5 + $0x198] sm:$0xff]
    %v2135 = vld [vmem:[#allocation5 + $0x1a0] sm:$0xff]
    %v2136 = vld [vmem:[#allocation5 + $0x1a8] sm:$0xff]
    %v2137 = vld [vmem:[#allocation5 + $0x1b0] sm:$0xff]
    %v2138 = vld [vmem:[#allocation5 + $0x1b8] sm:$0xff]
    %v2140 = vsel %vm453, %v1608, 0
    %2142 = vmatprep.subr.mxu0 0.0
    %2143 = vmatpush1.msra.mxu0 0.0
    %2144 = vmatprep.subr.mxu0 0.0
    %2145 = vmatpush1.msra.mxu0 0.0
    %2146 = vmatprep.subr.mxu0 0.0
    %2147 = vmatpush1.msra.mxu0 0.0
    %2148 = vmatprep.subr.mxu0 0.0
    %2149 = vmatpush1.msra.mxu0 0.0
    %2150 = vmatprep.subr.mxu0 0.0
    %2151 = vmatpush1.msra.mxu0 0.0
    %2152 = vmatprep.subr.mxu0 0.0
    %2153 = vmatpush1.msra.mxu0 0.0
    %2154 = vmatprep.subr.mxu0 0.0
    %2155 = vmatpush1.msra.mxu0 0.0
    %2156 = vmatprep.subr.mxu0 0.0
    %2157 = vmatpush1.msra.mxu0 0.0
    %2158 = vmatprep.subr.mxu0 0.0
    %2159 = vmatpush1.msra.mxu0 %v2138
    %2160 = vmatprep.subr.mxu0 0.0
    %2161 = vmatpush1.msra.mxu0 %v2137
    %2162 = vmatprep.subr.mxu0 0.0
    %2163 = vmatpush1.msra.mxu0 %v2136
    %2164 = vmatprep.subr.mxu0 0.0
    %2165 = vmatpush1.msra.mxu0 %v2135
    %2166 = vmatprep.subr.mxu0 0.0
    %2167 = vmatpush1.msra.mxu0 %v2134
    %2168 = vmatprep.subr.mxu0 0.0
    %2169 = vmatpush1.msra.mxu0 %v2133
    %2170 = vmatprep.subr.mxu0 0.0
    %2171 = vmatpush1.msra.mxu0 %v2132
    %2172 = vmatprep.subr.mxu0 0.0
    %2173 = vmatpush1.msra.mxu0 %v2131
    %2174 = vmatprep.subr.mxu0 0.0
    %2175 = vmatpush2.msra.mxu0 0.0
    %2176 = vmatprep.subr.mxu0 0.0
    %2177 = vmatpush2.msra.mxu0 0.0
    %2178 = vmatprep.subr.mxu0 0.0
    %2179 = vmatpush2.msra.mxu0 0.0
    %2180 = vmatprep.subr.mxu0 0.0
    %2181 = vmatpush2.msra.mxu0 0.0
    %2182 = vmatprep.subr.mxu0 0.0
    %2183 = vmatpush2.msra.mxu0 0.0
    %2184 = vmatprep.subr.mxu0 0.0
    %2185 = vmatpush2.msra.mxu0 0.0
    %2186 = vmatprep.subr.mxu0 0.0
    %2187 = vmatpush2.msra.mxu0 0.0
    %2188 = vmatprep.subr.mxu0 0.0
    %2189 = vmatpush2.msra.mxu0 0.0
    %2190 = vmatprep.subr.mxu0 0.0
    %2191 = vmatpush2.msra.mxu0 0.0
    %2192 = vmatprep.subr.mxu0 0.0
    %2193 = vmatpush2.msra.mxu0 0.0
    %2194 = vmatprep.subr.mxu0 0.0
    %2195 = vmatpush2.msra.mxu0 0.0
    %2196 = vmatprep.subr.mxu0 0.0
    %2197 = vmatpush2.msra.mxu0 0.0
    %2198 = vmatprep.subr.mxu0 0.0
    %2199 = vmatpush2.msra.mxu0 0.0
    %2200 = vmatprep.subr.mxu0 0.0
    %2201 = vmatpush2.msra.mxu0 0.0
    %2202 = vmatprep.subr.mxu0 0.0
    %2203 = vmatpush2.msra.mxu0 0.0
    %2204 = vmatprep.subr.mxu0 0.0
    %2205 = vmatpush2.msra.mxu0 0.0
    %2206 = vmatprep.mubr.f32.mxu0 0.0
    %2207 = vmatmul.mubr.f32.gmra.mxu0 %v2140
    %v2208 = vpop.f32.mrf.mxu0
    %v2209 = vadd.f32 0.0, %v2208
    %v2210 = vpop.f32.mrf.mxu0
    %2211 = vdwg.mxu0
    %v2212 = vadd.f32 %v2130, %v2209
    %v2213 = vld [vmem:[#allocation5 + $0x1c0] sm:$0xff]
    %v2214 = vld [vmem:[#allocation5 + $0x1c8] sm:$0xff]
    %v2215 = vld [vmem:[#allocation5 + $0x1d0] sm:$0xff]
    %v2216 = vld [vmem:[#allocation5 + $0x1d8] sm:$0xff]
    %v2217 = vld [vmem:[#allocation5 + $0x1e0] sm:$0xff]
    %v2218 = vld [vmem:[#allocation5 + $0x1e8] sm:$0xff]
    %v2219 = vld [vmem:[#allocation5 + $0x1f0] sm:$0xff]
    %v2220 = vld [vmem:[#allocation5 + $0x1f8] sm:$0xff]
    %v2222 = vsel %vm453, %v1609, 0
    %2224 = vmatprep.subr.mxu0 0.0
    %2225 = vmatpush1.msra.mxu0 0.0
    %2226 = vmatprep.subr.mxu0 0.0
    %2227 = vmatpush1.msra.mxu0 0.0
    %2228 = vmatprep.subr.mxu0 0.0
    %2229 = vmatpush1.msra.mxu0 0.0
    %2230 = vmatprep.subr.mxu0 0.0
    %2231 = vmatpush1.msra.mxu0 0.0
    %2232 = vmatprep.subr.mxu0 0.0
    %2233 = vmatpush1.msra.mxu0 0.0
    %2234 = vmatprep.subr.mxu0 0.0
    %2235 = vmatpush1.msra.mxu0 0.0
    %2236 = vmatprep.subr.mxu0 0.0
    %2237 = vmatpush1.msra.mxu0 0.0
    %2238 = vmatprep.subr.mxu0 0.0
    %2239 = vmatpush1.msra.mxu0 0.0
    %2240 = vmatprep.subr.mxu0 0.0
    %2241 = vmatpush1.msra.mxu0 %v2220
    %2242 = vmatprep.subr.mxu0 0.0
    %2243 = vmatpush1.msra.mxu0 %v2219
    %2244 = vmatprep.subr.mxu0 0.0
    %2245 = vmatpush1.msra.mxu0 %v2218
    %2246 = vmatprep.subr.mxu0 0.0
    %2247 = vmatpush1.msra.mxu0 %v2217
    %2248 = vmatprep.subr.mxu0 0.0
    %2249 = vmatpush1.msra.mxu0 %v2216
    %2250 = vmatprep.subr.mxu0 0.0
    %2251 = vmatpush1.msra.mxu0 %v2215
    %2252 = vmatprep.subr.mxu0 0.0
    %2253 = vmatpush1.msra.mxu0 %v2214
    %2254 = vmatprep.subr.mxu0 0.0
    %2255 = vmatpush1.msra.mxu0 %v2213
    %2256 = vmatprep.subr.mxu0 0.0
    %2257 = vmatpush2.msra.mxu0 0.0
    %2258 = vmatprep.subr.mxu0 0.0
    %2259 = vmatpush2.msra.mxu0 0.0
    %2260 = vmatprep.subr.mxu0 0.0
    %2261 = vmatpush2.msra.mxu0 0.0
    %2262 = vmatprep.subr.mxu0 0.0
    %2263 = vmatpush2.msra.mxu0 0.0
    %2264 = vmatprep.subr.mxu0 0.0
    %2265 = vmatpush2.msra.mxu0 0.0
    %2266 = vmatprep.subr.mxu0 0.0
    %2267 = vmatpush2.msra.mxu0 0.0
    %2268 = vmatprep.subr.mxu0 0.0
    %2269 = vmatpush2.msra.mxu0 0.0
    %2270 = vmatprep.subr.mxu0 0.0
    %2271 = vmatpush2.msra.mxu0 0.0
    %2272 = vmatprep.subr.mxu0 0.0
    %2273 = vmatpush2.msra.mxu0 0.0
    %2274 = vmatprep.subr.mxu0 0.0
    %2275 = vmatpush2.msra.mxu0 0.0
    %2276 = vmatprep.subr.mxu0 0.0
    %2277 = vmatpush2.msra.mxu0 0.0
    %2278 = vmatprep.subr.mxu0 0.0
    %2279 = vmatpush2.msra.mxu0 0.0
    %2280 = vmatprep.subr.mxu0 0.0
    %2281 = vmatpush2.msra.mxu0 0.0
    %2282 = vmatprep.subr.mxu0 0.0
    %2283 = vmatpush2.msra.mxu0 0.0
    %2284 = vmatprep.subr.mxu0 0.0
    %2285 = vmatpush2.msra.mxu0 0.0
    %2286 = vmatprep.subr.mxu0 0.0
    %2287 = vmatpush2.msra.mxu0 0.0
    %2288 = vmatprep.mubr.f32.mxu0 0.0
    %2289 = vmatmul.mubr.f32.gmra.mxu0 %v2222
    %v2290 = vpop.f32.mrf.mxu0
    %v2291 = vadd.f32 0.0, %v2290
    %v2292 = vpop.f32.mrf.mxu0
    %2293 = vdwg.mxu0
    %v2294 = vadd.f32 %v2212, %v2291
    %v2295 = vld [vmem:[#allocation5 + $0x200] sm:$0xff]
    %v2296 = vld [vmem:[#allocation5 + $0x208] sm:$0xff]
    %v2297 = vld [vmem:[#allocation5 + $0x210] sm:$0xff]
    %v2298 = vld [vmem:[#allocation5 + $0x218] sm:$0xff]
    %v2299 = vld [vmem:[#allocation5 + $0x220] sm:$0xff]
    %v2300 = vld [vmem:[#allocation5 + $0x228] sm:$0xff]
    %v2301 = vld [vmem:[#allocation5 + $0x230] sm:$0xff]
    %v2302 = vld [vmem:[#allocation5 + $0x238] sm:$0xff]
    %v2304 = vsel %vm453, %v1610, 0
    %2306 = vmatprep.subr.mxu0 0.0
    %2307 = vmatpush1.msra.mxu0 0.0
    %2308 = vmatprep.subr.mxu0 0.0
    %2309 = vmatpush1.msra.mxu0 0.0
    %2310 = vmatprep.subr.mxu0 0.0
    %2311 = vmatpush1.msra.mxu0 0.0
    %2312 = vmatprep.subr.mxu0 0.0
    %2313 = vmatpush1.msra.mxu0 0.0
    %2314 = vmatprep.subr.mxu0 0.0
    %2315 = vmatpush1.msra.mxu0 0.0
    %2316 = vmatprep.subr.mxu0 0.0
    %2317 = vmatpush1.msra.mxu0 0.0
    %2318 = vmatprep.subr.mxu0 0.0
    %2319 = vmatpush1.msra.mxu0 0.0
    %2320 = vmatprep.subr.mxu0 0.0
    %2321 = vmatpush1.msra.mxu0 0.0
    %2322 = vmatprep.subr.mxu0 0.0
    %2323 = vmatpush1.msra.mxu0 %v2302
    %2324 = vmatprep.subr.mxu0 0.0
    %2325 = vmatpush1.msra.mxu0 %v2301
    %2326 = vmatprep.subr.mxu0 0.0
    %2327 = vmatpush1.msra.mxu0 %v2300
    %2328 = vmatprep.subr.mxu0 0.0
    %2329 = vmatpush1.msra.mxu0 %v2299
    %2330 = vmatprep.subr.mxu0 0.0
    %2331 = vmatpush1.msra.mxu0 %v2298
    %2332 = vmatprep.subr.mxu0 0.0
    %2333 = vmatpush1.msra.mxu0 %v2297
    %2334 = vmatprep.subr.mxu0 0.0
    %2335 = vmatpush1.msra.mxu0 %v2296
    %2336 = vmatprep.subr.mxu0 0.0
    %2337 = vmatpush1.msra.mxu0 %v2295
    %2338 = vmatprep.subr.mxu0 0.0
    %2339 = vmatpush2.msra.mxu0 0.0
    %2340 = vmatprep.subr.mxu0 0.0
    %2341 = vmatpush2.msra.mxu0 0.0
    %2342 = vmatprep.subr.mxu0 0.0
    %2343 = vmatpush2.msra.mxu0 0.0
    %2344 = vmatprep.subr.mxu0 0.0
    %2345 = vmatpush2.msra.mxu0 0.0
    %2346 = vmatprep.subr.mxu0 0.0
    %2347 = vmatpush2.msra.mxu0 0.0
    %2348 = vmatprep.subr.mxu0 0.0
    %2349 = vmatpush2.msra.mxu0 0.0
    %2350 = vmatprep.subr.mxu0 0.0
    %2351 = vmatpush2.msra.mxu0 0.0
    %2352 = vmatprep.subr.mxu0 0.0
    %2353 = vmatpush2.msra.mxu0 0.0
    %2354 = vmatprep.subr.mxu0 0.0
    %2355 = vmatpush2.msra.mxu0 0.0
    %2356 = vmatprep.subr.mxu0 0.0
    %2357 = vmatpush2.msra.mxu0 0.0
    %2358 = vmatprep.subr.mxu0 0.0
    %2359 = vmatpush2.msra.mxu0 0.0
    %2360 = vmatprep.subr.mxu0 0.0
    %2361 = vmatpush2.msra.mxu0 0.0
    %2362 = vmatprep.subr.mxu0 0.0
    %2363 = vmatpush2.msra.mxu0 0.0
    %2364 = vmatprep.subr.mxu0 0.0
    %2365 = vmatpush2.msra.mxu0 0.0
    %2366 = vmatprep.subr.mxu0 0.0
    %2367 = vmatpush2.msra.mxu0 0.0
    %2368 = vmatprep.subr.mxu0 0.0
    %2369 = vmatpush2.msra.mxu0 0.0
    %2370 = vmatprep.mubr.f32.mxu0 0.0
    %2371 = vmatmul.mubr.f32.gmra.mxu0 %v2304
    %v2372 = vpop.f32.mrf.mxu0
    %v2373 = vadd.f32 0.0, %v2372
    %v2374 = vpop.f32.mrf.mxu0
    %2375 = vdwg.mxu0
    %v2376 = vadd.f32 %v2294, %v2373
    %v2377 = vld [vmem:[#allocation5 + $0x240] sm:$0xff]
    %v2378 = vld [vmem:[#allocation5 + $0x248] sm:$0xff]
    %v2379 = vld [vmem:[#allocation5 + $0x250] sm:$0xff]
    %v2380 = vld [vmem:[#allocation5 + $0x258] sm:$0xff]
    %v2381 = vld [vmem:[#allocation5 + $0x260] sm:$0xff]
    %v2382 = vld [vmem:[#allocation5 + $0x268] sm:$0xff]
    %v2383 = vld [vmem:[#allocation5 + $0x270] sm:$0xff]
    %v2384 = vld [vmem:[#allocation5 + $0x278] sm:$0xff]
    %v2386 = vsel %vm453, %v1611, 0
    %2388 = vmatprep.subr.mxu0 0.0
    %2389 = vmatpush1.msra.mxu0 0.0
    %2390 = vmatprep.subr.mxu0 0.0
    %2391 = vmatpush1.msra.mxu0 0.0
    %2392 = vmatprep.subr.mxu0 0.0
    %2393 = vmatpush1.msra.mxu0 0.0
    %2394 = vmatprep.subr.mxu0 0.0
    %2395 = vmatpush1.msra.mxu0 0.0
    %2396 = vmatprep.subr.mxu0 0.0
    %2397 = vmatpush1.msra.mxu0 0.0
    %2398 = vmatprep.subr.mxu0 0.0
    %2399 = vmatpush1.msra.mxu0 0.0
    %2400 = vmatprep.subr.mxu0 0.0
    %2401 = vmatpush1.msra.mxu0 0.0
    %2402 = vmatprep.subr.mxu0 0.0
    %2403 = vmatpush1.msra.mxu0 0.0
    %2404 = vmatprep.subr.mxu0 0.0
    %2405 = vmatpush1.msra.mxu0 %v2384
    %2406 = vmatprep.subr.mxu0 0.0
    %2407 = vmatpush1.msra.mxu0 %v2383
    %2408 = vmatprep.subr.mxu0 0.0
    %2409 = vmatpush1.msra.mxu0 %v2382
    %2410 = vmatprep.subr.mxu0 0.0
    %2411 = vmatpush1.msra.mxu0 %v2381
    %2412 = vmatprep.subr.mxu0 0.0
    %2413 = vmatpush1.msra.mxu0 %v2380
    %2414 = vmatprep.subr.mxu0 0.0
    %2415 = vmatpush1.msra.mxu0 %v2379
    %2416 = vmatprep.subr.mxu0 0.0
    %2417 = vmatpush1.msra.mxu0 %v2378
    %2418 = vmatprep.subr.mxu0 0.0
    %2419 = vmatpush1.msra.mxu0 %v2377
    %2420 = vmatprep.subr.mxu0 0.0
    %2421 = vmatpush2.msra.mxu0 0.0
    %2422 = vmatprep.subr.mxu0 0.0
    %2423 = vmatpush2.msra.mxu0 0.0
    %2424 = vmatprep.subr.mxu0 0.0
    %2425 = vmatpush2.msra.mxu0 0.0
    %2426 = vmatprep.subr.mxu0 0.0
    %2427 = vmatpush2.msra.mxu0 0.0
    %2428 = vmatprep.subr.mxu0 0.0
    %2429 = vmatpush2.msra.mxu0 0.0
    %2430 = vmatprep.subr.mxu0 0.0
    %2431 = vmatpush2.msra.mxu0 0.0
    %2432 = vmatprep.subr.mxu0 0.0
    %2433 = vmatpush2.msra.mxu0 0.0
    %2434 = vmatprep.subr.mxu0 0.0
    %2435 = vmatpush2.msra.mxu0 0.0
    %2436 = vmatprep.subr.mxu0 0.0
    %2437 = vmatpush2.msra.mxu0 0.0
    %2438 = vmatprep.subr.mxu0 0.0
    %2439 = vmatpush2.msra.mxu0 0.0
    %2440 = vmatprep.subr.mxu0 0.0
    %2441 = vmatpush2.msra.mxu0 0.0
    %2442 = vmatprep.subr.mxu0 0.0
    %2443 = vmatpush2.msra.mxu0 0.0
    %2444 = vmatprep.subr.mxu0 0.0
    %2445 = vmatpush2.msra.mxu0 0.0
    %2446 = vmatprep.subr.mxu0 0.0
    %2447 = vmatpush2.msra.mxu0 0.0
    %2448 = vmatprep.subr.mxu0 0.0
    %2449 = vmatpush2.msra.mxu0 0.0
    %2450 = vmatprep.subr.mxu0 0.0
    %2451 = vmatpush2.msra.mxu0 0.0
    %2452 = vmatprep.mubr.f32.mxu0 0.0
    %2453 = vmatmul.mubr.f32.gmra.mxu0 %v2386
    %v2454 = vpop.f32.mrf.mxu0
    %v2455 = vadd.f32 0.0, %v2454
    %v2456 = vpop.f32.mrf.mxu0
    %2457 = vdwg.mxu0
    %v2458 = vadd.f32 %v2376, %v2455
    %v2459 = vld [vmem:[#allocation5 + $0x280] sm:$0xff]
    %v2460 = vld [vmem:[#allocation5 + $0x288] sm:$0xff]
    %v2461 = vld [vmem:[#allocation5 + $0x290] sm:$0xff]
    %v2462 = vld [vmem:[#allocation5 + $0x298] sm:$0xff]
    %v2463 = vld [vmem:[#allocation5 + $0x2a0] sm:$0xff]
    %v2464 = vld [vmem:[#allocation5 + $0x2a8] sm:$0xff]
    %v2465 = vld [vmem:[#allocation5 + $0x2b0] sm:$0xff]
    %v2466 = vld [vmem:[#allocation5 + $0x2b8] sm:$0xff]
    %v2468 = vsel %vm453, %v1612, 0
    %2470 = vmatprep.subr.mxu0 0.0
    %2471 = vmatpush1.msra.mxu0 0.0
    %2472 = vmatprep.subr.mxu0 0.0
    %2473 = vmatpush1.msra.mxu0 0.0
    %2474 = vmatprep.subr.mxu0 0.0
    %2475 = vmatpush1.msra.mxu0 0.0
    %2476 = vmatprep.subr.mxu0 0.0
    %2477 = vmatpush1.msra.mxu0 0.0
    %2478 = vmatprep.subr.mxu0 0.0
    %2479 = vmatpush1.msra.mxu0 0.0
    %2480 = vmatprep.subr.mxu0 0.0
    %2481 = vmatpush1.msra.mxu0 0.0
    %2482 = vmatprep.subr.mxu0 0.0
    %2483 = vmatpush1.msra.mxu0 0.0
    %2484 = vmatprep.subr.mxu0 0.0
    %2485 = vmatpush1.msra.mxu0 0.0
    %2486 = vmatprep.subr.mxu0 0.0
    %2487 = vmatpush1.msra.mxu0 %v2466
    %2488 = vmatprep.subr.mxu0 0.0
    %2489 = vmatpush1.msra.mxu0 %v2465
    %2490 = vmatprep.subr.mxu0 0.0
    %2491 = vmatpush1.msra.mxu0 %v2464
    %2492 = vmatprep.subr.mxu0 0.0
    %2493 = vmatpush1.msra.mxu0 %v2463
    %2494 = vmatprep.subr.mxu0 0.0
    %2495 = vmatpush1.msra.mxu0 %v2462
    %2496 = vmatprep.subr.mxu0 0.0
    %2497 = vmatpush1.msra.mxu0 %v2461
    %2498 = vmatprep.subr.mxu0 0.0
    %2499 = vmatpush1.msra.mxu0 %v2460
    %2500 = vmatprep.subr.mxu0 0.0
    %2501 = vmatpush1.msra.mxu0 %v2459
    %2502 = vmatprep.subr.mxu0 0.0
    %2503 = vmatpush2.msra.mxu0 0.0
    %2504 = vmatprep.subr.mxu0 0.0
    %2505 = vmatpush2.msra.mxu0 0.0
    %2506 = vmatprep.subr.mxu0 0.0
    %2507 = vmatpush2.msra.mxu0 0.0
    %2508 = vmatprep.subr.mxu0 0.0
    %2509 = vmatpush2.msra.mxu0 0.0
    %2510 = vmatprep.subr.mxu0 0.0
    %2511 = vmatpush2.msra.mxu0 0.0
    %2512 = vmatprep.subr.mxu0 0.0
    %2513 = vmatpush2.msra.mxu0 0.0
    %2514 = vmatprep.subr.mxu0 0.0
    %2515 = vmatpush2.msra.mxu0 0.0
    %2516 = vmatprep.subr.mxu0 0.0
    %2517 = vmatpush2.msra.mxu0 0.0
    %2518 = vmatprep.subr.mxu0 0.0
    %2519 = vmatpush2.msra.mxu0 0.0
    %2520 = vmatprep.subr.mxu0 0.0
    %2521 = vmatpush2.msra.mxu0 0.0
    %2522 = vmatprep.subr.mxu0 0.0
    %2523 = vmatpush2.msra.mxu0 0.0
    %2524 = vmatprep.subr.mxu0 0.0
    %2525 = vmatpush2.msra.mxu0 0.0
    %2526 = vmatprep.subr.mxu0 0.0
    %2527 = vmatpush2.msra.mxu0 0.0
    %2528 = vmatprep.subr.mxu0 0.0
    %2529 = vmatpush2.msra.mxu0 0.0
    %2530 = vmatprep.subr.mxu0 0.0
    %2531 = vmatpush2.msra.mxu0 0.0
    %2532 = vmatprep.subr.mxu0 0.0
    %2533 = vmatpush2.msra.mxu0 0.0
    %2534 = vmatprep.mubr.f32.mxu0 0.0
    %2535 = vmatmul.mubr.f32.gmra.mxu0 %v2468
    %v2536 = vpop.f32.mrf.mxu0
    %v2537 = vadd.f32 0.0, %v2536
    %v2538 = vpop.f32.mrf.mxu0
    %2539 = vdwg.mxu0
    %v2540 = vadd.f32 %v2458, %v2537
    %v2541 = vld [vmem:[#allocation5 + $0x2c0] sm:$0xff]
    %v2542 = vld [vmem:[#allocation5 + $0x2c8] sm:$0xff]
    %v2543 = vld [vmem:[#allocation5 + $0x2d0] sm:$0xff]
    %v2544 = vld [vmem:[#allocation5 + $0x2d8] sm:$0xff]
    %v2545 = vld [vmem:[#allocation5 + $0x2e0] sm:$0xff]
    %v2546 = vld [vmem:[#allocation5 + $0x2e8] sm:$0xff]
    %v2547 = vld [vmem:[#allocation5 + $0x2f0] sm:$0xff]
    %v2548 = vld [vmem:[#allocation5 + $0x2f8] sm:$0xff]
    %v2550 = vsel %vm453, %v1613, 0
    %2552 = vmatprep.subr.mxu0 0.0
    %2553 = vmatpush1.msra.mxu0 0.0
    %2554 = vmatprep.subr.mxu0 0.0
    %2555 = vmatpush1.msra.mxu0 0.0
    %2556 = vmatprep.subr.mxu0 0.0
    %2557 = vmatpush1.msra.mxu0 0.0
    %2558 = vmatprep.subr.mxu0 0.0
    %2559 = vmatpush1.msra.mxu0 0.0
    %2560 = vmatprep.subr.mxu0 0.0
    %2561 = vmatpush1.msra.mxu0 0.0
    %2562 = vmatprep.subr.mxu0 0.0
    %2563 = vmatpush1.msra.mxu0 0.0
    %2564 = vmatprep.subr.mxu0 0.0
    %2565 = vmatpush1.msra.mxu0 0.0
    %2566 = vmatprep.subr.mxu0 0.0
    %2567 = vmatpush1.msra.mxu0 0.0
    %2568 = vmatprep.subr.mxu0 0.0
    %2569 = vmatpush1.msra.mxu0 %v2548
    %2570 = vmatprep.subr.mxu0 0.0
    %2571 = vmatpush1.msra.mxu0 %v2547
    %2572 = vmatprep.subr.mxu0 0.0
    %2573 = vmatpush1.msra.mxu0 %v2546
    %2574 = vmatprep.subr.mxu0 0.0
    %2575 = vmatpush1.msra.mxu0 %v2545
    %2576 = vmatprep.subr.mxu0 0.0
    %2577 = vmatpush1.msra.mxu0 %v2544
    %2578 = vmatprep.subr.mxu0 0.0
    %2579 = vmatpush1.msra.mxu0 %v2543
    %2580 = vmatprep.subr.mxu0 0.0
    %2581 = vmatpush1.msra.mxu0 %v2542
    %2582 = vmatprep.subr.mxu0 0.0
    %2583 = vmatpush1.msra.mxu0 %v2541
    %2584 = vmatprep.subr.mxu0 0.0
    %2585 = vmatpush2.msra.mxu0 0.0
    %2586 = vmatprep.subr.mxu0 0.0
    %2587 = vmatpush2.msra.mxu0 0.0
    %2588 = vmatprep.subr.mxu0 0.0
    %2589 = vmatpush2.msra.mxu0 0.0
    %2590 = vmatprep.subr.mxu0 0.0
    %2591 = vmatpush2.msra.mxu0 0.0
    %2592 = vmatprep.subr.mxu0 0.0
    %2593 = vmatpush2.msra.mxu0 0.0
    %2594 = vmatprep.subr.mxu0 0.0
    %2595 = vmatpush2.msra.mxu0 0.0
    %2596 = vmatprep.subr.mxu0 0.0
    %2597 = vmatpush2.msra.mxu0 0.0
    %2598 = vmatprep.subr.mxu0 0.0
    %2599 = vmatpush2.msra.mxu0 0.0
    %2600 = vmatprep.subr.mxu0 0.0
    %2601 = vmatpush2.msra.mxu0 0.0
    %2602 = vmatprep.subr.mxu0 0.0
    %2603 = vmatpush2.msra.mxu0 0.0
    %2604 = vmatprep.subr.mxu0 0.0
    %2605 = vmatpush2.msra.mxu0 0.0
    %2606 = vmatprep.subr.mxu0 0.0
    %2607 = vmatpush2.msra.mxu0 0.0
    %2608 = vmatprep.subr.mxu0 0.0
    %2609 = vmatpush2.msra.mxu0 0.0
    %2610 = vmatprep.subr.mxu0 0.0
    %2611 = vmatpush2.msra.mxu0 0.0
    %2612 = vmatprep.subr.mxu0 0.0
    %2613 = vmatpush2.msra.mxu0 0.0
    %2614 = vmatprep.subr.mxu0 0.0
    %2615 = vmatpush2.msra.mxu0 0.0
    %2616 = vmatprep.mubr.f32.mxu0 0.0
    %2617 = vmatmul.mubr.f32.gmra.mxu0 %v2550
    %v2618 = vpop.f32.mrf.mxu0
    %v2619 = vadd.f32 0.0, %v2618
    %v2620 = vpop.f32.mrf.mxu0
    %2621 = vdwg.mxu0
    %v2622 = vadd.f32 %v2540, %v2619
    %v2623 = vld [vmem:[#allocation5 + $0x300] sm:$0xff]
    %v2624 = vld [vmem:[#allocation5 + $0x308] sm:$0xff]
    %v2625 = vld [vmem:[#allocation5 + $0x310] sm:$0xff]
    %v2626 = vld [vmem:[#allocation5 + $0x318] sm:$0xff]
    %v2627 = vld [vmem:[#allocation5 + $0x320] sm:$0xff]
    %v2628 = vld [vmem:[#allocation5 + $0x328] sm:$0xff]
    %v2629 = vld [vmem:[#allocation5 + $0x330] sm:$0xff]
    %v2630 = vld [vmem:[#allocation5 + $0x338] sm:$0xff]
    %v2632 = vsel %vm453, %v1614, 0
    %2634 = vmatprep.subr.mxu0 0.0
    %2635 = vmatpush1.msra.mxu0 0.0
    %2636 = vmatprep.subr.mxu0 0.0
    %2637 = vmatpush1.msra.mxu0 0.0
    %2638 = vmatprep.subr.mxu0 0.0
    %2639 = vmatpush1.msra.mxu0 0.0
    %2640 = vmatprep.subr.mxu0 0.0
    %2641 = vmatpush1.msra.mxu0 0.0
    %2642 = vmatprep.subr.mxu0 0.0
    %2643 = vmatpush1.msra.mxu0 0.0
    %2644 = vmatprep.subr.mxu0 0.0
    %2645 = vmatpush1.msra.mxu0 0.0
    %2646 = vmatprep.subr.mxu0 0.0
    %2647 = vmatpush1.msra.mxu0 0.0
    %2648 = vmatprep.subr.mxu0 0.0
    %2649 = vmatpush1.msra.mxu0 0.0
    %2650 = vmatprep.subr.mxu0 0.0
    %2651 = vmatpush1.msra.mxu0 %v2630
    %2652 = vmatprep.subr.mxu0 0.0
    %2653 = vmatpush1.msra.mxu0 %v2629
    %2654 = vmatprep.subr.mxu0 0.0
    %2655 = vmatpush1.msra.mxu0 %v2628
    %2656 = vmatprep.subr.mxu0 0.0
    %2657 = vmatpush1.msra.mxu0 %v2627
    %2658 = vmatprep.subr.mxu0 0.0
    %2659 = vmatpush1.msra.mxu0 %v2626
    %2660 = vmatprep.subr.mxu0 0.0
    %2661 = vmatpush1.msra.mxu0 %v2625
    %2662 = vmatprep.subr.mxu0 0.0
    %2663 = vmatpush1.msra.mxu0 %v2624
    %2664 = vmatprep.subr.mxu0 0.0
    %2665 = vmatpush1.msra.mxu0 %v2623
    %2666 = vmatprep.subr.mxu0 0.0
    %2667 = vmatpush2.msra.mxu0 0.0
    %2668 = vmatprep.subr.mxu0 0.0
    %2669 = vmatpush2.msra.mxu0 0.0
    %2670 = vmatprep.subr.mxu0 0.0
    %2671 = vmatpush2.msra.mxu0 0.0
    %2672 = vmatprep.subr.mxu0 0.0
    %2673 = vmatpush2.msra.mxu0 0.0
    %2674 = vmatprep.subr.mxu0 0.0
    %2675 = vmatpush2.msra.mxu0 0.0
    %2676 = vmatprep.subr.mxu0 0.0
    %2677 = vmatpush2.msra.mxu0 0.0
    %2678 = vmatprep.subr.mxu0 0.0
    %2679 = vmatpush2.msra.mxu0 0.0
    %2680 = vmatprep.subr.mxu0 0.0
    %2681 = vmatpush2.msra.mxu0 0.0
    %2682 = vmatprep.subr.mxu0 0.0
    %2683 = vmatpush2.msra.mxu0 0.0
    %2684 = vmatprep.subr.mxu0 0.0
    %2685 = vmatpush2.msra.mxu0 0.0
    %2686 = vmatprep.subr.mxu0 0.0
    %2687 = vmatpush2.msra.mxu0 0.0
    %2688 = vmatprep.subr.mxu0 0.0
    %2689 = vmatpush2.msra.mxu0 0.0
    %2690 = vmatprep.subr.mxu0 0.0
    %2691 = vmatpush2.msra.mxu0 0.0
    %2692 = vmatprep.subr.mxu0 0.0
    %2693 = vmatpush2.msra.mxu0 0.0
    %2694 = vmatprep.subr.mxu0 0.0
    %2695 = vmatpush2.msra.mxu0 0.0
    %2696 = vmatprep.subr.mxu0 0.0
    %2697 = vmatpush2.msra.mxu0 0.0
    %2698 = vmatprep.mubr.f32.mxu0 0.0
    %2699 = vmatmul.mubr.f32.gmra.mxu0 %v2632
    %v2700 = vpop.f32.mrf.mxu0
    %v2701 = vadd.f32 0.0, %v2700
    %v2702 = vpop.f32.mrf.mxu0
    %2703 = vdwg.mxu0
    %v2704 = vadd.f32 %v2622, %v2701
    %v2705 = vld [vmem:[#allocation5 + $0x340] sm:$0xff]
    %v2706 = vld [vmem:[#allocation5 + $0x348] sm:$0xff]
    %v2707 = vld [vmem:[#allocation5 + $0x350] sm:$0xff]
    %v2708 = vld [vmem:[#allocation5 + $0x358] sm:$0xff]
    %v2709 = vld [vmem:[#allocation5 + $0x360] sm:$0xff]
    %v2710 = vld [vmem:[#allocation5 + $0x368] sm:$0xff]
    %v2711 = vld [vmem:[#allocation5 + $0x370] sm:$0xff]
    %v2712 = vld [vmem:[#allocation5 + $0x378] sm:$0xff]
    %v2714 = vsel %vm453, %v1615, 0
    %2716 = vmatprep.subr.mxu0 0.0
    %2717 = vmatpush1.msra.mxu0 0.0
    %2718 = vmatprep.subr.mxu0 0.0
    %2719 = vmatpush1.msra.mxu0 0.0
    %2720 = vmatprep.subr.mxu0 0.0
    %2721 = vmatpush1.msra.mxu0 0.0
    %2722 = vmatprep.subr.mxu0 0.0
    %2723 = vmatpush1.msra.mxu0 0.0
    %2724 = vmatprep.subr.mxu0 0.0
    %2725 = vmatpush1.msra.mxu0 0.0
    %2726 = vmatprep.subr.mxu0 0.0
    %2727 = vmatpush1.msra.mxu0 0.0
    %2728 = vmatprep.subr.mxu0 0.0
    %2729 = vmatpush1.msra.mxu0 0.0
    %2730 = vmatprep.subr.mxu0 0.0
    %2731 = vmatpush1.msra.mxu0 0.0
    %2732 = vmatprep.subr.mxu0 0.0
    %2733 = vmatpush1.msra.mxu0 %v2712
    %2734 = vmatprep.subr.mxu0 0.0
    %2735 = vmatpush1.msra.mxu0 %v2711
    %2736 = vmatprep.subr.mxu0 0.0
    %2737 = vmatpush1.msra.mxu0 %v2710
    %2738 = vmatprep.subr.mxu0 0.0
    %2739 = vmatpush1.msra.mxu0 %v2709
    %2740 = vmatprep.subr.mxu0 0.0
    %2741 = vmatpush1.msra.mxu0 %v2708
    %2742 = vmatprep.subr.mxu0 0.0
    %2743 = vmatpush1.msra.mxu0 %v2707
    %2744 = vmatprep.subr.mxu0 0.0
    %2745 = vmatpush1.msra.mxu0 %v2706
    %2746 = vmatprep.subr.mxu0 0.0
    %2747 = vmatpush1.msra.mxu0 %v2705
    %2748 = vmatprep.subr.mxu0 0.0
    %2749 = vmatpush2.msra.mxu0 0.0
    %2750 = vmatprep.subr.mxu0 0.0
    %2751 = vmatpush2.msra.mxu0 0.0
    %2752 = vmatprep.subr.mxu0 0.0
    %2753 = vmatpush2.msra.mxu0 0.0
    %2754 = vmatprep.subr.mxu0 0.0
    %2755 = vmatpush2.msra.mxu0 0.0
    %2756 = vmatprep.subr.mxu0 0.0
    %2757 = vmatpush2.msra.mxu0 0.0
    %2758 = vmatprep.subr.mxu0 0.0
    %2759 = vmatpush2.msra.mxu0 0.0
    %2760 = vmatprep.subr.mxu0 0.0
    %2761 = vmatpush2.msra.mxu0 0.0
    %2762 = vmatprep.subr.mxu0 0.0
    %2763 = vmatpush2.msra.mxu0 0.0
    %2764 = vmatprep.subr.mxu0 0.0
    %2765 = vmatpush2.msra.mxu0 0.0
    %2766 = vmatprep.subr.mxu0 0.0
    %2767 = vmatpush2.msra.mxu0 0.0
    %2768 = vmatprep.subr.mxu0 0.0
    %2769 = vmatpush2.msra.mxu0 0.0
    %2770 = vmatprep.subr.mxu0 0.0
    %2771 = vmatpush2.msra.mxu0 0.0
    %2772 = vmatprep.subr.mxu0 0.0
    %2773 = vmatpush2.msra.mxu0 0.0
    %2774 = vmatprep.subr.mxu0 0.0
    %2775 = vmatpush2.msra.mxu0 0.0
    %2776 = vmatprep.subr.mxu0 0.0
    %2777 = vmatpush2.msra.mxu0 0.0
    %2778 = vmatprep.subr.mxu0 0.0
    %2779 = vmatpush2.msra.mxu0 0.0
    %2780 = vmatprep.mubr.f32.mxu0 0.0
    %2781 = vmatmul.mubr.f32.gmra.mxu0 %v2714
    %v2782 = vpop.f32.mrf.mxu0
    %v2783 = vadd.f32 0.0, %v2782
    %v2784 = vpop.f32.mrf.mxu0
    %2785 = vdwg.mxu0
    %v2786 = vadd.f32 %v2704, %v2783
    %v2787 = vld [vmem:[#allocation5 + $0x380] sm:$0xff]
    %v2788 = vld [vmem:[#allocation5 + $0x388] sm:$0xff]
    %v2789 = vld [vmem:[#allocation5 + $0x390] sm:$0xff]
    %v2790 = vld [vmem:[#allocation5 + $0x398] sm:$0xff]
    %v2791 = vld [vmem:[#allocation5 + $0x3a0] sm:$0xff]
    %v2792 = vld [vmem:[#allocation5 + $0x3a8] sm:$0xff]
    %v2793 = vld [vmem:[#allocation5 + $0x3b0] sm:$0xff]
    %v2794 = vld [vmem:[#allocation5 + $0x3b8] sm:$0xff]
    %v2796 = vsel %vm453, %v1616, 0
    %2798 = vmatprep.subr.mxu0 0.0
    %2799 = vmatpush1.msra.mxu0 0.0
    %2800 = vmatprep.subr.mxu0 0.0
    %2801 = vmatpush1.msra.mxu0 0.0
    %2802 = vmatprep.subr.mxu0 0.0
    %2803 = vmatpush1.msra.mxu0 0.0
    %2804 = vmatprep.subr.mxu0 0.0
    %2805 = vmatpush1.msra.mxu0 0.0
    %2806 = vmatprep.subr.mxu0 0.0
    %2807 = vmatpush1.msra.mxu0 0.0
    %2808 = vmatprep.subr.mxu0 0.0
    %2809 = vmatpush1.msra.mxu0 0.0
    %2810 = vmatprep.subr.mxu0 0.0
    %2811 = vmatpush1.msra.mxu0 0.0
    %2812 = vmatprep.subr.mxu0 0.0
    %2813 = vmatpush1.msra.mxu0 0.0
    %2814 = vmatprep.subr.mxu0 0.0
    %2815 = vmatpush1.msra.mxu0 %v2794
    %2816 = vmatprep.subr.mxu0 0.0
    %2817 = vmatpush1.msra.mxu0 %v2793
    %2818 = vmatprep.subr.mxu0 0.0
    %2819 = vmatpush1.msra.mxu0 %v2792
    %2820 = vmatprep.subr.mxu0 0.0
    %2821 = vmatpush1.msra.mxu0 %v2791
    %2822 = vmatprep.subr.mxu0 0.0
    %2823 = vmatpush1.msra.mxu0 %v2790
    %2824 = vmatprep.subr.mxu0 0.0
    %2825 = vmatpush1.msra.mxu0 %v2789
    %2826 = vmatprep.subr.mxu0 0.0
    %2827 = vmatpush1.msra.mxu0 %v2788
    %2828 = vmatprep.subr.mxu0 0.0
    %2829 = vmatpush1.msra.mxu0 %v2787
    %2830 = vmatprep.subr.mxu0 0.0
    %2831 = vmatpush2.msra.mxu0 0.0
    %2832 = vmatprep.subr.mxu0 0.0
    %2833 = vmatpush2.msra.mxu0 0.0
    %2834 = vmatprep.subr.mxu0 0.0
    %2835 = vmatpush2.msra.mxu0 0.0
    %2836 = vmatprep.subr.mxu0 0.0
    %2837 = vmatpush2.msra.mxu0 0.0
    %2838 = vmatprep.subr.mxu0 0.0
    %2839 = vmatpush2.msra.mxu0 0.0
    %2840 = vmatprep.subr.mxu0 0.0
    %2841 = vmatpush2.msra.mxu0 0.0
    %2842 = vmatprep.subr.mxu0 0.0
    %2843 = vmatpush2.msra.mxu0 0.0
    %2844 = vmatprep.subr.mxu0 0.0
    %2845 = vmatpush2.msra.mxu0 0.0
    %2846 = vmatprep.subr.mxu0 0.0
    %2847 = vmatpush2.msra.mxu0 0.0
    %2848 = vmatprep.subr.mxu0 0.0
    %2849 = vmatpush2.msra.mxu0 0.0
    %2850 = vmatprep.subr.mxu0 0.0
    %2851 = vmatpush2.msra.mxu0 0.0
    %2852 = vmatprep.subr.mxu0 0.0
    %2853 = vmatpush2.msra.mxu0 0.0
    %2854 = vmatprep.subr.mxu0 0.0
    %2855 = vmatpush2.msra.mxu0 0.0
    %2856 = vmatprep.subr.mxu0 0.0
    %2857 = vmatpush2.msra.mxu0 0.0
    %2858 = vmatprep.subr.mxu0 0.0
    %2859 = vmatpush2.msra.mxu0 0.0
    %2860 = vmatprep.subr.mxu0 0.0
    %2861 = vmatpush2.msra.mxu0 0.0
    %2862 = vmatprep.mubr.f32.mxu0 0.0
    %2863 = vmatmul.mubr.f32.gmra.mxu0 %v2796
    %v2864 = vpop.f32.mrf.mxu0
    %v2865 = vadd.f32 0.0, %v2864
    %v2866 = vpop.f32.mrf.mxu0
    %2867 = vdwg.mxu0
    %v2868 = vadd.f32 %v2786, %v2865
    %v2869 = vld [vmem:[#allocation5 + $0x3c0] sm:$0xff]
    %v2870 = vld [vmem:[#allocation5 + $0x3c8] sm:$0xff]
    %v2871 = vld [vmem:[#allocation5 + $0x3d0] sm:$0xff]
    %v2872 = vld [vmem:[#allocation5 + $0x3d8] sm:$0xff]
    %v2873 = vld [vmem:[#allocation5 + $0x3e0] sm:$0xff]
    %v2874 = vld [vmem:[#allocation5 + $0x3e8] sm:$0xff]
    %v2875 = vld [vmem:[#allocation5 + $0x3f0] sm:$0xff]
    %v2876 = vld [vmem:[#allocation5 + $0x3f8] sm:$0xff]
    %v2878 = vsel %vm453, %v1617, 0
    %2880 = vmatprep.subr.mxu0 0.0
    %2881 = vmatpush1.msra.mxu0 0.0
    %2882 = vmatprep.subr.mxu0 0.0
    %2883 = vmatpush1.msra.mxu0 0.0
    %2884 = vmatprep.subr.mxu0 0.0
    %2885 = vmatpush1.msra.mxu0 0.0
    %2886 = vmatprep.subr.mxu0 0.0
    %2887 = vmatpush1.msra.mxu0 0.0
    %2888 = vmatprep.subr.mxu0 0.0
    %2889 = vmatpush1.msra.mxu0 0.0
    %2890 = vmatprep.subr.mxu0 0.0
    %2891 = vmatpush1.msra.mxu0 0.0
    %2892 = vmatprep.subr.mxu0 0.0
    %2893 = vmatpush1.msra.mxu0 0.0
    %2894 = vmatprep.subr.mxu0 0.0
    %2895 = vmatpush1.msra.mxu0 0.0
    %2896 = vmatprep.subr.mxu0 0.0
    %2897 = vmatpush1.msra.mxu0 %v2876
    %2898 = vmatprep.subr.mxu0 0.0
    %2899 = vmatpush1.msra.mxu0 %v2875
    %2900 = vmatprep.subr.mxu0 0.0
    %2901 = vmatpush1.msra.mxu0 %v2874
    %2902 = vmatprep.subr.mxu0 0.0
    %2903 = vmatpush1.msra.mxu0 %v2873
    %2904 = vmatprep.subr.mxu0 0.0
    %2905 = vmatpush1.msra.mxu0 %v2872
    %2906 = vmatprep.subr.mxu0 0.0
    %2907 = vmatpush1.msra.mxu0 %v2871
    %2908 = vmatprep.subr.mxu0 0.0
    %2909 = vmatpush1.msra.mxu0 %v2870
    %2910 = vmatprep.subr.mxu0 0.0
    %2911 = vmatpush1.msra.mxu0 %v2869
    %2912 = vmatprep.subr.mxu0 0.0
    %2913 = vmatpush2.msra.mxu0 0.0
    %2914 = vmatprep.subr.mxu0 0.0
    %2915 = vmatpush2.msra.mxu0 0.0
    %2916 = vmatprep.subr.mxu0 0.0
    %2917 = vmatpush2.msra.mxu0 0.0
    %2918 = vmatprep.subr.mxu0 0.0
    %2919 = vmatpush2.msra.mxu0 0.0
    %2920 = vmatprep.subr.mxu0 0.0
    %2921 = vmatpush2.msra.mxu0 0.0
    %2922 = vmatprep.subr.mxu0 0.0
    %2923 = vmatpush2.msra.mxu0 0.0
    %2924 = vmatprep.subr.mxu0 0.0
    %2925 = vmatpush2.msra.mxu0 0.0
    %2926 = vmatprep.subr.mxu0 0.0
    %2927 = vmatpush2.msra.mxu0 0.0
    %2928 = vmatprep.subr.mxu0 0.0
    %2929 = vmatpush2.msra.mxu0 0.0
    %2930 = vmatprep.subr.mxu0 0.0
    %2931 = vmatpush2.msra.mxu0 0.0
    %2932 = vmatprep.subr.mxu0 0.0
    %2933 = vmatpush2.msra.mxu0 0.0
    %2934 = vmatprep.subr.mxu0 0.0
    %2935 = vmatpush2.msra.mxu0 0.0
    %2936 = vmatprep.subr.mxu0 0.0
    %2937 = vmatpush2.msra.mxu0 0.0
    %2938 = vmatprep.subr.mxu0 0.0
    %2939 = vmatpush2.msra.mxu0 0.0
    %2940 = vmatprep.subr.mxu0 0.0
    %2941 = vmatpush2.msra.mxu0 0.0
    %2942 = vmatprep.subr.mxu0 0.0
    %2943 = vmatpush2.msra.mxu0 0.0
    %2944 = vmatprep.mubr.f32.mxu0 0.0
    %2945 = vmatmul.mubr.f32.gmra.mxu0 %v2878
    %v2946 = vpop.f32.mrf.mxu0
    %v2947 = vadd.f32 0.0, %v2946
    %v2948 = vpop.f32.mrf.mxu0
    %2949 = vdwg.mxu0
    %v2950 = vadd.f32 %v2868, %v2947
    %v2951 = vld [vmem:[#allocation5 + $0x400] sm:$0xff]
    %v2952 = vld [vmem:[#allocation5 + $0x408] sm:$0xff]
    %v2953 = vld [vmem:[#allocation5 + $0x410] sm:$0xff]
    %v2954 = vld [vmem:[#allocation5 + $0x418] sm:$0xff]
    %v2955 = vld [vmem:[#allocation5 + $0x420] sm:$0xff]
    %v2956 = vld [vmem:[#allocation5 + $0x428] sm:$0xff]
    %v2957 = vld [vmem:[#allocation5 + $0x430] sm:$0xff]
    %v2958 = vld [vmem:[#allocation5 + $0x438] sm:$0xff]
    %v2960 = vsel %vm453, %v1618, 0
    %2962 = vmatprep.subr.mxu0 0.0
    %2963 = vmatpush1.msra.mxu0 0.0
    %2964 = vmatprep.subr.mxu0 0.0
    %2965 = vmatpush1.msra.mxu0 0.0
    %2966 = vmatprep.subr.mxu0 0.0
    %2967 = vmatpush1.msra.mxu0 0.0
    %2968 = vmatprep.subr.mxu0 0.0
    %2969 = vmatpush1.msra.mxu0 0.0
    %2970 = vmatprep.subr.mxu0 0.0
    %2971 = vmatpush1.msra.mxu0 0.0
    %2972 = vmatprep.subr.mxu0 0.0
    %2973 = vmatpush1.msra.mxu0 0.0
    %2974 = vmatprep.subr.mxu0 0.0
    %2975 = vmatpush1.msra.mxu0 0.0
    %2976 = vmatprep.subr.mxu0 0.0
    %2977 = vmatpush1.msra.mxu0 0.0
    %2978 = vmatprep.subr.mxu0 0.0
    %2979 = vmatpush1.msra.mxu0 %v2958
    %2980 = vmatprep.subr.mxu0 0.0
    %2981 = vmatpush1.msra.mxu0 %v2957
    %2982 = vmatprep.subr.mxu0 0.0
    %2983 = vmatpush1.msra.mxu0 %v2956
    %2984 = vmatprep.subr.mxu0 0.0
    %2985 = vmatpush1.msra.mxu0 %v2955
    %2986 = vmatprep.subr.mxu0 0.0
    %2987 = vmatpush1.msra.mxu0 %v2954
    %2988 = vmatprep.subr.mxu0 0.0
    %2989 = vmatpush1.msra.mxu0 %v2953
    %2990 = vmatprep.subr.mxu0 0.0
    %2991 = vmatpush1.msra.mxu0 %v2952
    %2992 = vmatprep.subr.mxu0 0.0
    %2993 = vmatpush1.msra.mxu0 %v2951
    %2994 = vmatprep.subr.mxu0 0.0
    %2995 = vmatpush2.msra.mxu0 0.0
    %2996 = vmatprep.subr.mxu0 0.0
    %2997 = vmatpush2.msra.mxu0 0.0
    %2998 = vmatprep.subr.mxu0 0.0
    %2999 = vmatpush2.msra.mxu0 0.0
    %3000 = vmatprep.subr.mxu0 0.0
    %3001 = vmatpush2.msra.mxu0 0.0
    %3002 = vmatprep.subr.mxu0 0.0
    %3003 = vmatpush2.msra.mxu0 0.0
    %3004 = vmatprep.subr.mxu0 0.0
    %3005 = vmatpush2.msra.mxu0 0.0
    %3006 = vmatprep.subr.mxu0 0.0
    %3007 = vmatpush2.msra.mxu0 0.0
    %3008 = vmatprep.subr.mxu0 0.0
    %3009 = vmatpush2.msra.mxu0 0.0
    %3010 = vmatprep.subr.mxu0 0.0
    %3011 = vmatpush2.msra.mxu0 0.0
    %3012 = vmatprep.subr.mxu0 0.0
    %3013 = vmatpush2.msra.mxu0 0.0
    %3014 = vmatprep.subr.mxu0 0.0
    %3015 = vmatpush2.msra.mxu0 0.0
    %3016 = vmatprep.subr.mxu0 0.0
    %3017 = vmatpush2.msra.mxu0 0.0
    %3018 = vmatprep.subr.mxu0 0.0
    %3019 = vmatpush2.msra.mxu0 0.0
    %3020 = vmatprep.subr.mxu0 0.0
    %3021 = vmatpush2.msra.mxu0 0.0
    %3022 = vmatprep.subr.mxu0 0.0
    %3023 = vmatpush2.msra.mxu0 0.0
    %3024 = vmatprep.subr.mxu0 0.0
    %3025 = vmatpush2.msra.mxu0 0.0
    %3026 = vmatprep.mubr.f32.mxu0 0.0
    %3027 = vmatmul.mubr.f32.gmra.mxu0 %v2960
    %v3028 = vpop.f32.mrf.mxu0
    %v3029 = vadd.f32 0.0, %v3028
    %v3030 = vpop.f32.mrf.mxu0
    %3031 = vdwg.mxu0
    %v3032 = vadd.f32 %v2950, %v3029
    %v3033 = vld [vmem:[#allocation5 + $0x440] sm:$0xff]
    %v3034 = vld [vmem:[#allocation5 + $0x448] sm:$0xff]
    %v3035 = vld [vmem:[#allocation5 + $0x450] sm:$0xff]
    %v3036 = vld [vmem:[#allocation5 + $0x458] sm:$0xff]
    %v3037 = vld [vmem:[#allocation5 + $0x460] sm:$0xff]
    %v3038 = vld [vmem:[#allocation5 + $0x468] sm:$0xff]
    %v3039 = vld [vmem:[#allocation5 + $0x470] sm:$0xff]
    %v3040 = vld [vmem:[#allocation5 + $0x478] sm:$0xff]
    %v3042 = vsel %vm453, %v1619, 0
    %3044 = vmatprep.subr.mxu0 0.0
    %3045 = vmatpush1.msra.mxu0 0.0
    %3046 = vmatprep.subr.mxu0 0.0
    %3047 = vmatpush1.msra.mxu0 0.0
    %3048 = vmatprep.subr.mxu0 0.0
    %3049 = vmatpush1.msra.mxu0 0.0
    %3050 = vmatprep.subr.mxu0 0.0
    %3051 = vmatpush1.msra.mxu0 0.0
    %3052 = vmatprep.subr.mxu0 0.0
    %3053 = vmatpush1.msra.mxu0 0.0
    %3054 = vmatprep.subr.mxu0 0.0
    %3055 = vmatpush1.msra.mxu0 0.0
    %3056 = vmatprep.subr.mxu0 0.0
    %3057 = vmatpush1.msra.mxu0 0.0
    %3058 = vmatprep.subr.mxu0 0.0
    %3059 = vmatpush1.msra.mxu0 0.0
    %3060 = vmatprep.subr.mxu0 0.0
    %3061 = vmatpush1.msra.mxu0 %v3040
    %3062 = vmatprep.subr.mxu0 0.0
    %3063 = vmatpush1.msra.mxu0 %v3039
    %3064 = vmatprep.subr.mxu0 0.0
    %3065 = vmatpush1.msra.mxu0 %v3038
    %3066 = vmatprep.subr.mxu0 0.0
    %3067 = vmatpush1.msra.mxu0 %v3037
    %3068 = vmatprep.subr.mxu0 0.0
    %3069 = vmatpush1.msra.mxu0 %v3036
    %3070 = vmatprep.subr.mxu0 0.0
    %3071 = vmatpush1.msra.mxu0 %v3035
    %3072 = vmatprep.subr.mxu0 0.0
    %3073 = vmatpush1.msra.mxu0 %v3034
    %3074 = vmatprep.subr.mxu0 0.0
    %3075 = vmatpush1.msra.mxu0 %v3033
    %3076 = vmatprep.subr.mxu0 0.0
    %3077 = vmatpush2.msra.mxu0 0.0
    %3078 = vmatprep.subr.mxu0 0.0
    %3079 = vmatpush2.msra.mxu0 0.0
    %3080 = vmatprep.subr.mxu0 0.0
    %3081 = vmatpush2.msra.mxu0 0.0
    %3082 = vmatprep.subr.mxu0 0.0
    %3083 = vmatpush2.msra.mxu0 0.0
    %3084 = vmatprep.subr.mxu0 0.0
    %3085 = vmatpush2.msra.mxu0 0.0
    %3086 = vmatprep.subr.mxu0 0.0
    %3087 = vmatpush2.msra.mxu0 0.0
    %3088 = vmatprep.subr.mxu0 0.0
    %3089 = vmatpush2.msra.mxu0 0.0
    %3090 = vmatprep.subr.mxu0 0.0
    %3091 = vmatpush2.msra.mxu0 0.0
    %3092 = vmatprep.subr.mxu0 0.0
    %3093 = vmatpush2.msra.mxu0 0.0
    %3094 = vmatprep.subr.mxu0 0.0
    %3095 = vmatpush2.msra.mxu0 0.0
    %3096 = vmatprep.subr.mxu0 0.0
    %3097 = vmatpush2.msra.mxu0 0.0
    %3098 = vmatprep.subr.mxu0 0.0
    %3099 = vmatpush2.msra.mxu0 0.0
    %3100 = vmatprep.subr.mxu0 0.0
    %3101 = vmatpush2.msra.mxu0 0.0
    %3102 = vmatprep.subr.mxu0 0.0
    %3103 = vmatpush2.msra.mxu0 0.0
    %3104 = vmatprep.subr.mxu0 0.0
    %3105 = vmatpush2.msra.mxu0 0.0
    %3106 = vmatprep.subr.mxu0 0.0
    %3107 = vmatpush2.msra.mxu0 0.0
    %3108 = vmatprep.mubr.f32.mxu0 0.0
    %3109 = vmatmul.mubr.f32.gmra.mxu0 %v3042
    %v3110 = vpop.f32.mrf.mxu0
    %v3111 = vadd.f32 0.0, %v3110
    %v3112 = vpop.f32.mrf.mxu0
    %3113 = vdwg.mxu0
    %v3114 = vadd.f32 %v3032, %v3111
    %v3115 = vld [vmem:[#allocation5 + $0x480] sm:$0xff]
    %v3116 = vld [vmem:[#allocation5 + $0x488] sm:$0xff]
    %v3117 = vld [vmem:[#allocation5 + $0x490] sm:$0xff]
    %v3118 = vld [vmem:[#allocation5 + $0x498] sm:$0xff]
    %v3119 = vld [vmem:[#allocation5 + $0x4a0] sm:$0xff]
    %v3120 = vld [vmem:[#allocation5 + $0x4a8] sm:$0xff]
    %v3121 = vld [vmem:[#allocation5 + $0x4b0] sm:$0xff]
    %v3122 = vld [vmem:[#allocation5 + $0x4b8] sm:$0xff]
    %v3124 = vsel %vm453, %v1620, 0
    %3126 = vmatprep.subr.mxu0 0.0
    %3127 = vmatpush1.msra.mxu0 0.0
    %3128 = vmatprep.subr.mxu0 0.0
    %3129 = vmatpush1.msra.mxu0 0.0
    %3130 = vmatprep.subr.mxu0 0.0
    %3131 = vmatpush1.msra.mxu0 0.0
    %3132 = vmatprep.subr.mxu0 0.0
    %3133 = vmatpush1.msra.mxu0 0.0
    %3134 = vmatprep.subr.mxu0 0.0
    %3135 = vmatpush1.msra.mxu0 0.0
    %3136 = vmatprep.subr.mxu0 0.0
    %3137 = vmatpush1.msra.mxu0 0.0
    %3138 = vmatprep.subr.mxu0 0.0
    %3139 = vmatpush1.msra.mxu0 0.0
    %3140 = vmatprep.subr.mxu0 0.0
    %3141 = vmatpush1.msra.mxu0 0.0
    %3142 = vmatprep.subr.mxu0 0.0
    %3143 = vmatpush1.msra.mxu0 %v3122
    %3144 = vmatprep.subr.mxu0 0.0
    %3145 = vmatpush1.msra.mxu0 %v3121
    %3146 = vmatprep.subr.mxu0 0.0
    %3147 = vmatpush1.msra.mxu0 %v3120
    %3148 = vmatprep.subr.mxu0 0.0
    %3149 = vmatpush1.msra.mxu0 %v3119
    %3150 = vmatprep.subr.mxu0 0.0
    %3151 = vmatpush1.msra.mxu0 %v3118
    %3152 = vmatprep.subr.mxu0 0.0
    %3153 = vmatpush1.msra.mxu0 %v3117
    %3154 = vmatprep.subr.mxu0 0.0
    %3155 = vmatpush1.msra.mxu0 %v3116
    %3156 = vmatprep.subr.mxu0 0.0
    %3157 = vmatpush1.msra.mxu0 %v3115
    %3158 = vmatprep.subr.mxu0 0.0
    %3159 = vmatpush2.msra.mxu0 0.0
    %3160 = vmatprep.subr.mxu0 0.0
    %3161 = vmatpush2.msra.mxu0 0.0
    %3162 = vmatprep.subr.mxu0 0.0
    %3163 = vmatpush2.msra.mxu0 0.0
    %3164 = vmatprep.subr.mxu0 0.0
    %3165 = vmatpush2.msra.mxu0 0.0
    %3166 = vmatprep.subr.mxu0 0.0
    %3167 = vmatpush2.msra.mxu0 0.0
    %3168 = vmatprep.subr.mxu0 0.0
    %3169 = vmatpush2.msra.mxu0 0.0
    %3170 = vmatprep.subr.mxu0 0.0
    %3171 = vmatpush2.msra.mxu0 0.0
    %3172 = vmatprep.subr.mxu0 0.0
    %3173 = vmatpush2.msra.mxu0 0.0
    %3174 = vmatprep.subr.mxu0 0.0
    %3175 = vmatpush2.msra.mxu0 0.0
    %3176 = vmatprep.subr.mxu0 0.0
    %3177 = vmatpush2.msra.mxu0 0.0
    %3178 = vmatprep.subr.mxu0 0.0
    %3179 = vmatpush2.msra.mxu0 0.0
    %3180 = vmatprep.subr.mxu0 0.0
    %3181 = vmatpush2.msra.mxu0 0.0
    %3182 = vmatprep.subr.mxu0 0.0
    %3183 = vmatpush2.msra.mxu0 0.0
    %3184 = vmatprep.subr.mxu0 0.0
    %3185 = vmatpush2.msra.mxu0 0.0
    %3186 = vmatprep.subr.mxu0 0.0
    %3187 = vmatpush2.msra.mxu0 0.0
    %3188 = vmatprep.subr.mxu0 0.0
    %3189 = vmatpush2.msra.mxu0 0.0
    %3190 = vmatprep.mubr.f32.mxu0 0.0
    %3191 = vmatmul.mubr.f32.gmra.mxu0 %v3124
    %v3192 = vpop.f32.mrf.mxu0
    %v3193 = vadd.f32 0.0, %v3192
    %v3194 = vpop.f32.mrf.mxu0
    %3195 = vdwg.mxu0
    %v3196 = vadd.f32 %v3114, %v3193
    %v3197 = vld [vmem:[#allocation5 + $0x4c0] sm:$0xff]
    %v3198 = vld [vmem:[#allocation5 + $0x4c8] sm:$0xff]
    %v3199 = vld [vmem:[#allocation5 + $0x4d0] sm:$0xff]
    %v3200 = vld [vmem:[#allocation5 + $0x4d8] sm:$0xff]
    %v3201 = vld [vmem:[#allocation5 + $0x4e0] sm:$0xff]
    %v3202 = vld [vmem:[#allocation5 + $0x4e8] sm:$0xff]
    %v3203 = vld [vmem:[#allocation5 + $0x4f0] sm:$0xff]
    %v3204 = vld [vmem:[#allocation5 + $0x4f8] sm:$0xff]
    %v3206 = vsel %vm453, %v1621, 0
    %3208 = vmatprep.subr.mxu0 0.0
    %3209 = vmatpush1.msra.mxu0 0.0
    %3210 = vmatprep.subr.mxu0 0.0
    %3211 = vmatpush1.msra.mxu0 0.0
    %3212 = vmatprep.subr.mxu0 0.0
    %3213 = vmatpush1.msra.mxu0 0.0
    %3214 = vmatprep.subr.mxu0 0.0
    %3215 = vmatpush1.msra.mxu0 0.0
    %3216 = vmatprep.subr.mxu0 0.0
    %3217 = vmatpush1.msra.mxu0 0.0
    %3218 = vmatprep.subr.mxu0 0.0
    %3219 = vmatpush1.msra.mxu0 0.0
    %3220 = vmatprep.subr.mxu0 0.0
    %3221 = vmatpush1.msra.mxu0 0.0
    %3222 = vmatprep.subr.mxu0 0.0
    %3223 = vmatpush1.msra.mxu0 0.0
    %3224 = vmatprep.subr.mxu0 0.0
    %3225 = vmatpush1.msra.mxu0 %v3204
    %3226 = vmatprep.subr.mxu0 0.0
    %3227 = vmatpush1.msra.mxu0 %v3203
    %3228 = vmatprep.subr.mxu0 0.0
    %3229 = vmatpush1.msra.mxu0 %v3202
    %3230 = vmatprep.subr.mxu0 0.0
    %3231 = vmatpush1.msra.mxu0 %v3201
    %3232 = vmatprep.subr.mxu0 0.0
    %3233 = vmatpush1.msra.mxu0 %v3200
    %3234 = vmatprep.subr.mxu0 0.0
    %3235 = vmatpush1.msra.mxu0 %v3199
    %3236 = vmatprep.subr.mxu0 0.0
    %3237 = vmatpush1.msra.mxu0 %v3198
    %3238 = vmatprep.subr.mxu0 0.0
    %3239 = vmatpush1.msra.mxu0 %v3197
    %3240 = vmatprep.subr.mxu0 0.0
    %3241 = vmatpush2.msra.mxu0 0.0
    %3242 = vmatprep.subr.mxu0 0.0
    %3243 = vmatpush2.msra.mxu0 0.0
    %3244 = vmatprep.subr.mxu0 0.0
    %3245 = vmatpush2.msra.mxu0 0.0
    %3246 = vmatprep.subr.mxu0 0.0
    %3247 = vmatpush2.msra.mxu0 0.0
    %3248 = vmatprep.subr.mxu0 0.0
    %3249 = vmatpush2.msra.mxu0 0.0
    %3250 = vmatprep.subr.mxu0 0.0
    %3251 = vmatpush2.msra.mxu0 0.0
    %3252 = vmatprep.subr.mxu0 0.0
    %3253 = vmatpush2.msra.mxu0 0.0
    %3254 = vmatprep.subr.mxu0 0.0
    %3255 = vmatpush2.msra.mxu0 0.0
    %3256 = vmatprep.subr.mxu0 0.0
    %3257 = vmatpush2.msra.mxu0 0.0
    %3258 = vmatprep.subr.mxu0 0.0
    %3259 = vmatpush2.msra.mxu0 0.0
    %3260 = vmatprep.subr.mxu0 0.0
    %3261 = vmatpush2.msra.mxu0 0.0
    %3262 = vmatprep.subr.mxu0 0.0
    %3263 = vmatpush2.msra.mxu0 0.0
    %3264 = vmatprep.subr.mxu0 0.0
    %3265 = vmatpush2.msra.mxu0 0.0
    %3266 = vmatprep.subr.mxu0 0.0
    %3267 = vmatpush2.msra.mxu0 0.0
    %3268 = vmatprep.subr.mxu0 0.0
    %3269 = vmatpush2.msra.mxu0 0.0
    %3270 = vmatprep.subr.mxu0 0.0
    %3271 = vmatpush2.msra.mxu0 0.0
    %3272 = vmatprep.mubr.f32.mxu0 0.0
    %3273 = vmatmul.mubr.f32.gmra.mxu0 %v3206
    %v3274 = vpop.f32.mrf.mxu0
    %v3275 = vadd.f32 0.0, %v3274
    %v3276 = vpop.f32.mrf.mxu0
    %3277 = vdwg.mxu0
    %v3278 = vadd.f32 %v3196, %v3275
    %v3279 = vld [vmem:[#allocation5 + $0x500] sm:$0xff]
    %v3280 = vld [vmem:[#allocation5 + $0x508] sm:$0xff]
    %v3281 = vld [vmem:[#allocation5 + $0x510] sm:$0xff]
    %v3282 = vld [vmem:[#allocation5 + $0x518] sm:$0xff]
    %v3283 = vld [vmem:[#allocation5 + $0x520] sm:$0xff]
    %v3284 = vld [vmem:[#allocation5 + $0x528] sm:$0xff]
    %v3285 = vld [vmem:[#allocation5 + $0x530] sm:$0xff]
    %v3286 = vld [vmem:[#allocation5 + $0x538] sm:$0xff]
    %v3288 = vsel %vm453, %v1622, 0
    %3290 = vmatprep.subr.mxu0 0.0
    %3291 = vmatpush1.msra.mxu0 0.0
    %3292 = vmatprep.subr.mxu0 0.0
    %3293 = vmatpush1.msra.mxu0 0.0
    %3294 = vmatprep.subr.mxu0 0.0
    %3295 = vmatpush1.msra.mxu0 0.0
    %3296 = vmatprep.subr.mxu0 0.0
    %3297 = vmatpush1.msra.mxu0 0.0
    %3298 = vmatprep.subr.mxu0 0.0
    %3299 = vmatpush1.msra.mxu0 0.0
    %3300 = vmatprep.subr.mxu0 0.0
    %3301 = vmatpush1.msra.mxu0 0.0
    %3302 = vmatprep.subr.mxu0 0.0
    %3303 = vmatpush1.msra.mxu0 0.0
    %3304 = vmatprep.subr.mxu0 0.0
    %3305 = vmatpush1.msra.mxu0 0.0
    %3306 = vmatprep.subr.mxu0 0.0
    %3307 = vmatpush1.msra.mxu0 %v3286
    %3308 = vmatprep.subr.mxu0 0.0
    %3309 = vmatpush1.msra.mxu0 %v3285
    %3310 = vmatprep.subr.mxu0 0.0
    %3311 = vmatpush1.msra.mxu0 %v3284
    %3312 = vmatprep.subr.mxu0 0.0
    %3313 = vmatpush1.msra.mxu0 %v3283
    %3314 = vmatprep.subr.mxu0 0.0
    %3315 = vmatpush1.msra.mxu0 %v3282
    %3316 = vmatprep.subr.mxu0 0.0
    %3317 = vmatpush1.msra.mxu0 %v3281
    %3318 = vmatprep.subr.mxu0 0.0
    %3319 = vmatpush1.msra.mxu0 %v3280
    %3320 = vmatprep.subr.mxu0 0.0
    %3321 = vmatpush1.msra.mxu0 %v3279
    %3322 = vmatprep.subr.mxu0 0.0
    %3323 = vmatpush2.msra.mxu0 0.0
    %3324 = vmatprep.subr.mxu0 0.0
    %3325 = vmatpush2.msra.mxu0 0.0
    %3326 = vmatprep.subr.mxu0 0.0
    %3327 = vmatpush2.msra.mxu0 0.0
    %3328 = vmatprep.subr.mxu0 0.0
    %3329 = vmatpush2.msra.mxu0 0.0
    %3330 = vmatprep.subr.mxu0 0.0
    %3331 = vmatpush2.msra.mxu0 0.0
    %3332 = vmatprep.subr.mxu0 0.0
    %3333 = vmatpush2.msra.mxu0 0.0
    %3334 = vmatprep.subr.mxu0 0.0
    %3335 = vmatpush2.msra.mxu0 0.0
    %3336 = vmatprep.subr.mxu0 0.0
    %3337 = vmatpush2.msra.mxu0 0.0
    %3338 = vmatprep.subr.mxu0 0.0
    %3339 = vmatpush2.msra.mxu0 0.0
    %3340 = vmatprep.subr.mxu0 0.0
    %3341 = vmatpush2.msra.mxu0 0.0
    %3342 = vmatprep.subr.mxu0 0.0
    %3343 = vmatpush2.msra.mxu0 0.0
    %3344 = vmatprep.subr.mxu0 0.0
    %3345 = vmatpush2.msra.mxu0 0.0
    %3346 = vmatprep.subr.mxu0 0.0
    %3347 = vmatpush2.msra.mxu0 0.0
    %3348 = vmatprep.subr.mxu0 0.0
    %3349 = vmatpush2.msra.mxu0 0.0
    %3350 = vmatprep.subr.mxu0 0.0
    %3351 = vmatpush2.msra.mxu0 0.0
    %3352 = vmatprep.subr.mxu0 0.0
    %3353 = vmatpush2.msra.mxu0 0.0
    %3354 = vmatprep.mubr.f32.mxu0 0.0
    %3355 = vmatmul.mubr.f32.gmra.mxu0 %v3288
    %v3356 = vpop.f32.mrf.mxu0
    %v3357 = vadd.f32 0.0, %v3356
    %v3358 = vpop.f32.mrf.mxu0
    %3359 = vdwg.mxu0
    %v3360 = vadd.f32 %v3278, %v3357
    %v3361 = vld [vmem:[#allocation5 + $0x540] sm:$0xff]
    %v3362 = vld [vmem:[#allocation5 + $0x548] sm:$0xff]
    %v3363 = vld [vmem:[#allocation5 + $0x550] sm:$0xff]
    %v3364 = vld [vmem:[#allocation5 + $0x558] sm:$0xff]
    %v3365 = vld [vmem:[#allocation5 + $0x560] sm:$0xff]
    %v3366 = vld [vmem:[#allocation5 + $0x568] sm:$0xff]
    %v3367 = vld [vmem:[#allocation5 + $0x570] sm:$0xff]
    %v3368 = vld [vmem:[#allocation5 + $0x578] sm:$0xff]
    %v3370 = vsel %vm453, %v1623, 0
    %3372 = vmatprep.subr.mxu0 0.0
    %3373 = vmatpush1.msra.mxu0 0.0
    %3374 = vmatprep.subr.mxu0 0.0
    %3375 = vmatpush1.msra.mxu0 0.0
    %3376 = vmatprep.subr.mxu0 0.0
    %3377 = vmatpush1.msra.mxu0 0.0
    %3378 = vmatprep.subr.mxu0 0.0
    %3379 = vmatpush1.msra.mxu0 0.0
    %3380 = vmatprep.subr.mxu0 0.0
    %3381 = vmatpush1.msra.mxu0 0.0
    %3382 = vmatprep.subr.mxu0 0.0
    %3383 = vmatpush1.msra.mxu0 0.0
    %3384 = vmatprep.subr.mxu0 0.0
    %3385 = vmatpush1.msra.mxu0 0.0
    %3386 = vmatprep.subr.mxu0 0.0
    %3387 = vmatpush1.msra.mxu0 0.0
    %3388 = vmatprep.subr.mxu0 0.0
    %3389 = vmatpush1.msra.mxu0 %v3368
    %3390 = vmatprep.subr.mxu0 0.0
    %3391 = vmatpush1.msra.mxu0 %v3367
    %3392 = vmatprep.subr.mxu0 0.0
    %3393 = vmatpush1.msra.mxu0 %v3366
    %3394 = vmatprep.subr.mxu0 0.0
    %3395 = vmatpush1.msra.mxu0 %v3365
    %3396 = vmatprep.subr.mxu0 0.0
    %3397 = vmatpush1.msra.mxu0 %v3364
    %3398 = vmatprep.subr.mxu0 0.0
    %3399 = vmatpush1.msra.mxu0 %v3363
    %3400 = vmatprep.subr.mxu0 0.0
    %3401 = vmatpush1.msra.mxu0 %v3362
    %3402 = vmatprep.subr.mxu0 0.0
    %3403 = vmatpush1.msra.mxu0 %v3361
    %3404 = vmatprep.subr.mxu0 0.0
    %3405 = vmatpush2.msra.mxu0 0.0
    %3406 = vmatprep.subr.mxu0 0.0
    %3407 = vmatpush2.msra.mxu0 0.0
    %3408 = vmatprep.subr.mxu0 0.0
    %3409 = vmatpush2.msra.mxu0 0.0
    %3410 = vmatprep.subr.mxu0 0.0
    %3411 = vmatpush2.msra.mxu0 0.0
    %3412 = vmatprep.subr.mxu0 0.0
    %3413 = vmatpush2.msra.mxu0 0.0
    %3414 = vmatprep.subr.mxu0 0.0
    %3415 = vmatpush2.msra.mxu0 0.0
    %3416 = vmatprep.subr.mxu0 0.0
    %3417 = vmatpush2.msra.mxu0 0.0
    %3418 = vmatprep.subr.mxu0 0.0
    %3419 = vmatpush2.msra.mxu0 0.0
    %3420 = vmatprep.subr.mxu0 0.0
    %3421 = vmatpush2.msra.mxu0 0.0
    %3422 = vmatprep.subr.mxu0 0.0
    %3423 = vmatpush2.msra.mxu0 0.0
    %3424 = vmatprep.subr.mxu0 0.0
    %3425 = vmatpush2.msra.mxu0 0.0
    %3426 = vmatprep.subr.mxu0 0.0
    %3427 = vmatpush2.msra.mxu0 0.0
    %3428 = vmatprep.subr.mxu0 0.0
    %3429 = vmatpush2.msra.mxu0 0.0
    %3430 = vmatprep.subr.mxu0 0.0
    %3431 = vmatpush2.msra.mxu0 0.0
    %3432 = vmatprep.subr.mxu0 0.0
    %3433 = vmatpush2.msra.mxu0 0.0
    %3434 = vmatprep.subr.mxu0 0.0
    %3435 = vmatpush2.msra.mxu0 0.0
    %3436 = vmatprep.mubr.f32.mxu0 0.0
    %3437 = vmatmul.mubr.f32.gmra.mxu0 %v3370
    %v3438 = vpop.f32.mrf.mxu0
    %v3439 = vadd.f32 0.0, %v3438
    %v3440 = vpop.f32.mrf.mxu0
    %3441 = vdwg.mxu0
    %v3442 = vadd.f32 %v3360, %v3439
    %v3443 = vld [vmem:[#allocation5 + $0x580] sm:$0xff]
    %v3444 = vld [vmem:[#allocation5 + $0x588] sm:$0xff]
    %v3445 = vld [vmem:[#allocation5 + $0x590] sm:$0xff]
    %v3446 = vld [vmem:[#allocation5 + $0x598] sm:$0xff]
    %v3447 = vld [vmem:[#allocation5 + $0x5a0] sm:$0xff]
    %v3448 = vld [vmem:[#allocation5 + $0x5a8] sm:$0xff]
    %v3449 = vld [vmem:[#allocation5 + $0x5b0] sm:$0xff]
    %v3450 = vld [vmem:[#allocation5 + $0x5b8] sm:$0xff]
    %v3452 = vsel %vm453, %v1624, 0
    %3454 = vmatprep.subr.mxu0 0.0
    %3455 = vmatpush1.msra.mxu0 0.0
    %3456 = vmatprep.subr.mxu0 0.0
    %3457 = vmatpush1.msra.mxu0 0.0
    %3458 = vmatprep.subr.mxu0 0.0
    %3459 = vmatpush1.msra.mxu0 0.0
    %3460 = vmatprep.subr.mxu0 0.0
    %3461 = vmatpush1.msra.mxu0 0.0
    %3462 = vmatprep.subr.mxu0 0.0
    %3463 = vmatpush1.msra.mxu0 0.0
    %3464 = vmatprep.subr.mxu0 0.0
    %3465 = vmatpush1.msra.mxu0 0.0
    %3466 = vmatprep.subr.mxu0 0.0
    %3467 = vmatpush1.msra.mxu0 0.0
    %3468 = vmatprep.subr.mxu0 0.0
    %3469 = vmatpush1.msra.mxu0 0.0
    %3470 = vmatprep.subr.mxu0 0.0
    %3471 = vmatpush1.msra.mxu0 %v3450
    %3472 = vmatprep.subr.mxu0 0.0
    %3473 = vmatpush1.msra.mxu0 %v3449
    %3474 = vmatprep.subr.mxu0 0.0
    %3475 = vmatpush1.msra.mxu0 %v3448
    %3476 = vmatprep.subr.mxu0 0.0
    %3477 = vmatpush1.msra.mxu0 %v3447
    %3478 = vmatprep.subr.mxu0 0.0
    %3479 = vmatpush1.msra.mxu0 %v3446
    %3480 = vmatprep.subr.mxu0 0.0
    %3481 = vmatpush1.msra.mxu0 %v3445
    %3482 = vmatprep.subr.mxu0 0.0
    %3483 = vmatpush1.msra.mxu0 %v3444
    %3484 = vmatprep.subr.mxu0 0.0
    %3485 = vmatpush1.msra.mxu0 %v3443
    %3486 = vmatprep.subr.mxu0 0.0
    %3487 = vmatpush2.msra.mxu0 0.0
    %3488 = vmatprep.subr.mxu0 0.0
    %3489 = vmatpush2.msra.mxu0 0.0
    %3490 = vmatprep.subr.mxu0 0.0
    %3491 = vmatpush2.msra.mxu0 0.0
    %3492 = vmatprep.subr.mxu0 0.0
    %3493 = vmatpush2.msra.mxu0 0.0
    %3494 = vmatprep.subr.mxu0 0.0
    %3495 = vmatpush2.msra.mxu0 0.0
    %3496 = vmatprep.subr.mxu0 0.0
    %3497 = vmatpush2.msra.mxu0 0.0
    %3498 = vmatprep.subr.mxu0 0.0
    %3499 = vmatpush2.msra.mxu0 0.0
    %3500 = vmatprep.subr.mxu0 0.0
    %3501 = vmatpush2.msra.mxu0 0.0
    %3502 = vmatprep.subr.mxu0 0.0
    %3503 = vmatpush2.msra.mxu0 0.0
    %3504 = vmatprep.subr.mxu0 0.0
    %3505 = vmatpush2.msra.mxu0 0.0
    %3506 = vmatprep.subr.mxu0 0.0
    %3507 = vmatpush2.msra.mxu0 0.0
    %3508 = vmatprep.subr.mxu0 0.0
    %3509 = vmatpush2.msra.mxu0 0.0
    %3510 = vmatprep.subr.mxu0 0.0
    %3511 = vmatpush2.msra.mxu0 0.0
    %3512 = vmatprep.subr.mxu0 0.0
    %3513 = vmatpush2.msra.mxu0 0.0
    %3514 = vmatprep.subr.mxu0 0.0
    %3515 = vmatpush2.msra.mxu0 0.0
    %3516 = vmatprep.subr.mxu0 0.0
    %3517 = vmatpush2.msra.mxu0 0.0
    %3518 = vmatprep.mubr.f32.mxu0 0.0
    %3519 = vmatmul.mubr.f32.gmra.mxu0 %v3452
    %v3520 = vpop.f32.mrf.mxu0
    %v3521 = vadd.f32 0.0, %v3520
    %v3522 = vpop.f32.mrf.mxu0
    %3523 = vdwg.mxu0
    %v3524 = vadd.f32 %v3442, %v3521
    %v3525 = vld [vmem:[#allocation5 + $0x5c0] sm:$0xff]
    %v3526 = vld [vmem:[#allocation5 + $0x5c8] sm:$0xff]
    %v3527 = vld [vmem:[#allocation5 + $0x5d0] sm:$0xff]
    %v3528 = vld [vmem:[#allocation5 + $0x5d8] sm:$0xff]
    %v3529 = vld [vmem:[#allocation5 + $0x5e0] sm:$0xff]
    %v3530 = vld [vmem:[#allocation5 + $0x5e8] sm:$0xff]
    %v3531 = vld [vmem:[#allocation5 + $0x5f0] sm:$0xff]
    %v3532 = vld [vmem:[#allocation5 + $0x5f8] sm:$0xff]
    %v3534 = vsel %vm453, %v1625, 0
    %3536 = vmatprep.subr.mxu0 0.0
    %3537 = vmatpush1.msra.mxu0 0.0
    %3538 = vmatprep.subr.mxu0 0.0
    %3539 = vmatpush1.msra.mxu0 0.0
    %3540 = vmatprep.subr.mxu0 0.0
    %3541 = vmatpush1.msra.mxu0 0.0
    %3542 = vmatprep.subr.mxu0 0.0
    %3543 = vmatpush1.msra.mxu0 0.0
    %3544 = vmatprep.subr.mxu0 0.0
    %3545 = vmatpush1.msra.mxu0 0.0
    %3546 = vmatprep.subr.mxu0 0.0
    %3547 = vmatpush1.msra.mxu0 0.0
    %3548 = vmatprep.subr.mxu0 0.0
    %3549 = vmatpush1.msra.mxu0 0.0
    %3550 = vmatprep.subr.mxu0 0.0
    %3551 = vmatpush1.msra.mxu0 0.0
    %3552 = vmatprep.subr.mxu0 0.0
    %3553 = vmatpush1.msra.mxu0 %v3532
    %3554 = vmatprep.subr.mxu0 0.0
    %3555 = vmatpush1.msra.mxu0 %v3531
    %3556 = vmatprep.subr.mxu0 0.0
    %3557 = vmatpush1.msra.mxu0 %v3530
    %3558 = vmatprep.subr.mxu0 0.0
    %3559 = vmatpush1.msra.mxu0 %v3529
    %3560 = vmatprep.subr.mxu0 0.0
    %3561 = vmatpush1.msra.mxu0 %v3528
    %3562 = vmatprep.subr.mxu0 0.0
    %3563 = vmatpush1.msra.mxu0 %v3527
    %3564 = vmatprep.subr.mxu0 0.0
    %3565 = vmatpush1.msra.mxu0 %v3526
    %3566 = vmatprep.subr.mxu0 0.0
    %3567 = vmatpush1.msra.mxu0 %v3525
    %3568 = vmatprep.subr.mxu0 0.0
    %3569 = vmatpush2.msra.mxu0 0.0
    %3570 = vmatprep.subr.mxu0 0.0
    %3571 = vmatpush2.msra.mxu0 0.0
    %3572 = vmatprep.subr.mxu0 0.0
    %3573 = vmatpush2.msra.mxu0 0.0
    %3574 = vmatprep.subr.mxu0 0.0
    %3575 = vmatpush2.msra.mxu0 0.0
    %3576 = vmatprep.subr.mxu0 0.0
    %3577 = vmatpush2.msra.mxu0 0.0
    %3578 = vmatprep.subr.mxu0 0.0
    %3579 = vmatpush2.msra.mxu0 0.0
    %3580 = vmatprep.subr.mxu0 0.0
    %3581 = vmatpush2.msra.mxu0 0.0
    %3582 = vmatprep.subr.mxu0 0.0
    %3583 = vmatpush2.msra.mxu0 0.0
    %3584 = vmatprep.subr.mxu0 0.0
    %3585 = vmatpush2.msra.mxu0 0.0
    %3586 = vmatprep.subr.mxu0 0.0
    %3587 = vmatpush2.msra.mxu0 0.0
    %3588 = vmatprep.subr.mxu0 0.0
    %3589 = vmatpush2.msra.mxu0 0.0
    %3590 = vmatprep.subr.mxu0 0.0
    %3591 = vmatpush2.msra.mxu0 0.0
    %3592 = vmatprep.subr.mxu0 0.0
    %3593 = vmatpush2.msra.mxu0 0.0
    %3594 = vmatprep.subr.mxu0 0.0
    %3595 = vmatpush2.msra.mxu0 0.0
    %3596 = vmatprep.subr.mxu0 0.0
    %3597 = vmatpush2.msra.mxu0 0.0
    %3598 = vmatprep.subr.mxu0 0.0
    %3599 = vmatpush2.msra.mxu0 0.0
    %3600 = vmatprep.mubr.f32.mxu0 0.0
    %3601 = vmatmul.mubr.f32.gmra.mxu0 %v3534
    %v3602 = vpop.f32.mrf.mxu0
    %v3603 = vadd.f32 0.0, %v3602
    %v3604 = vpop.f32.mrf.mxu0
    %3605 = vdwg.mxu0
    %v3606 = vadd.f32 %v3524, %v3603
    %v3607 = vld [vmem:[#allocation5 + $0x600] sm:$0xff]
    %v3608 = vld [vmem:[#allocation5 + $0x608] sm:$0xff]
    %v3609 = vld [vmem:[#allocation5 + $0x610] sm:$0xff]
    %v3610 = vld [vmem:[#allocation5 + $0x618] sm:$0xff]
    %v3611 = vld [vmem:[#allocation5 + $0x620] sm:$0xff]
    %v3612 = vld [vmem:[#allocation5 + $0x628] sm:$0xff]
    %v3613 = vld [vmem:[#allocation5 + $0x630] sm:$0xff]
    %v3614 = vld [vmem:[#allocation5 + $0x638] sm:$0xff]
    %v3616 = vsel %vm453, %v1626, 0
    %3618 = vmatprep.subr.mxu0 0.0
    %3619 = vmatpush1.msra.mxu0 0.0
    %3620 = vmatprep.subr.mxu0 0.0
    %3621 = vmatpush1.msra.mxu0 0.0
    %3622 = vmatprep.subr.mxu0 0.0
    %3623 = vmatpush1.msra.mxu0 0.0
    %3624 = vmatprep.subr.mxu0 0.0
    %3625 = vmatpush1.msra.mxu0 0.0
    %3626 = vmatprep.subr.mxu0 0.0
    %3627 = vmatpush1.msra.mxu0 0.0
    %3628 = vmatprep.subr.mxu0 0.0
    %3629 = vmatpush1.msra.mxu0 0.0
    %3630 = vmatprep.subr.mxu0 0.0
    %3631 = vmatpush1.msra.mxu0 0.0
    %3632 = vmatprep.subr.mxu0 0.0
    %3633 = vmatpush1.msra.mxu0 0.0
    %3634 = vmatprep.subr.mxu0 0.0
    %3635 = vmatpush1.msra.mxu0 %v3614
    %3636 = vmatprep.subr.mxu0 0.0
    %3637 = vmatpush1.msra.mxu0 %v3613
    %3638 = vmatprep.subr.mxu0 0.0
    %3639 = vmatpush1.msra.mxu0 %v3612
    %3640 = vmatprep.subr.mxu0 0.0
    %3641 = vmatpush1.msra.mxu0 %v3611
    %3642 = vmatprep.subr.mxu0 0.0
    %3643 = vmatpush1.msra.mxu0 %v3610
    %3644 = vmatprep.subr.mxu0 0.0
    %3645 = vmatpush1.msra.mxu0 %v3609
    %3646 = vmatprep.subr.mxu0 0.0
    %3647 = vmatpush1.msra.mxu0 %v3608
    %3648 = vmatprep.subr.mxu0 0.0
    %3649 = vmatpush1.msra.mxu0 %v3607
    %3650 = vmatprep.subr.mxu0 0.0
    %3651 = vmatpush2.msra.mxu0 0.0
    %3652 = vmatprep.subr.mxu0 0.0
    %3653 = vmatpush2.msra.mxu0 0.0
    %3654 = vmatprep.subr.mxu0 0.0
    %3655 = vmatpush2.msra.mxu0 0.0
    %3656 = vmatprep.subr.mxu0 0.0
    %3657 = vmatpush2.msra.mxu0 0.0
    %3658 = vmatprep.subr.mxu0 0.0
    %3659 = vmatpush2.msra.mxu0 0.0
    %3660 = vmatprep.subr.mxu0 0.0
    %3661 = vmatpush2.msra.mxu0 0.0
    %3662 = vmatprep.subr.mxu0 0.0
    %3663 = vmatpush2.msra.mxu0 0.0
    %3664 = vmatprep.subr.mxu0 0.0
    %3665 = vmatpush2.msra.mxu0 0.0
    %3666 = vmatprep.subr.mxu0 0.0
    %3667 = vmatpush2.msra.mxu0 0.0
    %3668 = vmatprep.subr.mxu0 0.0
    %3669 = vmatpush2.msra.mxu0 0.0
    %3670 = vmatprep.subr.mxu0 0.0
    %3671 = vmatpush2.msra.mxu0 0.0
    %3672 = vmatprep.subr.mxu0 0.0
    %3673 = vmatpush2.msra.mxu0 0.0
    %3674 = vmatprep.subr.mxu0 0.0
    %3675 = vmatpush2.msra.mxu0 0.0
    %3676 = vmatprep.subr.mxu0 0.0
    %3677 = vmatpush2.msra.mxu0 0.0
    %3678 = vmatprep.subr.mxu0 0.0
    %3679 = vmatpush2.msra.mxu0 0.0
    %3680 = vmatprep.subr.mxu0 0.0
    %3681 = vmatpush2.msra.mxu0 0.0
    %3682 = vmatprep.mubr.f32.mxu0 0.0
    %3683 = vmatmul.mubr.f32.gmra.mxu0 %v3616
    %v3684 = vpop.f32.mrf.mxu0
    %v3685 = vadd.f32 0.0, %v3684
    %v3686 = vpop.f32.mrf.mxu0
    %3687 = vdwg.mxu0
    %v3688 = vadd.f32 %v3606, %v3685
    %v3689 = vld [vmem:[#allocation5 + $0x640] sm:$0xff]
    %v3690 = vld [vmem:[#allocation5 + $0x648] sm:$0xff]
    %v3691 = vld [vmem:[#allocation5 + $0x650] sm:$0xff]
    %v3692 = vld [vmem:[#allocation5 + $0x658] sm:$0xff]
    %v3693 = vld [vmem:[#allocation5 + $0x660] sm:$0xff]
    %v3694 = vld [vmem:[#allocation5 + $0x668] sm:$0xff]
    %v3695 = vld [vmem:[#allocation5 + $0x670] sm:$0xff]
    %v3696 = vld [vmem:[#allocation5 + $0x678] sm:$0xff]
    %v3698 = vsel %vm453, %v1627, 0
    %3700 = vmatprep.subr.mxu0 0.0
    %3701 = vmatpush1.msra.mxu0 0.0
    %3702 = vmatprep.subr.mxu0 0.0
    %3703 = vmatpush1.msra.mxu0 0.0
    %3704 = vmatprep.subr.mxu0 0.0
    %3705 = vmatpush1.msra.mxu0 0.0
    %3706 = vmatprep.subr.mxu0 0.0
    %3707 = vmatpush1.msra.mxu0 0.0
    %3708 = vmatprep.subr.mxu0 0.0
    %3709 = vmatpush1.msra.mxu0 0.0
    %3710 = vmatprep.subr.mxu0 0.0
    %3711 = vmatpush1.msra.mxu0 0.0
    %3712 = vmatprep.subr.mxu0 0.0
    %3713 = vmatpush1.msra.mxu0 0.0
    %3714 = vmatprep.subr.mxu0 0.0
    %3715 = vmatpush1.msra.mxu0 0.0
    %3716 = vmatprep.subr.mxu0 0.0
    %3717 = vmatpush1.msra.mxu0 %v3696
    %3718 = vmatprep.subr.mxu0 0.0
    %3719 = vmatpush1.msra.mxu0 %v3695
    %3720 = vmatprep.subr.mxu0 0.0
    %3721 = vmatpush1.msra.mxu0 %v3694
    %3722 = vmatprep.subr.mxu0 0.0
    %3723 = vmatpush1.msra.mxu0 %v3693
    %3724 = vmatprep.subr.mxu0 0.0
    %3725 = vmatpush1.msra.mxu0 %v3692
    %3726 = vmatprep.subr.mxu0 0.0
    %3727 = vmatpush1.msra.mxu0 %v3691
    %3728 = vmatprep.subr.mxu0 0.0
    %3729 = vmatpush1.msra.mxu0 %v3690
    %3730 = vmatprep.subr.mxu0 0.0
    %3731 = vmatpush1.msra.mxu0 %v3689
    %3732 = vmatprep.subr.mxu0 0.0
    %3733 = vmatpush2.msra.mxu0 0.0
    %3734 = vmatprep.subr.mxu0 0.0
    %3735 = vmatpush2.msra.mxu0 0.0
    %3736 = vmatprep.subr.mxu0 0.0
    %3737 = vmatpush2.msra.mxu0 0.0
    %3738 = vmatprep.subr.mxu0 0.0
    %3739 = vmatpush2.msra.mxu0 0.0
    %3740 = vmatprep.subr.mxu0 0.0
    %3741 = vmatpush2.msra.mxu0 0.0
    %3742 = vmatprep.subr.mxu0 0.0
    %3743 = vmatpush2.msra.mxu0 0.0
    %3744 = vmatprep.subr.mxu0 0.0
    %3745 = vmatpush2.msra.mxu0 0.0
    %3746 = vmatprep.subr.mxu0 0.0
    %3747 = vmatpush2.msra.mxu0 0.0
    %3748 = vmatprep.subr.mxu0 0.0
    %3749 = vmatpush2.msra.mxu0 0.0
    %3750 = vmatprep.subr.mxu0 0.0
    %3751 = vmatpush2.msra.mxu0 0.0
    %3752 = vmatprep.subr.mxu0 0.0
    %3753 = vmatpush2.msra.mxu0 0.0
    %3754 = vmatprep.subr.mxu0 0.0
    %3755 = vmatpush2.msra.mxu0 0.0
    %3756 = vmatprep.subr.mxu0 0.0
    %3757 = vmatpush2.msra.mxu0 0.0
    %3758 = vmatprep.subr.mxu0 0.0
    %3759 = vmatpush2.msra.mxu0 0.0
    %3760 = vmatprep.subr.mxu0 0.0
    %3761 = vmatpush2.msra.mxu0 0.0
    %3762 = vmatprep.subr.mxu0 0.0
    %3763 = vmatpush2.msra.mxu0 0.0
    %3764 = vmatprep.mubr.f32.mxu0 0.0
    %3765 = vmatmul.mubr.f32.gmra.mxu0 %v3698
    %v3766 = vpop.f32.mrf.mxu0
    %v3767 = vadd.f32 0.0, %v3766
    %v3768 = vpop.f32.mrf.mxu0
    %3769 = vdwg.mxu0
    %v3770 = vadd.f32 %v3688, %v3767
    %v3771 = vld [vmem:[#allocation5 + $0x680] sm:$0xff]
    %v3772 = vld [vmem:[#allocation5 + $0x688] sm:$0xff]
    %v3773 = vld [vmem:[#allocation5 + $0x690] sm:$0xff]
    %v3774 = vld [vmem:[#allocation5 + $0x698] sm:$0xff]
    %v3775 = vld [vmem:[#allocation5 + $0x6a0] sm:$0xff]
    %v3776 = vld [vmem:[#allocation5 + $0x6a8] sm:$0xff]
    %v3777 = vld [vmem:[#allocation5 + $0x6b0] sm:$0xff]
    %v3778 = vld [vmem:[#allocation5 + $0x6b8] sm:$0xff]
    %v3780 = vsel %vm453, %v1628, 0
    %3782 = vmatprep.subr.mxu0 0.0
    %3783 = vmatpush1.msra.mxu0 0.0
    %3784 = vmatprep.subr.mxu0 0.0
    %3785 = vmatpush1.msra.mxu0 0.0
    %3786 = vmatprep.subr.mxu0 0.0
    %3787 = vmatpush1.msra.mxu0 0.0
    %3788 = vmatprep.subr.mxu0 0.0
    %3789 = vmatpush1.msra.mxu0 0.0
    %3790 = vmatprep.subr.mxu0 0.0
    %3791 = vmatpush1.msra.mxu0 0.0
    %3792 = vmatprep.subr.mxu0 0.0
    %3793 = vmatpush1.msra.mxu0 0.0
    %3794 = vmatprep.subr.mxu0 0.0
    %3795 = vmatpush1.msra.mxu0 0.0
    %3796 = vmatprep.subr.mxu0 0.0
    %3797 = vmatpush1.msra.mxu0 0.0
    %3798 = vmatprep.subr.mxu0 0.0
    %3799 = vmatpush1.msra.mxu0 %v3778
    %3800 = vmatprep.subr.mxu0 0.0
    %3801 = vmatpush1.msra.mxu0 %v3777
    %3802 = vmatprep.subr.mxu0 0.0
    %3803 = vmatpush1.msra.mxu0 %v3776
    %3804 = vmatprep.subr.mxu0 0.0
    %3805 = vmatpush1.msra.mxu0 %v3775
    %3806 = vmatprep.subr.mxu0 0.0
    %3807 = vmatpush1.msra.mxu0 %v3774
    %3808 = vmatprep.subr.mxu0 0.0
    %3809 = vmatpush1.msra.mxu0 %v3773
    %3810 = vmatprep.subr.mxu0 0.0
    %3811 = vmatpush1.msra.mxu0 %v3772
    %3812 = vmatprep.subr.mxu0 0.0
    %3813 = vmatpush1.msra.mxu0 %v3771
    %3814 = vmatprep.subr.mxu0 0.0
    %3815 = vmatpush2.msra.mxu0 0.0
    %3816 = vmatprep.subr.mxu0 0.0
    %3817 = vmatpush2.msra.mxu0 0.0
    %3818 = vmatprep.subr.mxu0 0.0
    %3819 = vmatpush2.msra.mxu0 0.0
    %3820 = vmatprep.subr.mxu0 0.0
    %3821 = vmatpush2.msra.mxu0 0.0
    %3822 = vmatprep.subr.mxu0 0.0
    %3823 = vmatpush2.msra.mxu0 0.0
    %3824 = vmatprep.subr.mxu0 0.0
    %3825 = vmatpush2.msra.mxu0 0.0
    %3826 = vmatprep.subr.mxu0 0.0
    %3827 = vmatpush2.msra.mxu0 0.0
    %3828 = vmatprep.subr.mxu0 0.0
    %3829 = vmatpush2.msra.mxu0 0.0
    %3830 = vmatprep.subr.mxu0 0.0
    %3831 = vmatpush2.msra.mxu0 0.0
    %3832 = vmatprep.subr.mxu0 0.0
    %3833 = vmatpush2.msra.mxu0 0.0
    %3834 = vmatprep.subr.mxu0 0.0
    %3835 = vmatpush2.msra.mxu0 0.0
    %3836 = vmatprep.subr.mxu0 0.0
    %3837 = vmatpush2.msra.mxu0 0.0
    %3838 = vmatprep.subr.mxu0 0.0
    %3839 = vmatpush2.msra.mxu0 0.0
    %3840 = vmatprep.subr.mxu0 0.0
    %3841 = vmatpush2.msra.mxu0 0.0
    %3842 = vmatprep.subr.mxu0 0.0
    %3843 = vmatpush2.msra.mxu0 0.0
    %3844 = vmatprep.subr.mxu0 0.0
    %3845 = vmatpush2.msra.mxu0 0.0
    %3846 = vmatprep.mubr.f32.mxu0 0.0
    %3847 = vmatmul.mubr.f32.gmra.mxu0 %v3780
    %v3848 = vpop.f32.mrf.mxu0
    %v3849 = vadd.f32 0.0, %v3848
    %v3850 = vpop.f32.mrf.mxu0
    %3851 = vdwg.mxu0
    %v3852 = vadd.f32 %v3770, %v3849
    %v3853 = vld [vmem:[#allocation5 + $0x6c0] sm:$0xff]
    %v3854 = vld [vmem:[#allocation5 + $0x6c8] sm:$0xff]
    %v3855 = vld [vmem:[#allocation5 + $0x6d0] sm:$0xff]
    %v3856 = vld [vmem:[#allocation5 + $0x6d8] sm:$0xff]
    %v3857 = vld [vmem:[#allocation5 + $0x6e0] sm:$0xff]
    %v3858 = vld [vmem:[#allocation5 + $0x6e8] sm:$0xff]
    %v3859 = vld [vmem:[#allocation5 + $0x6f0] sm:$0xff]
    %v3860 = vld [vmem:[#allocation5 + $0x6f8] sm:$0xff]
    %v3862 = vsel %vm453, %v1629, 0
    %3864 = vmatprep.subr.mxu0 0.0
    %3865 = vmatpush1.msra.mxu0 0.0
    %3866 = vmatprep.subr.mxu0 0.0
    %3867 = vmatpush1.msra.mxu0 0.0
    %3868 = vmatprep.subr.mxu0 0.0
    %3869 = vmatpush1.msra.mxu0 0.0
    %3870 = vmatprep.subr.mxu0 0.0
    %3871 = vmatpush1.msra.mxu0 0.0
    %3872 = vmatprep.subr.mxu0 0.0
    %3873 = vmatpush1.msra.mxu0 0.0
    %3874 = vmatprep.subr.mxu0 0.0
    %3875 = vmatpush1.msra.mxu0 0.0
    %3876 = vmatprep.subr.mxu0 0.0
    %3877 = vmatpush1.msra.mxu0 0.0
    %3878 = vmatprep.subr.mxu0 0.0
    %3879 = vmatpush1.msra.mxu0 0.0
    %3880 = vmatprep.subr.mxu0 0.0
    %3881 = vmatpush1.msra.mxu0 %v3860
    %3882 = vmatprep.subr.mxu0 0.0
    %3883 = vmatpush1.msra.mxu0 %v3859
    %3884 = vmatprep.subr.mxu0 0.0
    %3885 = vmatpush1.msra.mxu0 %v3858
    %3886 = vmatprep.subr.mxu0 0.0
    %3887 = vmatpush1.msra.mxu0 %v3857
    %3888 = vmatprep.subr.mxu0 0.0
    %3889 = vmatpush1.msra.mxu0 %v3856
    %3890 = vmatprep.subr.mxu0 0.0
    %3891 = vmatpush1.msra.mxu0 %v3855
    %3892 = vmatprep.subr.mxu0 0.0
    %3893 = vmatpush1.msra.mxu0 %v3854
    %3894 = vmatprep.subr.mxu0 0.0
    %3895 = vmatpush1.msra.mxu0 %v3853
    %3896 = vmatprep.subr.mxu0 0.0
    %3897 = vmatpush2.msra.mxu0 0.0
    %3898 = vmatprep.subr.mxu0 0.0
    %3899 = vmatpush2.msra.mxu0 0.0
    %3900 = vmatprep.subr.mxu0 0.0
    %3901 = vmatpush2.msra.mxu0 0.0
    %3902 = vmatprep.subr.mxu0 0.0
    %3903 = vmatpush2.msra.mxu0 0.0
    %3904 = vmatprep.subr.mxu0 0.0
    %3905 = vmatpush2.msra.mxu0 0.0
    %3906 = vmatprep.subr.mxu0 0.0
    %3907 = vmatpush2.msra.mxu0 0.0
    %3908 = vmatprep.subr.mxu0 0.0
    %3909 = vmatpush2.msra.mxu0 0.0
    %3910 = vmatprep.subr.mxu0 0.0
    %3911 = vmatpush2.msra.mxu0 0.0
    %3912 = vmatprep.subr.mxu0 0.0
    %3913 = vmatpush2.msra.mxu0 0.0
    %3914 = vmatprep.subr.mxu0 0.0
    %3915 = vmatpush2.msra.mxu0 0.0
    %3916 = vmatprep.subr.mxu0 0.0
    %3917 = vmatpush2.msra.mxu0 0.0
    %3918 = vmatprep.subr.mxu0 0.0
    %3919 = vmatpush2.msra.mxu0 0.0
    %3920 = vmatprep.subr.mxu0 0.0
    %3921 = vmatpush2.msra.mxu0 0.0
    %3922 = vmatprep.subr.mxu0 0.0
    %3923 = vmatpush2.msra.mxu0 0.0
    %3924 = vmatprep.subr.mxu0 0.0
    %3925 = vmatpush2.msra.mxu0 0.0
    %3926 = vmatprep.subr.mxu0 0.0
    %3927 = vmatpush2.msra.mxu0 0.0
    %3928 = vmatprep.mubr.f32.mxu0 0.0
    %3929 = vmatmul.mubr.f32.gmra.mxu0 %v3862
    %v3930 = vpop.f32.mrf.mxu0
    %v3931 = vadd.f32 0.0, %v3930
    %v3932 = vpop.f32.mrf.mxu0
    %3933 = vdwg.mxu0
    %v3934 = vadd.f32 %v3852, %v3931
    %v3935 = vld [vmem:[#allocation5 + $0x700] sm:$0xff]
    %v3936 = vld [vmem:[#allocation5 + $0x708] sm:$0xff]
    %v3937 = vld [vmem:[#allocation5 + $0x710] sm:$0xff]
    %v3938 = vld [vmem:[#allocation5 + $0x718] sm:$0xff]
    %v3939 = vld [vmem:[#allocation5 + $0x720] sm:$0xff]
    %v3940 = vld [vmem:[#allocation5 + $0x728] sm:$0xff]
    %v3941 = vld [vmem:[#allocation5 + $0x730] sm:$0xff]
    %v3942 = vld [vmem:[#allocation5 + $0x738] sm:$0xff]
    %v3944 = vsel %vm453, %v1630, 0
    %3946 = vmatprep.subr.mxu0 0.0
    %3947 = vmatpush1.msra.mxu0 0.0
    %3948 = vmatprep.subr.mxu0 0.0
    %3949 = vmatpush1.msra.mxu0 0.0
    %3950 = vmatprep.subr.mxu0 0.0
    %3951 = vmatpush1.msra.mxu0 0.0
    %3952 = vmatprep.subr.mxu0 0.0
    %3953 = vmatpush1.msra.mxu0 0.0
    %3954 = vmatprep.subr.mxu0 0.0
    %3955 = vmatpush1.msra.mxu0 0.0
    %3956 = vmatprep.subr.mxu0 0.0
    %3957 = vmatpush1.msra.mxu0 0.0
    %3958 = vmatprep.subr.mxu0 0.0
    %3959 = vmatpush1.msra.mxu0 0.0
    %3960 = vmatprep.subr.mxu0 0.0
    %3961 = vmatpush1.msra.mxu0 0.0
    %3962 = vmatprep.subr.mxu0 0.0
    %3963 = vmatpush1.msra.mxu0 %v3942
    %3964 = vmatprep.subr.mxu0 0.0
    %3965 = vmatpush1.msra.mxu0 %v3941
    %3966 = vmatprep.subr.mxu0 0.0
    %3967 = vmatpush1.msra.mxu0 %v3940
    %3968 = vmatprep.subr.mxu0 0.0
    %3969 = vmatpush1.msra.mxu0 %v3939
    %3970 = vmatprep.subr.mxu0 0.0
    %3971 = vmatpush1.msra.mxu0 %v3938
    %3972 = vmatprep.subr.mxu0 0.0
    %3973 = vmatpush1.msra.mxu0 %v3937
    %3974 = vmatprep.subr.mxu0 0.0
    %3975 = vmatpush1.msra.mxu0 %v3936
    %3976 = vmatprep.subr.mxu0 0.0
    %3977 = vmatpush1.msra.mxu0 %v3935
    %3978 = vmatprep.subr.mxu0 0.0
    %3979 = vmatpush2.msra.mxu0 0.0
    %3980 = vmatprep.subr.mxu0 0.0
    %3981 = vmatpush2.msra.mxu0 0.0
    %3982 = vmatprep.subr.mxu0 0.0
    %3983 = vmatpush2.msra.mxu0 0.0
    %3984 = vmatprep.subr.mxu0 0.0
    %3985 = vmatpush2.msra.mxu0 0.0
    %3986 = vmatprep.subr.mxu0 0.0
    %3987 = vmatpush2.msra.mxu0 0.0
    %3988 = vmatprep.subr.mxu0 0.0
    %3989 = vmatpush2.msra.mxu0 0.0
    %3990 = vmatprep.subr.mxu0 0.0
    %3991 = vmatpush2.msra.mxu0 0.0
    %3992 = vmatprep.subr.mxu0 0.0
    %3993 = vmatpush2.msra.mxu0 0.0
    %3994 = vmatprep.subr.mxu0 0.0
    %3995 = vmatpush2.msra.mxu0 0.0
    %3996 = vmatprep.subr.mxu0 0.0
    %3997 = vmatpush2.msra.mxu0 0.0
    %3998 = vmatprep.subr.mxu0 0.0
    %3999 = vmatpush2.msra.mxu0 0.0
    %4000 = vmatprep.subr.mxu0 0.0
    %4001 = vmatpush2.msra.mxu0 0.0
    %4002 = vmatprep.subr.mxu0 0.0
    %4003 = vmatpush2.msra.mxu0 0.0
    %4004 = vmatprep.subr.mxu0 0.0
    %4005 = vmatpush2.msra.mxu0 0.0
    %4006 = vmatprep.subr.mxu0 0.0
    %4007 = vmatpush2.msra.mxu0 0.0
    %4008 = vmatprep.subr.mxu0 0.0
    %4009 = vmatpush2.msra.mxu0 0.0
    %4010 = vmatprep.mubr.f32.mxu0 0.0
    %4011 = vmatmul.mubr.f32.gmra.mxu0 %v3944
    %v4012 = vpop.f32.mrf.mxu0
    %v4013 = vadd.f32 0.0, %v4012
    %v4014 = vpop.f32.mrf.mxu0
    %4015 = vdwg.mxu0
    %v4016 = vadd.f32 %v3934, %v4013
    %v4017 = vld [vmem:[#allocation5 + $0x740] sm:$0xff]
    %v4018 = vld [vmem:[#allocation5 + $0x748] sm:$0xff]
    %v4019 = vld [vmem:[#allocation5 + $0x750] sm:$0xff]
    %v4020 = vld [vmem:[#allocation5 + $0x758] sm:$0xff]
    %v4021 = vld [vmem:[#allocation5 + $0x760] sm:$0xff]
    %v4022 = vld [vmem:[#allocation5 + $0x768] sm:$0xff]
    %v4023 = vld [vmem:[#allocation5 + $0x770] sm:$0xff]
    %v4024 = vld [vmem:[#allocation5 + $0x778] sm:$0xff]
    %v4026 = vsel %vm453, %v1631, 0
    %4028 = vmatprep.subr.mxu0 0.0
    %4029 = vmatpush1.msra.mxu0 0.0
    %4030 = vmatprep.subr.mxu0 0.0
    %4031 = vmatpush1.msra.mxu0 0.0
    %4032 = vmatprep.subr.mxu0 0.0
    %4033 = vmatpush1.msra.mxu0 0.0
    %4034 = vmatprep.subr.mxu0 0.0
    %4035 = vmatpush1.msra.mxu0 0.0
    %4036 = vmatprep.subr.mxu0 0.0
    %4037 = vmatpush1.msra.mxu0 0.0
    %4038 = vmatprep.subr.mxu0 0.0
    %4039 = vmatpush1.msra.mxu0 0.0
    %4040 = vmatprep.subr.mxu0 0.0
    %4041 = vmatpush1.msra.mxu0 0.0
    %4042 = vmatprep.subr.mxu0 0.0
    %4043 = vmatpush1.msra.mxu0 0.0
    %4044 = vmatprep.subr.mxu0 0.0
    %4045 = vmatpush1.msra.mxu0 %v4024
    %4046 = vmatprep.subr.mxu0 0.0
    %4047 = vmatpush1.msra.mxu0 %v4023
    %4048 = vmatprep.subr.mxu0 0.0
    %4049 = vmatpush1.msra.mxu0 %v4022
    %4050 = vmatprep.subr.mxu0 0.0
    %4051 = vmatpush1.msra.mxu0 %v4021
    %4052 = vmatprep.subr.mxu0 0.0
    %4053 = vmatpush1.msra.mxu0 %v4020
    %4054 = vmatprep.subr.mxu0 0.0
    %4055 = vmatpush1.msra.mxu0 %v4019
    %4056 = vmatprep.subr.mxu0 0.0
    %4057 = vmatpush1.msra.mxu0 %v4018
    %4058 = vmatprep.subr.mxu0 0.0
    %4059 = vmatpush1.msra.mxu0 %v4017
    %4060 = vmatprep.subr.mxu0 0.0
    %4061 = vmatpush2.msra.mxu0 0.0
    %4062 = vmatprep.subr.mxu0 0.0
    %4063 = vmatpush2.msra.mxu0 0.0
    %4064 = vmatprep.subr.mxu0 0.0
    %4065 = vmatpush2.msra.mxu0 0.0
    %4066 = vmatprep.subr.mxu0 0.0
    %4067 = vmatpush2.msra.mxu0 0.0
    %4068 = vmatprep.subr.mxu0 0.0
    %4069 = vmatpush2.msra.mxu0 0.0
    %4070 = vmatprep.subr.mxu0 0.0
    %4071 = vmatpush2.msra.mxu0 0.0
    %4072 = vmatprep.subr.mxu0 0.0
    %4073 = vmatpush2.msra.mxu0 0.0
    %4074 = vmatprep.subr.mxu0 0.0
    %4075 = vmatpush2.msra.mxu0 0.0
    %4076 = vmatprep.subr.mxu0 0.0
    %4077 = vmatpush2.msra.mxu0 0.0
    %4078 = vmatprep.subr.mxu0 0.0
    %4079 = vmatpush2.msra.mxu0 0.0
    %4080 = vmatprep.subr.mxu0 0.0
    %4081 = vmatpush2.msra.mxu0 0.0
    %4082 = vmatprep.subr.mxu0 0.0
    %4083 = vmatpush2.msra.mxu0 0.0
    %4084 = vmatprep.subr.mxu0 0.0
    %4085 = vmatpush2.msra.mxu0 0.0
    %4086 = vmatprep.subr.mxu0 0.0
    %4087 = vmatpush2.msra.mxu0 0.0
    %4088 = vmatprep.subr.mxu0 0.0
    %4089 = vmatpush2.msra.mxu0 0.0
    %4090 = vmatprep.subr.mxu0 0.0
    %4091 = vmatpush2.msra.mxu0 0.0
    %4092 = vmatprep.mubr.f32.mxu0 0.0
    %4093 = vmatmul.mubr.f32.gmra.mxu0 %v4026
    %v4094 = vpop.f32.mrf.mxu0
    %v4095 = vadd.f32 0.0, %v4094
    %v4096 = vpop.f32.mrf.mxu0
    %4097 = vdwg.mxu0
    %v4098 = vadd.f32 %v4016, %v4095
    %4099 = vst [vmem:[#allocation7] sm:$0xff] %v4098
    // Predicated region
    $region46: #{tpu_custom_call.1} parent=1 // pred_check
      _
    $region47: #{tpu_custom_call.1} parent=1 // pred_check_branch
      %4101 = sbr.rel (0) target = $region49
    $region48: #{tpu_custom_call.1} parent=1 // pred_region
      %s4103 = ssub.s32 128, 128
      %4104 = vsyncadd [#allocation4], %s4103
      %s4106 = sshll.u32 [#allocation7], 4
      %s4107 = int_to_ptr.vmem [resolvable:$true] %s4106
      %4109 = dma.vmem_to_hbm [thread:$0]  %s4107, 128, %s9, [#allocation4]
    $region49: #{tpu_custom_call.1} parent=1 // pred_fallthru
      _
    // Predicated region
    $region50: #{tpu_custom_call.1} parent=1 // pred_check
      _
    $region51: #{tpu_custom_call.1} parent=1 // pred_check_branch
      %4111 = sbr.rel (0) target = $region53
    $region52: #{tpu_custom_call.1} parent=1 // pred_region
      %4112 = dma.done [#allocation4], 128
    $region53: #{tpu_custom_call.1} parent=1 // pred_fallthru
      _
    %4113 = vsyncpa [#allocation3], 1
    %4114 = vsyncpa [#allocation6], 1
    %4115 = vsyncpa [#allocation4], 1

</llo_original>
